<compile_context>
chip_gen: v7x
topology: tpu7x:2x2x1
jax: 0.10.0
libtpu: 0.0.40
codegen_flags: <defaults>
</compile_context>

<pallas_src>
import functools

import numpy as np

import jax
import jax.numpy as jnp
from jax.experimental import pallas as pl
from jax.experimental.pallas import tpu as pltpu

OBS_CLAMP_VALUE = 100.0


def _round_up(n, m):
    return ((n + m - 1) // m) * m


# ----------------------------------------------------------------------------
# Fused Pallas kernel: normalize -> fused conv -> fused FC heads -> rnd_error
# ----------------------------------------------------------------------------
def _rnd_fused_kernel(x_ref, mean_ref, isd_ref, wc_ref, bc_ref,
                      wh_ref, bh_ref, wfin_ref, b2_ref, err_ref,
                      *, out_size, clamp):
    # x_ref    : (tn, C*H*W)            f32   batch tile (rows=sublanes, features=lanes)
    # mean_ref : (1, C*H*W)             f32
    # isd_ref  : (1, C*H*W)             f32   precomputed 1/(sqrt(var)+1e-10)
    # wc_ref   : (C*H*W, featF)         bf16  banded fused conv weights (tgt ++ pred)
    # bc_ref   : (1, featF)             f32
    # wh_ref   : (featF, out+hidden)    bf16  concatenated FC heads (tgt fc ++ pred fc1)
    # bh_ref   : (1, out+hidden)        f32
    # wfin_ref : (out+hidden, out)      bf16  [[-I],[pred fc2]]  -> d = pred - tgt
    # b2_ref   : (1, out)               f32
    # err_ref  : (8, tn)                f32   lane-dense per-row error (replicated sublanes)

    # --- normalize + clamp (f32 VPU; v5e has no bf16 VALU), cast for the MXU ----
    xn = (x_ref[...] - mean_ref[...]) * isd_ref[...]
    xn = jnp.clip(xn, -clamp, clamp).astype(jnp.bfloat16)            # (tn, CHW)

    # --- both convs as ONE deep banded matmul (K = C*H*W) ----------------------
    feat = jnp.dot(xn, wc_ref[...], preferred_element_type=jnp.float32)
    feat = feat + bc_ref[...]
    feat = jnp.where(feat >= 0.0, feat, 0.01 * feat)                 # leaky_relu (f32)
    feat = feat.astype(jnp.bfloat16)                                 # (tn, featF)

    # --- both FC heads as ONE matmul -------------------------------------------
    # cols [0, out)        : target-network outputs
    # cols [out, out+hid)  : predictor hidden pre-activation
    heads = jnp.dot(feat, wh_ref[...], preferred_element_type=jnp.float32)
    heads = heads + bh_ref[...]                                      # (tn, out+hidden)

    # relu only on the hidden columns (target columns pass through untouched),
    # then d = predictions - targets in one matmul via wfin = [[-I], [w2]].
    col = jax.lax.broadcasted_iota(jnp.int32, heads.shape, 1)
    heads_act = jnp.where(col < out_size, heads, jnp.maximum(heads, 0.0))
    d = jnp.dot(heads_act.astype(jnp.bfloat16), wfin_ref[...],
                preferred_element_type=jnp.float32) + b2_ref[...]    # (tn, out)

    # --- rnd_error = mean(d^2, -1), produced lane-dense as a (1, tn) row -------
    # via an A @ B^T style contraction (avoids a masked (tn, 1) column store).
    d2 = d * d
    ones_row = jnp.full((1, out_size), 1.0 / out_size, jnp.float32)
    err_row = jax.lax.dot_general(
        ones_row, d2, dimension_numbers=(((1,), (1,)), ((), ())),
        preferred_element_type=jnp.float32)                          # (1, tn)
    err_ref[...] = jnp.broadcast_to(err_row, err_ref.shape)          # (8, tn)


# ----------------------------------------------------------------------------
# Parameter packing: PyTorch-layout params -> kernel-ready operands (one time)
# ----------------------------------------------------------------------------
def pack_rnd_params(params, input_shape, k, stride):
    C, H, W = input_shape
    KH = KW = k
    OH = (H - KH) // stride + 1
    OW = (W - KW) // stride + 1

    tw, tb = params["tgt_conv"]          # (ch, C, KH, KW), (ch,)
    pw, pb = params["pred_conv"]
    tfw, tfb = params["tgt_fc"]          # (ch*OH*OW, out), (out,)
    p1w, p1b = params["pred_fc1"]        # (ch*OH*OW, hidden), (hidden,)
    p2w, p2b = params["pred_fc2"]        # (hidden, out), (out,)

    ch = int(tw.shape[0])
    out_size = int(tfw.shape[1])
    hidden = int(p1w.shape[1])
    fpn = ch * OH * OW                   # features per network
    featF = 2 * fpn                      # fused: [0,fpn)=target, [fpn,2fpn)=predictor
    chw = C * H * W

    # Banded conv weight: feat[n, net*fpn + (p*OW+q)*ch + co] = sum_r x_flat[n,r]*wbig[r,f]
    # with r = c*H*W + h*W + w  and  wbig[...] = w[co, c, h-stride*p, w-stride*q] (else 0).
    wbig = np.zeros((chw, featF), np.float32)
    bbig = np.zeros((featF,), np.float32)
    for net, (wgt, bia) in enumerate(((np.asarray(tw), np.asarray(tb)),
                                      (np.asarray(pw), np.asarray(pb)))):
        for p in range(OH):
            for q in range(OW):
                base = net * fpn + (p * OW + q) * ch
                bbig[base:base + ch] = bia
                for c in range(C):
                    for i in range(KH):
                        row0 = c * H * W + (stride * p + i) * W + stride * q
                        for j in range(KW):
                            wbig[row0 + j, base:base + ch] = wgt[:, c, i, j]

    # FC weights permuted to the kernel's (p*OW+q)*ch + co feature order
    # (PyTorch flattens NCHW conv output as co*OH*OW + p*OW + q), then both heads
    # concatenated along the output axis; each head sees only its own net's half.
    def perm_fc(wfc):
        wfc = np.asarray(wfc).reshape(ch, OH * OW, -1)   # [co, pq, o]
        return np.transpose(wfc, (1, 0, 2)).reshape(fpn, -1)

    whead = np.zeros((featF, out_size + hidden), np.float32)
    whead[:fpn, :out_size] = perm_fc(tfw)
    whead[fpn:, out_size:] = perm_fc(p1w)
    bhead = np.concatenate([np.asarray(tfb), np.asarray(p1b)])[None, :]

    # Final matmul computes d = predictions - targets directly.
    wfin = np.concatenate([-np.eye(out_size, dtype=np.float32),
                           np.asarray(p2w, np.float32)], axis=0)

    # TODO(synk): original registers RunningMeanStdModel([2*s for s in input_shape]); that
    # shape cannot broadcast against the observation, so per-element stats of shape
    # input_shape are used instead.
    mean = np.asarray(params["obs_mean"]).reshape(1, chw)
    var = np.asarray(params["obs_var"]).reshape(1, chw)
    inv_std = 1.0 / (np.sqrt(var) + 1e-10)     # same eps placement as the reference

    f32 = lambda a: jnp.asarray(a, jnp.float32)
    bf16 = lambda a: jnp.asarray(a, jnp.bfloat16)
    return dict(
        mean=f32(mean), inv_std=f32(inv_std),
        wc=bf16(wbig), bc=f32(bbig[None, :]),
        wh=bf16(whead), bh=f32(bhead),
        wfin=bf16(wfin), b2=f32(np.asarray(p2b)[None, :]),
        dims=dict(C=C, H=H, W=W, chw=chw, featF=featF,
                  out_size=out_size, hidden=hidden),
    )


# ----------------------------------------------------------------------------
# Forward wrapper
# ----------------------------------------------------------------------------
def _tile_plan(N, max_tile):
    """Batch-tile size and padded batch. >=2 tiles for large N (feeds v7x's 2nd TC)."""
    if N <= max_tile:
        tn = _round_up(max(N, 1), 8)
        return tn, tn
    # Multi-tile: keep tn a multiple of 128 so the lane-dense error block is unmasked.
    tn = min(_round_up(max_tile, 128), _round_up(-(-N // 2), 128))
    return tn, _round_up(N, tn)


def rnd_model_forward(ops, observation, *, max_tile=256, interpret=False):
    dims = ops["dims"]
    chw = dims["chw"]
    T, B = observation.shape[:2]
    N = T * B
    # Flat (N, C*H*W) view of the NCHW observation: pure reshape, no HBM transpose pass.
    x = observation.reshape(N, chw).astype(jnp.float32)

    tn, n_pad = _tile_plan(N, max_tile)
    num_tiles = n_pad // tn
    if n_pad != N:
        x = jnp.pad(x, ((0, n_pad - N), (0, 0)))

    kernel = functools.partial(_rnd_fused_kernel,
                               out_size=dims["out_size"], clamp=OBS_CLAMP_VALUE)

    full = lambda arr: pl.BlockSpec(arr.shape, lambda i: (0, 0))

    # TODO(synk): grid-invariant weight operands could use pipeline_mode=pl.Buffered(1)
    # to drop their second VMEM buffer; left at the default for compile safety (VMEM
    # footprint is ~6-16 MB even at tn=512, well under the 32 MiB scoped limit).
    err = pl.pallas_call(
        kernel,
        out_shape=jax.ShapeDtypeStruct((8, n_pad), jnp.float32),
        grid=(num_tiles,),
        in_specs=[
            pl.BlockSpec((tn, chw), lambda i: (i, 0)),
            full(ops["mean"]), full(ops["inv_std"]),
            full(ops["wc"]), full(ops["bc"]),
            full(ops["wh"]), full(ops["bh"]),
            full(ops["wfin"]), full(ops["b2"]),
        ],
        out_specs=pl.BlockSpec((8, tn), lambda i: (0, i)),
        compiler_params=pltpu.CompilerParams(
            dimension_semantics=("parallel",),
            vmem_limit_bytes=32 * 1024 * 1024),
        interpret=interpret,
    )(x, ops["mean"], ops["inv_std"], ops["wc"], ops["bc"],
      ops["wh"], ops["bh"], ops["wfin"], ops["b2"])

    return err[0, :N].reshape(T, B)


# ----------------------------------------------------------------------------
# Deterministic synthetic parameters (PyTorch layouts) + pure-JAX reference
# ----------------------------------------------------------------------------
def init_params(key, input_shape, output_size, hidden=64, conv_ch=16, k=4, stride=2):
    c, h, w = input_shape
    oh = (h - k) // stride + 1
    ow = (w - k) // stride + 1
    feat = conv_ch * oh * ow
    ks = jax.random.split(key, 5)

    def lin(kk, fan_in, fan_out):
        kw_, kb_ = jax.random.split(kk)
        s = 1.0 / jnp.sqrt(fan_in)
        return (jax.random.uniform(kw_, (fan_in, fan_out), jnp.float32, -s, s),
                jax.random.uniform(kb_, (fan_out,), jnp.float32, -s, s))

    def conv(kk, cout, cin, kh, kw2):
        kw_, kb_ = jax.random.split(kk)
        s = 1.0 / jnp.sqrt(cin * kh * kw2)
        return (jax.random.uniform(kw_, (cout, cin, kh, kw2), jnp.float32, -s, s),
                jax.random.uniform(kb_, (cout,), jnp.float32, -s, s))

    params = {
        "tgt_conv": conv(ks[0], conv_ch, c, k, k),
        "tgt_fc": lin(ks[1], feat, output_size),
        "pred_conv": conv(ks[2], conv_ch, c, k, k),
        "pred_fc1": lin(ks[3], feat, hidden),
        "pred_fc2": lin(ks[4], hidden, output_size),
        "obs_mean": jnp.zeros((c * h * w,), jnp.float32),
        "obs_var": jnp.ones((c * h * w,), jnp.float32),
    }
    return params, (k, stride)


def reference_forward(params, observation, input_shape, k, stride):
    """Pure-JAX f32 reference mirroring the PyTorch forward semantics."""
    T, B = observation.shape[:2]
    c, h, w = input_shape
    n = T * B
    obs = observation.reshape(n, c, h, w).astype(jnp.float32)
    mean = params["obs_mean"].reshape(1, c, h, w)
    var = params["obs_var"].reshape(1, c, h, w)
    x = jnp.clip((obs - mean) / (jnp.sqrt(var) + 1e-10),
                 -OBS_CLAMP_VALUE, OBS_CLAMP_VALUE)

    def conv(xx, wgt, b):
        y = jax.lax.conv_general_dilated(
            xx, wgt, (stride, stride), "VALID",
            dimension_numbers=("NCHW", "OIHW", "NCHW"))
        return y + b.reshape(1, -1, 1, 1)

    leaky = lambda v: jnp.where(v >= 0, v, 0.01 * v)

    tw, tb = params["tgt_conv"]
    tfw, tfb = params["tgt_fc"]
    targets = leaky(conv(x, tw, tb)).reshape(n, -1) @ tfw + tfb

    pw, pb = params["pred_conv"]
    p1w, p1b = params["pred_fc1"]
    p2w, p2b = params["pred_fc2"]
    pfeat = leaky(conv(x, pw, pb)).reshape(n, -1)
    hdn = jnp.maximum(pfeat @ p1w + p1b, 0.0)
    preds = hdn @ p2w + p2b

    err = jnp.mean((preds - targets) ** 2, axis=-1)
    return err.reshape(T, B)


if __name__ == "__main__":
    T, B = 2, 3
    input_shape = (4, 16, 16)   # (C, H, W)
    output_size = 32

    key = jax.random.PRNGKey(0)
    k_param, k_obs = jax.random.split(key)
    params, (k_sz, stride) = init_params(k_param, input_shape, output_size)
    ops = pack_rnd_params(params, input_shape, k_sz, stride)

    observation = jax.random.normal(k_obs, (T, B) + input_shape, dtype=jnp.float32)

    out = jax.block_until_ready(rnd_model_forward(ops, observation))

    assert out.shape == (T, B), out.shape
    assert out.dtype == jnp.float32
    assert bool(jnp.all(jnp.isfinite(out)))

    ref = jax.block_until_ready(reference_forward(params, observation, input_shape, k_sz, stride))
    # MXU operands are bf16 (f32 accumulate) while the reference is f32 end-to-end;
    # expected relative deviation is O(1e-2), hence the documented loose tolerance.
    assert bool(jnp.allclose(out, ref, rtol=0.1, atol=1e-3)), (
        f"mismatch vs f32 reference: pallas={out}, ref={ref}")

    print("KERNEL_OK")
</pallas_src>

<mosaic_0001>
module attributes {stable_mosaic.version = 11 : i64} {
  func.func @_rnd_fused_kernel(%arg0: i32, %arg1: memref<8x1024xf32, #tpu.memory_space<vmem>>, %arg2: memref<1x1024xf32, #tpu.memory_space<vmem>>, %arg3: memref<1x1024xf32, #tpu.memory_space<vmem>>, %arg4: memref<1024x1568xbf16, #tpu.memory_space<vmem>>, %arg5: memref<1x1568xf32, #tpu.memory_space<vmem>>, %arg6: memref<1568x96xbf16, #tpu.memory_space<vmem>>, %arg7: memref<1x96xf32, #tpu.memory_space<vmem>>, %arg8: memref<96x32xbf16, #tpu.memory_space<vmem>>, %arg9: memref<1x32xf32, #tpu.memory_space<vmem>>, %arg10: memref<8x8xf32, #tpu.memory_space<vmem>>) attributes {dimension_semantics = [#tpu.dimension_semantics<parallel>], iteration_bounds = array<i64: 1>, scalar_prefetch = 0 : i64, scratch_operands = 0 : i64, tpu.core_type = #tpu.core_type<tc>, window_params = [{transform_indices = @transform_0, window_bounds = array<i64: 8, 1024>}, {pipeline_mode = #tpu.pipeline_mode<synchronous>, transform_indices = @transform_1, window_bounds = array<i64: 1, 1024>}, {pipeline_mode = #tpu.pipeline_mode<synchronous>, transform_indices = @transform_2, window_bounds = array<i64: 1, 1024>}, {pipeline_mode = #tpu.pipeline_mode<synchronous>, transform_indices = @transform_3, window_bounds = array<i64: 1024, 1568>}, {pipeline_mode = #tpu.pipeline_mode<synchronous>, transform_indices = @transform_4, window_bounds = array<i64: 1, 1568>}, {pipeline_mode = #tpu.pipeline_mode<synchronous>, transform_indices = @transform_5, window_bounds = array<i64: 1568, 96>}, {pipeline_mode = #tpu.pipeline_mode<synchronous>, transform_indices = @transform_6, window_bounds = array<i64: 1, 96>}, {pipeline_mode = #tpu.pipeline_mode<synchronous>, transform_indices = @transform_7, window_bounds = array<i64: 96, 32>}, {pipeline_mode = #tpu.pipeline_mode<synchronous>, transform_indices = @transform_8, window_bounds = array<i64: 1, 32>}, {transform_indices = @transform_9, window_bounds = array<i64: 8, 8>}]} {
    %c0 = arith.constant 0 : index
    %c0_0 = arith.constant 0 : index
    %0 = vector.load %arg1[%c0, %c0_0] : memref<8x1024xf32, #tpu.memory_space<vmem>>, vector<8x1024xf32>
    %c0_1 = arith.constant 0 : index
    %c0_2 = arith.constant 0 : index
    %1 = vector.load %arg2[%c0_1, %c0_2] : memref<1x1024xf32, #tpu.memory_space<vmem>>, vector<1x1024xf32>
    %2 = vector.broadcast %1 : vector<1x1024xf32> to vector<8x1024xf32>
    %3 = arith.subf %0, %2 : vector<8x1024xf32>
    %c0_3 = arith.constant 0 : index
    %c0_4 = arith.constant 0 : index
    %4 = vector.load %arg3[%c0_3, %c0_4] : memref<1x1024xf32, #tpu.memory_space<vmem>>, vector<1x1024xf32>
    %5 = vector.broadcast %4 : vector<1x1024xf32> to vector<8x1024xf32>
    %6 = arith.mulf %3, %5 : vector<8x1024xf32>
    %cst = arith.constant -1.000000e+02 : f32
    %cst_5 = arith.constant 1.000000e+02 : f32
    %7 = vector.broadcast %cst : f32 to vector<8x1024xf32>
    %8 = arith.maximumf %7, %6 : vector<8x1024xf32>
    %9 = vector.broadcast %cst_5 : f32 to vector<8x1024xf32>
    %10 = arith.minimumf %9, %8 : vector<8x1024xf32>
    %11 = arith.truncf %10 : vector<8x1024xf32> to vector<8x1024xbf16>
    %c0_6 = arith.constant 0 : index
    %c0_7 = arith.constant 0 : index
    %12 = vector.load %arg4[%c0_6, %c0_7] : memref<1024x1568xbf16, #tpu.memory_space<vmem>>, vector<1024x1568xbf16>
    %cst_8 = arith.constant dense<0.000000e+00> : vector<8x1568xf32>
    %13 = tpu.matmul %11, %12, %cst_8 {dimension_numbers = #tpu.dot_dimension_numbers<[1], [0], [0], [1], [0, 0, 1, 1], [], []>} : vector<8x1024xbf16>, vector<1024x1568xbf16>, vector<8x1568xf32> -> vector<8x1568xf32>
    %c0_9 = arith.constant 0 : index
    %c0_10 = arith.constant 0 : index
    %14 = vector.load %arg5[%c0_9, %c0_10] : memref<1x1568xf32, #tpu.memory_space<vmem>>, vector<1x1568xf32>
    %15 = vector.broadcast %14 : vector<1x1568xf32> to vector<8x1568xf32>
    %16 = arith.addf %13, %15 : vector<8x1568xf32>
    %cst_11 = arith.constant 0.000000e+00 : f32
    %17 = vector.broadcast %cst_11 : f32 to vector<8x1568xf32>
    %18 = arith.cmpf oge, %16, %17 : vector<8x1568xf32>
    %cst_12 = arith.constant 0.00999999977 : f32
    %19 = vector.broadcast %cst_12 : f32 to vector<8x1568xf32>
    %20 = arith.mulf %19, %16 : vector<8x1568xf32>
    %21 = arith.select %18, %16, %20 : vector<8x1568xi1>, vector<8x1568xf32>
    %22 = arith.truncf %21 : vector<8x1568xf32> to vector<8x1568xbf16>
    %c0_13 = arith.constant 0 : index
    %c0_14 = arith.constant 0 : index
    %23 = vector.load %arg6[%c0_13, %c0_14] : memref<1568x96xbf16, #tpu.memory_space<vmem>>, vector<1568x96xbf16>
    %cst_15 = arith.constant dense<0.000000e+00> : vector<8x96xf32>
    %24 = tpu.matmul %22, %23, %cst_15 {dimension_numbers = #tpu.dot_dimension_numbers<[1], [0], [0], [1], [0, 0, 1, 1], [], []>} : vector<8x1568xbf16>, vector<1568x96xbf16>, vector<8x96xf32> -> vector<8x96xf32>
    %c0_16 = arith.constant 0 : index
    %c0_17 = arith.constant 0 : index
    %25 = vector.load %arg7[%c0_16, %c0_17] : memref<1x96xf32, #tpu.memory_space<vmem>>, vector<1x96xf32>
    %26 = vector.broadcast %25 : vector<1x96xf32> to vector<8x96xf32>
    %27 = arith.addf %24, %26 : vector<8x96xf32>
    %28 = tpu.iota {dimensions = array<i32: 1>} : vector<8x96xi32>
    %c32_i32 = arith.constant 32 : i32
    %29 = vector.broadcast %c32_i32 : i32 to vector<8x96xi32>
    %30 = arith.cmpi slt, %28, %29 : vector<8x96xi32>
    %cst_18 = arith.constant 0.000000e+00 : f32
    %31 = vector.broadcast %cst_18 : f32 to vector<8x96xf32>
    %32 = arith.maximumf %27, %31 : vector<8x96xf32>
    %33 = arith.select %30, %27, %32 : vector<8x96xi1>, vector<8x96xf32>
    %34 = arith.truncf %33 : vector<8x96xf32> to vector<8x96xbf16>
    %c0_19 = arith.constant 0 : index
    %c0_20 = arith.constant 0 : index
    %35 = vector.load %arg8[%c0_19, %c0_20] : memref<96x32xbf16, #tpu.memory_space<vmem>>, vector<96x32xbf16>
    %cst_21 = arith.constant dense<0.000000e+00> : vector<8x32xf32>
    %36 = tpu.matmul %34, %35, %cst_21 {dimension_numbers = #tpu.dot_dimension_numbers<[1], [0], [0], [1], [0, 0, 1, 1], [], []>} : vector<8x96xbf16>, vector<96x32xbf16>, vector<8x32xf32> -> vector<8x32xf32>
    %c0_22 = arith.constant 0 : index
    %c0_23 = arith.constant 0 : index
    %37 = vector.load %arg9[%c0_22, %c0_23] : memref<1x32xf32, #tpu.memory_space<vmem>>, vector<1x32xf32>
    %38 = vector.broadcast %37 : vector<1x32xf32> to vector<8x32xf32>
    %39 = arith.addf %36, %38 : vector<8x32xf32>
    %40 = arith.mulf %39, %39 : vector<8x32xf32>
    %cst_24 = arith.constant 3.125000e-02 : f32
    %41 = vector.broadcast %cst_24 : f32 to vector<1x32xf32>
    %cst_25 = arith.constant dense<0.000000e+00> : vector<1x8xf32>
    %42 = tpu.matmul %41, %40, %cst_25 {dimension_numbers = #tpu.dot_dimension_numbers<[1], [1], [0], [0], [0, 0, 1, 0], [], []>} : vector<1x32xf32>, vector<8x32xf32>, vector<1x8xf32> -> vector<1x8xf32>
    %43 = vector.shape_cast %42 : vector<1x8xf32> to vector<1x8xf32>
    %44 = vector.broadcast %43 : vector<1x8xf32> to vector<8x8xf32>
    %c0_26 = arith.constant 0 : index
    %c0_27 = arith.constant 0 : index
    %45 = vector.load %arg10[%c0_26, %c0_27] : memref<8x8xf32, #tpu.memory_space<vmem>>, vector<8x8xf32>
    tpu.vector_store %arg10[%c0_26, %c0_27], %44 {strides = array<i32>} : memref<8x8xf32, #tpu.memory_space<vmem>>, vector<8x8xf32>,
    return
  }
  func.func @transform_0(%arg0: i32) -> (i32, i32) {
    %c0_i32 = arith.constant 0 : i32
    %c0_i32_0 = arith.constant 0 : i32
    return %arg0, %c0_i32 : i32, i32
  }
  func.func @transform_1(%arg0: i32) -> (i32, i32) {
    %c0_i32 = arith.constant 0 : i32
    %c0_i32_0 = arith.constant 0 : i32
    %c0_i32_1 = arith.constant 0 : i32
    return %c0_i32, %c0_i32_0 : i32, i32
  }
  func.func @transform_2(%arg0: i32) -> (i32, i32) {
    %c0_i32 = arith.constant 0 : i32
    %c0_i32_0 = arith.constant 0 : i32
    %c0_i32_1 = arith.constant 0 : i32
    return %c0_i32, %c0_i32_0 : i32, i32
  }
  func.func @transform_3(%arg0: i32) -> (i32, i32) {
    %c0_i32 = arith.constant 0 : i32
    %c0_i32_0 = arith.constant 0 : i32
    %c0_i32_1 = arith.constant 0 : i32
    return %c0_i32, %c0_i32_0 : i32, i32
  }
  func.func @transform_4(%arg0: i32) -> (i32, i32) {
    %c0_i32 = arith.constant 0 : i32
    %c0_i32_0 = arith.constant 0 : i32
    %c0_i32_1 = arith.constant 0 : i32
    return %c0_i32, %c0_i32_0 : i32, i32
  }
  func.func @transform_5(%arg0: i32) -> (i32, i32) {
    %c0_i32 = arith.constant 0 : i32
    %c0_i32_0 = arith.constant 0 : i32
    %c0_i32_1 = arith.constant 0 : i32
    return %c0_i32, %c0_i32_0 : i32, i32
  }
  func.func @transform_6(%arg0: i32) -> (i32, i32) {
    %c0_i32 = arith.constant 0 : i32
    %c0_i32_0 = arith.constant 0 : i32
    %c0_i32_1 = arith.constant 0 : i32
    return %c0_i32, %c0_i32_0 : i32, i32
  }
  func.func @transform_7(%arg0: i32) -> (i32, i32) {
    %c0_i32 = arith.constant 0 : i32
    %c0_i32_0 = arith.constant 0 : i32
    %c0_i32_1 = arith.constant 0 : i32
    return %c0_i32, %c0_i32_0 : i32, i32
  }
  func.func @transform_8(%arg0: i32) -> (i32, i32) {
    %c0_i32 = arith.constant 0 : i32
    %c0_i32_0 = arith.constant 0 : i32
    %c0_i32_1 = arith.constant 0 : i32
    return %c0_i32, %c0_i32_0 : i32, i32
  }
  func.func @transform_9(%arg0: i32) -> (i32, i32) {
    %c0_i32 = arith.constant 0 : i32
    %c0_i32_0 = arith.constant 0 : i32
    return %c0_i32, %arg0 : i32, i32
  }
}

</mosaic_0001>

<llo_original>
// kernel: tpu_custom_call.1
$region0: #{tpu_custom_call.1}
  #allocation0 [shape = 'u32[]', space=smem, size = 0x4, offset = 0x4, fixed_abs, tag = 'smem constant byte address 0x4 - core index']
  #allocation1 [shape = 'u32[144,128]{1,0:T(1,128)}', space=vmem, size = 0x12000, scoped, tag = 'internal scratch']
  %s0 = inlined_call_operand.vmem [shape: f32[8,1024], index: 0, kind: input, shape index: {}]
  %s1 = inlined_call_operand.vmem [shape: f32[1,1024], index: 1, kind: input, shape index: {}]
  %s2 = inlined_call_operand.vmem [shape: f32[1,1024], index: 2, kind: input, shape index: {}]
  %s3 = inlined_call_operand.vmem [shape: bf16[1024,1568], index: 3, kind: input, shape index: {}]
  %s4 = inlined_call_operand.vmem [shape: f32[1,1568], index: 4, kind: input, shape index: {}]
  %s5 = inlined_call_operand.vmem [shape: bf16[1568,96], index: 5, kind: input, shape index: {}]
  %s6 = inlined_call_operand.vmem [shape: f32[1,96], index: 6, kind: input, shape index: {}]
  %s7 = inlined_call_operand.vmem [shape: bf16[96,32], index: 7, kind: input, shape index: {}]
  %s8 = inlined_call_operand.vmem [shape: f32[1,32], index: 8, kind: input, shape index: {}]
  %s9 = inlined_call_operand.hbm [shape: f32[8,8], index: 9, kind: output, shape index: {}]
  %s10 = sld [smem:[#allocation0]]
  $region46: #{tpu_custom_call.1} parent=0
    _
  %s12 = ssub.s32 1, %s10
  %s13 = scalar_select 0, %s12, %s10
  $region1: #{tpu_custom_call.1} parent=0
    #allocation2 [shape = 'u8[4096]{0}', space=vmem, size = 0x1000, scoped, tag = 'output window, operand 0, single buffered']
    #allocation3 [shape = 's32[1]{0}', space=sflag, size = 0x4, scoped, tag = 'scoped memory for tpu_custom_call.1']
    %14 = vsyncpa [#allocation3], 0
    // Predicated region
    $region2: #{tpu_custom_call.1} parent=1 // pred_check
      _
    $region3: #{tpu_custom_call.1} parent=1 // pred_check_branch
      %16 = sbr.rel (0) target = $region5
    $region4: #{tpu_custom_call.1} parent=1 // pred_region
      _
    $region5: #{tpu_custom_call.1} parent=1 // pred_fallthru
      _
    // Predicated region
    $region6: #{tpu_custom_call.1} parent=1 // pred_check
      _
    $region7: #{tpu_custom_call.1} parent=1 // pred_check_branch
      %18 = sbr.rel (0) target = $region9
    $region8: #{tpu_custom_call.1} parent=1 // pred_region
      _
    $region9: #{tpu_custom_call.1} parent=1 // pred_fallthru
      _
    // Predicated region
    $region10: #{tpu_custom_call.1} parent=1 // pred_check
      _
    $region11: #{tpu_custom_call.1} parent=1 // pred_check_branch
      %20 = sbr.rel (0) target = $region13
    $region12: #{tpu_custom_call.1} parent=1 // pred_region
      _
    $region13: #{tpu_custom_call.1} parent=1 // pred_fallthru
      _
    // Predicated region
    $region14: #{tpu_custom_call.1} parent=1 // pred_check
      _
    $region15: #{tpu_custom_call.1} parent=1 // pred_check_branch
      %22 = sbr.rel (0) target = $region17
    $region16: #{tpu_custom_call.1} parent=1 // pred_region
      _
    $region17: #{tpu_custom_call.1} parent=1 // pred_fallthru
      _
    // Predicated region
    $region18: #{tpu_custom_call.1} parent=1 // pred_check
      _
    $region19: #{tpu_custom_call.1} parent=1 // pred_check_branch
      %24 = sbr.rel (0) target = $region21
    $region20: #{tpu_custom_call.1} parent=1 // pred_region
      _
    $region21: #{tpu_custom_call.1} parent=1 // pred_fallthru
      _
    // Predicated region
    $region22: #{tpu_custom_call.1} parent=1 // pred_check
      _
    $region23: #{tpu_custom_call.1} parent=1 // pred_check_branch
      %26 = sbr.rel (0) target = $region25
    $region24: #{tpu_custom_call.1} parent=1 // pred_region
      _
    $region25: #{tpu_custom_call.1} parent=1 // pred_fallthru
      _
    // Predicated region
    $region26: #{tpu_custom_call.1} parent=1 // pred_check
      _
    $region27: #{tpu_custom_call.1} parent=1 // pred_check_branch
      %28 = sbr.rel (0) target = $region29
    $region28: #{tpu_custom_call.1} parent=1 // pred_region
      _
    $region29: #{tpu_custom_call.1} parent=1 // pred_fallthru
      _
    // Predicated region
    $region30: #{tpu_custom_call.1} parent=1 // pred_check
      _
    $region31: #{tpu_custom_call.1} parent=1 // pred_check_branch
      %30 = sbr.rel (0) target = $region33
    $region32: #{tpu_custom_call.1} parent=1 // pred_region
      _
    $region33: #{tpu_custom_call.1} parent=1 // pred_fallthru
      _
    // Predicated region
    $region34: #{tpu_custom_call.1} parent=1 // pred_check
      _
    $region35: #{tpu_custom_call.1} parent=1 // pred_check_branch
      %32 = sbr.rel (0) target = $region37
    $region36: #{tpu_custom_call.1} parent=1 // pred_region
      _
    $region37: #{tpu_custom_call.1} parent=1 // pred_fallthru
      _
    %v34 = vld [vmem:[%s0] sm:$0xff]
    %v35 = vld [vmem:[%s0 + $0x8] sm:$0xff]
    %v36 = vld [vmem:[%s0 + $0x10] sm:$0xff]
    %v37 = vld [vmem:[%s0 + $0x18] sm:$0xff]
    %v38 = vld [vmem:[%s0 + $0x20] sm:$0xff]
    %v39 = vld [vmem:[%s0 + $0x28] sm:$0xff]
    %v40 = vld [vmem:[%s0 + $0x30] sm:$0xff]
    %v41 = vld [vmem:[%s0 + $0x38] sm:$0xff]
    %v42 = vld [vmem:[%s1] sm:$0xff]
    %v44 = vlaneseq
    %v45 = vshrl.u32 %v44, 7
    %v46 = vsub.s32 0, %v45
    %v47 = vrot.slane %v42, %v46
    %v48 = vlaneseq
    %v49 = vshrl.u32 %v48, 7
    %v50 = vsub.s32 1, %v49
    %v51 = vrot.slane %v42, %v50
    %v52 = vlaneseq
    %v53 = vshrl.u32 %v52, 7
    %v54 = vsub.s32 2, %v53
    %v55 = vrot.slane %v42, %v54
    %v56 = vlaneseq
    %v57 = vshrl.u32 %v56, 7
    %v58 = vsub.s32 3, %v57
    %v59 = vrot.slane %v42, %v58
    %v60 = vlaneseq
    %v61 = vshrl.u32 %v60, 7
    %v62 = vsub.s32 4, %v61
    %v63 = vrot.slane %v42, %v62
    %v64 = vlaneseq
    %v65 = vshrl.u32 %v64, 7
    %v66 = vsub.s32 5, %v65
    %v67 = vrot.slane %v42, %v66
    %v68 = vlaneseq
    %v69 = vshrl.u32 %v68, 7
    %v70 = vsub.s32 6, %v69
    %v71 = vrot.slane %v42, %v70
    %v72 = vlaneseq
    %v73 = vshrl.u32 %v72, 7
    %v74 = vsub.s32 7, %v73
    %v75 = vrot.slane %v42, %v74
    %v84 = vsub.f32 %v34, %v47
    %v85 = vsub.f32 %v35, %v51
    %v86 = vsub.f32 %v36, %v55
    %v87 = vsub.f32 %v37, %v59
    %v88 = vsub.f32 %v38, %v63
    %v89 = vsub.f32 %v39, %v67
    %v90 = vsub.f32 %v40, %v71
    %v91 = vsub.f32 %v41, %v75
    %v92 = vld [vmem:[%s2] sm:$0xff]
    %v94 = vlaneseq
    %v95 = vshrl.u32 %v94, 7
    %v96 = vsub.s32 0, %v95
    %v97 = vrot.slane %v92, %v96
    %v98 = vlaneseq
    %v99 = vshrl.u32 %v98, 7
    %v100 = vsub.s32 1, %v99
    %v101 = vrot.slane %v92, %v100
    %v102 = vlaneseq
    %v103 = vshrl.u32 %v102, 7
    %v104 = vsub.s32 2, %v103
    %v105 = vrot.slane %v92, %v104
    %v106 = vlaneseq
    %v107 = vshrl.u32 %v106, 7
    %v108 = vsub.s32 3, %v107
    %v109 = vrot.slane %v92, %v108
    %v110 = vlaneseq
    %v111 = vshrl.u32 %v110, 7
    %v112 = vsub.s32 4, %v111
    %v113 = vrot.slane %v92, %v112
    %v114 = vlaneseq
    %v115 = vshrl.u32 %v114, 7
    %v116 = vsub.s32 5, %v115
    %v117 = vrot.slane %v92, %v116
    %v118 = vlaneseq
    %v119 = vshrl.u32 %v118, 7
    %v120 = vsub.s32 6, %v119
    %v121 = vrot.slane %v92, %v120
    %v122 = vlaneseq
    %v123 = vshrl.u32 %v122, 7
    %v124 = vsub.s32 7, %v123
    %v125 = vrot.slane %v92, %v124
    %v134 = vmul.f32 %v84, %v97
    %v135 = vmul.f32 %v85, %v101
    %v136 = vmul.f32 %v86, %v105
    %v137 = vmul.f32 %v87, %v109
    %v138 = vmul.f32 %v88, %v113
    %v139 = vmul.f32 %v89, %v117
    %v140 = vmul.f32 %v90, %v121
    %v141 = vmul.f32 %v91, %v125
    %v142 = vmax.f32 %v134, -100.0
    %v143 = vmax.f32 %v135, -100.0
    %v144 = vmax.f32 %v136, -100.0
    %v145 = vmax.f32 %v137, -100.0
    %v146 = vmax.f32 %v138, -100.0
    %v147 = vmax.f32 %v139, -100.0
    %v148 = vmax.f32 %v140, -100.0
    %v149 = vmax.f32 %v141, -100.0
    %v150 = vmin.f32 %v142, 100.0
    %v151 = vmin.f32 %v143, 100.0
    %v152 = vmin.f32 %v144, 100.0
    %v153 = vmin.f32 %v145, 100.0
    %v154 = vmin.f32 %v146, 100.0
    %v155 = vmin.f32 %v147, 100.0
    %v156 = vmin.f32 %v148, 100.0
    %v157 = vmin.f32 %v149, 100.0
    %v158 = vpack.c.bf16 %v150, %v150
    %v159 = vpack.c.bf16 %v151, %v151
    %v160 = vpack.c.bf16 %v152, %v152
    %v161 = vpack.c.bf16 %v153, %v153
    %v162 = vpack.c.bf16 %v154, %v154
    %v163 = vpack.c.bf16 %v155, %v155
    %v164 = vpack.c.bf16 %v156, %v156
    %v165 = vpack.c.bf16 %v157, %v157
    %v166 = vld [vmem:[%s3] sm:$0xff]
    %v167 = vld [vmem:[%s3 + $0x8] sm:$0xff]
    %v168 = vld [vmem:[%s3 + $0x10] sm:$0xff]
    %v169 = vld [vmem:[%s3 + $0x18] sm:$0xff]
    %v170 = vld [vmem:[%s3 + $0x20] sm:$0xff]
    %v171 = vld [vmem:[%s3 + $0x28] sm:$0xff]
    %v172 = vld [vmem:[%s3 + $0x30] sm:$0xf]
    %v173 = vld [vmem:[%s3 + $0x34] sm:$0xff]
    %v174 = vld [vmem:[%s3 + $0x3c] sm:$0xff]
    %v175 = vld [vmem:[%s3 + $0x44] sm:$0xff]
    %v176 = vld [vmem:[%s3 + $0x4c] sm:$0xff]
    %v177 = vld [vmem:[%s3 + $0x54] sm:$0xff]
    %v178 = vld [vmem:[%s3 + $0x5c] sm:$0xff]
    %v179 = vld [vmem:[%s3 + $0x64] sm:$0xf]
    %v180 = vld [vmem:[%s3 + $0x68] sm:$0xff]
    %v181 = vld [vmem:[%s3 + $0x70] sm:$0xff]
    %v182 = vld [vmem:[%s3 + $0x78] sm:$0xff]
    %v183 = vld [vmem:[%s3 + $0x80] sm:$0xff]
    %v184 = vld [vmem:[%s3 + $0x88] sm:$0xff]
    %v185 = vld [vmem:[%s3 + $0x90] sm:$0xff]
    %v186 = vld [vmem:[%s3 + $0x98] sm:$0xf]
    %v187 = vld [vmem:[%s3 + $0x9c] sm:$0xff]
    %v188 = vld [vmem:[%s3 + $0xa4] sm:$0xff]
    %v189 = vld [vmem:[%s3 + $0xac] sm:$0xff]
    %v190 = vld [vmem:[%s3 + $0xb4] sm:$0xff]
    %v191 = vld [vmem:[%s3 + $0xbc] sm:$0xff]
    %v192 = vld [vmem:[%s3 + $0xc4] sm:$0xff]
    %v193 = vld [vmem:[%s3 + $0xcc] sm:$0xf]
    %v194 = vld [vmem:[%s3 + $0xd0] sm:$0xff]
    %v195 = vld [vmem:[%s3 + $0xd8] sm:$0xff]
    %v196 = vld [vmem:[%s3 + $0xe0] sm:$0xff]
    %v197 = vld [vmem:[%s3 + $0xe8] sm:$0xff]
    %v198 = vld [vmem:[%s3 + $0xf0] sm:$0xff]
    %v199 = vld [vmem:[%s3 + $0xf8] sm:$0xff]
    %v200 = vld [vmem:[%s3 + $0x100] sm:$0xf]
    %v201 = vld [vmem:[%s3 + $0x104] sm:$0xff]
    %v202 = vld [vmem:[%s3 + $0x10c] sm:$0xff]
    %v203 = vld [vmem:[%s3 + $0x114] sm:$0xff]
    %v204 = vld [vmem:[%s3 + $0x11c] sm:$0xff]
    %v205 = vld [vmem:[%s3 + $0x124] sm:$0xff]
    %v206 = vld [vmem:[%s3 + $0x12c] sm:$0xff]
    %v207 = vld [vmem:[%s3 + $0x134] sm:$0xf]
    %v208 = vld [vmem:[%s3 + $0x138] sm:$0xff]
    %v209 = vld [vmem:[%s3 + $0x140] sm:$0xff]
    %v210 = vld [vmem:[%s3 + $0x148] sm:$0xff]
    %v211 = vld [vmem:[%s3 + $0x150] sm:$0xff]
    %v212 = vld [vmem:[%s3 + $0x158] sm:$0xff]
    %v213 = vld [vmem:[%s3 + $0x160] sm:$0xff]
    %v214 = vld [vmem:[%s3 + $0x168] sm:$0xf]
    %v215 = vld [vmem:[%s3 + $0x16c] sm:$0xff]
    %v216 = vld [vmem:[%s3 + $0x174] sm:$0xff]
    %v217 = vld [vmem:[%s3 + $0x17c] sm:$0xff]
    %v218 = vld [vmem:[%s3 + $0x184] sm:$0xff]
    %v219 = vld [vmem:[%s3 + $0x18c] sm:$0xff]
    %v220 = vld [vmem:[%s3 + $0x194] sm:$0xff]
    %v221 = vld [vmem:[%s3 + $0x19c] sm:$0xf]
    %v222 = vld [vmem:[%s3 + $0x1a0] sm:$0xff]
    %v223 = vld [vmem:[%s3 + $0x1a8] sm:$0xff]
    %v224 = vld [vmem:[%s3 + $0x1b0] sm:$0xff]
    %v225 = vld [vmem:[%s3 + $0x1b8] sm:$0xff]
    %v226 = vld [vmem:[%s3 + $0x1c0] sm:$0xff]
    %v227 = vld [vmem:[%s3 + $0x1c8] sm:$0xff]
    %v228 = vld [vmem:[%s3 + $0x1d0] sm:$0xf]
    %v229 = vld [vmem:[%s3 + $0x1d4] sm:$0xff]
    %v230 = vld [vmem:[%s3 + $0x1dc] sm:$0xff]
    %v231 = vld [vmem:[%s3 + $0x1e4] sm:$0xff]
    %v232 = vld [vmem:[%s3 + $0x1ec] sm:$0xff]
    %v233 = vld [vmem:[%s3 + $0x1f4] sm:$0xff]
    %v234 = vld [vmem:[%s3 + $0x1fc] sm:$0xff]
    %v235 = vld [vmem:[%s3 + $0x204] sm:$0xf]
    %v236 = vld [vmem:[%s3 + $0x208] sm:$0xff]
    %v237 = vld [vmem:[%s3 + $0x210] sm:$0xff]
    %v238 = vld [vmem:[%s3 + $0x218] sm:$0xff]
    %v239 = vld [vmem:[%s3 + $0x220] sm:$0xff]
    %v240 = vld [vmem:[%s3 + $0x228] sm:$0xff]
    %v241 = vld [vmem:[%s3 + $0x230] sm:$0xff]
    %v242 = vld [vmem:[%s3 + $0x238] sm:$0xf]
    %v243 = vld [vmem:[%s3 + $0x23c] sm:$0xff]
    %v244 = vld [vmem:[%s3 + $0x244] sm:$0xff]
    %v245 = vld [vmem:[%s3 + $0x24c] sm:$0xff]
    %v246 = vld [vmem:[%s3 + $0x254] sm:$0xff]
    %v247 = vld [vmem:[%s3 + $0x25c] sm:$0xff]
    %v248 = vld [vmem:[%s3 + $0x264] sm:$0xff]
    %v249 = vld [vmem:[%s3 + $0x26c] sm:$0xf]
    %v250 = vld [vmem:[%s3 + $0x270] sm:$0xff]
    %v251 = vld [vmem:[%s3 + $0x278] sm:$0xff]
    %v252 = vld [vmem:[%s3 + $0x280] sm:$0xff]
    %v253 = vld [vmem:[%s3 + $0x288] sm:$0xff]
    %v254 = vld [vmem:[%s3 + $0x290] sm:$0xff]
    %v255 = vld [vmem:[%s3 + $0x298] sm:$0xff]
    %v256 = vld [vmem:[%s3 + $0x2a0] sm:$0xf]
    %v257 = vld [vmem:[%s3 + $0x2a4] sm:$0xff]
    %v258 = vld [vmem:[%s3 + $0x2ac] sm:$0xff]
    %v259 = vld [vmem:[%s3 + $0x2b4] sm:$0xff]
    %v260 = vld [vmem:[%s3 + $0x2bc] sm:$0xff]
    %v261 = vld [vmem:[%s3 + $0x2c4] sm:$0xff]
    %v262 = vld [vmem:[%s3 + $0x2cc] sm:$0xff]
    %v263 = vld [vmem:[%s3 + $0x2d4] sm:$0xf]
    %v264 = vld [vmem:[%s3 + $0x2d8] sm:$0xff]
    %v265 = vld [vmem:[%s3 + $0x2e0] sm:$0xff]
    %v266 = vld [vmem:[%s3 + $0x2e8] sm:$0xff]
    %v267 = vld [vmem:[%s3 + $0x2f0] sm:$0xff]
    %v268 = vld [vmem:[%s3 + $0x2f8] sm:$0xff]
    %v269 = vld [vmem:[%s3 + $0x300] sm:$0xff]
    %v270 = vld [vmem:[%s3 + $0x308] sm:$0xf]
    %v271 = vld [vmem:[%s3 + $0x30c] sm:$0xff]
    %v272 = vld [vmem:[%s3 + $0x314] sm:$0xff]
    %v273 = vld [vmem:[%s3 + $0x31c] sm:$0xff]
    %v274 = vld [vmem:[%s3 + $0x324] sm:$0xff]
    %v275 = vld [vmem:[%s3 + $0x32c] sm:$0xff]
    %v276 = vld [vmem:[%s3 + $0x334] sm:$0xff]
    %v277 = vld [vmem:[%s3 + $0x33c] sm:$0xf]
    %v278 = vld [vmem:[%s3 + $0x340] sm:$0xff]
    %v279 = vld [vmem:[%s3 + $0x348] sm:$0xff]
    %v280 = vld [vmem:[%s3 + $0x350] sm:$0xff]
    %v281 = vld [vmem:[%s3 + $0x358] sm:$0xff]
    %v282 = vld [vmem:[%s3 + $0x360] sm:$0xff]
    %v283 = vld [vmem:[%s3 + $0x368] sm:$0xff]
    %v284 = vld [vmem:[%s3 + $0x370] sm:$0xf]
    %v285 = vld [vmem:[%s3 + $0x374] sm:$0xff]
    %v286 = vld [vmem:[%s3 + $0x37c] sm:$0xff]
    %v287 = vld [vmem:[%s3 + $0x384] sm:$0xff]
    %v288 = vld [vmem:[%s3 + $0x38c] sm:$0xff]
    %v289 = vld [vmem:[%s3 + $0x394] sm:$0xff]
    %v290 = vld [vmem:[%s3 + $0x39c] sm:$0xff]
    %v291 = vld [vmem:[%s3 + $0x3a4] sm:$0xf]
    %v292 = vld [vmem:[%s3 + $0x3a8] sm:$0xff]
    %v293 = vld [vmem:[%s3 + $0x3b0] sm:$0xff]
    %v294 = vld [vmem:[%s3 + $0x3b8] sm:$0xff]
    %v295 = vld [vmem:[%s3 + $0x3c0] sm:$0xff]
    %v296 = vld [vmem:[%s3 + $0x3c8] sm:$0xff]
    %v297 = vld [vmem:[%s3 + $0x3d0] sm:$0xff]
    %v298 = vld [vmem:[%s3 + $0x3d8] sm:$0xf]
    %v299 = vld [vmem:[%s3 + $0x3dc] sm:$0xff]
    %v300 = vld [vmem:[%s3 + $0x3e4] sm:$0xff]
    %v301 = vld [vmem:[%s3 + $0x3ec] sm:$0xff]
    %v302 = vld [vmem:[%s3 + $0x3f4] sm:$0xff]
    %v303 = vld [vmem:[%s3 + $0x3fc] sm:$0xff]
    %v304 = vld [vmem:[%s3 + $0x404] sm:$0xff]
    %v305 = vld [vmem:[%s3 + $0x40c] sm:$0xf]
    %v306 = vld [vmem:[%s3 + $0x410] sm:$0xff]
    %v307 = vld [vmem:[%s3 + $0x418] sm:$0xff]
    %v308 = vld [vmem:[%s3 + $0x420] sm:$0xff]
    %v309 = vld [vmem:[%s3 + $0x428] sm:$0xff]
    %v310 = vld [vmem:[%s3 + $0x430] sm:$0xff]
    %v311 = vld [vmem:[%s3 + $0x438] sm:$0xff]
    %v312 = vld [vmem:[%s3 + $0x440] sm:$0xf]
    %v313 = vld [vmem:[%s3 + $0x444] sm:$0xff]
    %v314 = vld [vmem:[%s3 + $0x44c] sm:$0xff]
    %v315 = vld [vmem:[%s3 + $0x454] sm:$0xff]
    %v316 = vld [vmem:[%s3 + $0x45c] sm:$0xff]
    %v317 = vld [vmem:[%s3 + $0x464] sm:$0xff]
    %v318 = vld [vmem:[%s3 + $0x46c] sm:$0xff]
    %v319 = vld [vmem:[%s3 + $0x474] sm:$0xf]
    %v320 = vld [vmem:[%s3 + $0x478] sm:$0xff]
    %v321 = vld [vmem:[%s3 + $0x480] sm:$0xff]
    %v322 = vld [vmem:[%s3 + $0x488] sm:$0xff]
    %v323 = vld [vmem:[%s3 + $0x490] sm:$0xff]
    %v324 = vld [vmem:[%s3 + $0x498] sm:$0xff]
    %v325 = vld [vmem:[%s3 + $0x4a0] sm:$0xff]
    %v326 = vld [vmem:[%s3 + $0x4a8] sm:$0xf]
    %v327 = vld [vmem:[%s3 + $0x4ac] sm:$0xff]
    %v328 = vld [vmem:[%s3 + $0x4b4] sm:$0xff]
    %v329 = vld [vmem:[%s3 + $0x4bc] sm:$0xff]
    %v330 = vld [vmem:[%s3 + $0x4c4] sm:$0xff]
    %v331 = vld [vmem:[%s3 + $0x4cc] sm:$0xff]
    %v332 = vld [vmem:[%s3 + $0x4d4] sm:$0xff]
    %v333 = vld [vmem:[%s3 + $0x4dc] sm:$0xf]
    %v334 = vld [vmem:[%s3 + $0x4e0] sm:$0xff]
    %v335 = vld [vmem:[%s3 + $0x4e8] sm:$0xff]
    %v336 = vld [vmem:[%s3 + $0x4f0] sm:$0xff]
    %v337 = vld [vmem:[%s3 + $0x4f8] sm:$0xff]
    %v338 = vld [vmem:[%s3 + $0x500] sm:$0xff]
    %v339 = vld [vmem:[%s3 + $0x508] sm:$0xff]
    %v340 = vld [vmem:[%s3 + $0x510] sm:$0xf]
    %v341 = vld [vmem:[%s3 + $0x514] sm:$0xff]
    %v342 = vld [vmem:[%s3 + $0x51c] sm:$0xff]
    %v343 = vld [vmem:[%s3 + $0x524] sm:$0xff]
    %v344 = vld [vmem:[%s3 + $0x52c] sm:$0xff]
    %v345 = vld [vmem:[%s3 + $0x534] sm:$0xff]
    %v346 = vld [vmem:[%s3 + $0x53c] sm:$0xff]
    %v347 = vld [vmem:[%s3 + $0x544] sm:$0xf]
    %v348 = vld [vmem:[%s3 + $0x548] sm:$0xff]
    %v349 = vld [vmem:[%s3 + $0x550] sm:$0xff]
    %v350 = vld [vmem:[%s3 + $0x558] sm:$0xff]
    %v351 = vld [vmem:[%s3 + $0x560] sm:$0xff]
    %v352 = vld [vmem:[%s3 + $0x568] sm:$0xff]
    %v353 = vld [vmem:[%s3 + $0x570] sm:$0xff]
    %v354 = vld [vmem:[%s3 + $0x578] sm:$0xf]
    %v355 = vld [vmem:[%s3 + $0x57c] sm:$0xff]
    %v356 = vld [vmem:[%s3 + $0x584] sm:$0xff]
    %v357 = vld [vmem:[%s3 + $0x58c] sm:$0xff]
    %v358 = vld [vmem:[%s3 + $0x594] sm:$0xff]
    %v359 = vld [vmem:[%s3 + $0x59c] sm:$0xff]
    %v360 = vld [vmem:[%s3 + $0x5a4] sm:$0xff]
    %v361 = vld [vmem:[%s3 + $0x5ac] sm:$0xf]
    %v362 = vld [vmem:[%s3 + $0x5b0] sm:$0xff]
    %v363 = vld [vmem:[%s3 + $0x5b8] sm:$0xff]
    %v364 = vld [vmem:[%s3 + $0x5c0] sm:$0xff]
    %v365 = vld [vmem:[%s3 + $0x5c8] sm:$0xff]
    %v366 = vld [vmem:[%s3 + $0x5d0] sm:$0xff]
    %v367 = vld [vmem:[%s3 + $0x5d8] sm:$0xff]
    %v368 = vld [vmem:[%s3 + $0x5e0] sm:$0xf]
    %v369 = vld [vmem:[%s3 + $0x5e4] sm:$0xff]
    %v370 = vld [vmem:[%s3 + $0x5ec] sm:$0xff]
    %v371 = vld [vmem:[%s3 + $0x5f4] sm:$0xff]
    %v372 = vld [vmem:[%s3 + $0x5fc] sm:$0xff]
    %v373 = vld [vmem:[%s3 + $0x604] sm:$0xff]
    %v374 = vld [vmem:[%s3 + $0x60c] sm:$0xff]
    %v375 = vld [vmem:[%s3 + $0x614] sm:$0xf]
    %v376 = vld [vmem:[%s3 + $0x618] sm:$0xff]
    %v377 = vld [vmem:[%s3 + $0x620] sm:$0xff]
    %v378 = vld [vmem:[%s3 + $0x628] sm:$0xff]
    %v379 = vld [vmem:[%s3 + $0x630] sm:$0xff]
    %v380 = vld [vmem:[%s3 + $0x638] sm:$0xff]
    %v381 = vld [vmem:[%s3 + $0x640] sm:$0xff]
    %v382 = vld [vmem:[%s3 + $0x648] sm:$0xf]
    %v383 = vld [vmem:[%s3 + $0x64c] sm:$0xff]
    %v384 = vld [vmem:[%s3 + $0x654] sm:$0xff]
    %v385 = vld [vmem:[%s3 + $0x65c] sm:$0xff]
    %v386 = vld [vmem:[%s3 + $0x664] sm:$0xff]
    %v387 = vld [vmem:[%s3 + $0x66c] sm:$0xff]
    %v388 = vld [vmem:[%s3 + $0x674] sm:$0xff]
    %v389 = vld [vmem:[%s3 + $0x67c] sm:$0xf]
    %v390 = vld [vmem:[%s3 + $0x680] sm:$0xff]
    %v391 = vld [vmem:[%s3 + $0x688] sm:$0xff]
    %v392 = vld [vmem:[%s3 + $0x690] sm:$0xff]
    %v393 = vld [vmem:[%s3 + $0x698] sm:$0xff]
    %v394 = vld [vmem:[%s3 + $0x6a0] sm:$0xff]
    %v395 = vld [vmem:[%s3 + $0x6a8] sm:$0xff]
    %v396 = vld [vmem:[%s3 + $0x6b0] sm:$0xf]
    %v397 = vld [vmem:[%s3 + $0x6b4] sm:$0xff]
    %v398 = vld [vmem:[%s3 + $0x6bc] sm:$0xff]
    %v399 = vld [vmem:[%s3 + $0x6c4] sm:$0xff]
    %v400 = vld [vmem:[%s3 + $0x6cc] sm:$0xff]
    %v401 = vld [vmem:[%s3 + $0x6d4] sm:$0xff]
    %v402 = vld [vmem:[%s3 + $0x6dc] sm:$0xff]
    %v403 = vld [vmem:[%s3 + $0x6e4] sm:$0xf]
    %v404 = vld [vmem:[%s3 + $0x6e8] sm:$0xff]
    %v405 = vld [vmem:[%s3 + $0x6f0] sm:$0xff]
    %v406 = vld [vmem:[%s3 + $0x6f8] sm:$0xff]
    %v407 = vld [vmem:[%s3 + $0x700] sm:$0xff]
    %v408 = vld [vmem:[%s3 + $0x708] sm:$0xff]
    %v409 = vld [vmem:[%s3 + $0x710] sm:$0xff]
    %v410 = vld [vmem:[%s3 + $0x718] sm:$0xf]
    %v411 = vld [vmem:[%s3 + $0x71c] sm:$0xff]
    %v412 = vld [vmem:[%s3 + $0x724] sm:$0xff]
    %v413 = vld [vmem:[%s3 + $0x72c] sm:$0xff]
    %v414 = vld [vmem:[%s3 + $0x734] sm:$0xff]
    %v415 = vld [vmem:[%s3 + $0x73c] sm:$0xff]
    %v416 = vld [vmem:[%s3 + $0x744] sm:$0xff]
    %v417 = vld [vmem:[%s3 + $0x74c] sm:$0xf]
    %v418 = vld [vmem:[%s3 + $0x750] sm:$0xff]
    %v419 = vld [vmem:[%s3 + $0x758] sm:$0xff]
    %v420 = vld [vmem:[%s3 + $0x760] sm:$0xff]
    %v421 = vld [vmem:[%s3 + $0x768] sm:$0xff]
    %v422 = vld [vmem:[%s3 + $0x770] sm:$0xff]
    %v423 = vld [vmem:[%s3 + $0x778] sm:$0xff]
    %v424 = vld [vmem:[%s3 + $0x780] sm:$0xf]
    %v425 = vld [vmem:[%s3 + $0x784] sm:$0xff]
    %v426 = vld [vmem:[%s3 + $0x78c] sm:$0xff]
    %v427 = vld [vmem:[%s3 + $0x794] sm:$0xff]
    %v428 = vld [vmem:[%s3 + $0x79c] sm:$0xff]
    %v429 = vld [vmem:[%s3 + $0x7a4] sm:$0xff]
    %v430 = vld [vmem:[%s3 + $0x7ac] sm:$0xff]
    %v431 = vld [vmem:[%s3 + $0x7b4] sm:$0xf]
    %v432 = vld [vmem:[%s3 + $0x7b8] sm:$0xff]
    %v433 = vld [vmem:[%s3 + $0x7c0] sm:$0xff]
    %v434 = vld [vmem:[%s3 + $0x7c8] sm:$0xff]
    %v435 = vld [vmem:[%s3 + $0x7d0] sm:$0xff]
    %v436 = vld [vmem:[%s3 + $0x7d8] sm:$0xff]
    %v437 = vld [vmem:[%s3 + $0x7e0] sm:$0xff]
    %v438 = vld [vmem:[%s3 + $0x7e8] sm:$0xf]
    %v439 = vld [vmem:[%s3 + $0x7ec] sm:$0xff]
    %v440 = vld [vmem:[%s3 + $0x7f4] sm:$0xff]
    %v441 = vld [vmem:[%s3 + $0x7fc] sm:$0xff]
    %v442 = vld [vmem:[%s3 + $0x804] sm:$0xff]
    %v443 = vld [vmem:[%s3 + $0x80c] sm:$0xff]
    %v444 = vld [vmem:[%s3 + $0x814] sm:$0xff]
    %v445 = vld [vmem:[%s3 + $0x81c] sm:$0xf]
    %v446 = vld [vmem:[%s3 + $0x820] sm:$0xff]
    %v447 = vld [vmem:[%s3 + $0x828] sm:$0xff]
    %v448 = vld [vmem:[%s3 + $0x830] sm:$0xff]
    %v449 = vld [vmem:[%s3 + $0x838] sm:$0xff]
    %v450 = vld [vmem:[%s3 + $0x840] sm:$0xff]
    %v451 = vld [vmem:[%s3 + $0x848] sm:$0xff]
    %v452 = vld [vmem:[%s3 + $0x850] sm:$0xf]
    %v453 = vld [vmem:[%s3 + $0x854] sm:$0xff]
    %v454 = vld [vmem:[%s3 + $0x85c] sm:$0xff]
    %v455 = vld [vmem:[%s3 + $0x864] sm:$0xff]
    %v456 = vld [vmem:[%s3 + $0x86c] sm:$0xff]
    %v457 = vld [vmem:[%s3 + $0x874] sm:$0xff]
    %v458 = vld [vmem:[%s3 + $0x87c] sm:$0xff]
    %v459 = vld [vmem:[%s3 + $0x884] sm:$0xf]
    %v460 = vld [vmem:[%s3 + $0x888] sm:$0xff]
    %v461 = vld [vmem:[%s3 + $0x890] sm:$0xff]
    %v462 = vld [vmem:[%s3 + $0x898] sm:$0xff]
    %v463 = vld [vmem:[%s3 + $0x8a0] sm:$0xff]
    %v464 = vld [vmem:[%s3 + $0x8a8] sm:$0xff]
    %v465 = vld [vmem:[%s3 + $0x8b0] sm:$0xff]
    %v466 = vld [vmem:[%s3 + $0x8b8] sm:$0xf]
    %v467 = vld [vmem:[%s3 + $0x8bc] sm:$0xff]
    %v468 = vld [vmem:[%s3 + $0x8c4] sm:$0xff]
    %v469 = vld [vmem:[%s3 + $0x8cc] sm:$0xff]
    %v470 = vld [vmem:[%s3 + $0x8d4] sm:$0xff]
    %v471 = vld [vmem:[%s3 + $0x8dc] sm:$0xff]
    %v472 = vld [vmem:[%s3 + $0x8e4] sm:$0xff]
    %v473 = vld [vmem:[%s3 + $0x8ec] sm:$0xf]
    %v474 = vld [vmem:[%s3 + $0x8f0] sm:$0xff]
    %v475 = vld [vmem:[%s3 + $0x8f8] sm:$0xff]
    %v476 = vld [vmem:[%s3 + $0x900] sm:$0xff]
    %v477 = vld [vmem:[%s3 + $0x908] sm:$0xff]
    %v478 = vld [vmem:[%s3 + $0x910] sm:$0xff]
    %v479 = vld [vmem:[%s3 + $0x918] sm:$0xff]
    %v480 = vld [vmem:[%s3 + $0x920] sm:$0xf]
    %v481 = vld [vmem:[%s3 + $0x924] sm:$0xff]
    %v482 = vld [vmem:[%s3 + $0x92c] sm:$0xff]
    %v483 = vld [vmem:[%s3 + $0x934] sm:$0xff]
    %v484 = vld [vmem:[%s3 + $0x93c] sm:$0xff]
    %v485 = vld [vmem:[%s3 + $0x944] sm:$0xff]
    %v486 = vld [vmem:[%s3 + $0x94c] sm:$0xff]
    %v487 = vld [vmem:[%s3 + $0x954] sm:$0xf]
    %v488 = vld [vmem:[%s3 + $0x958] sm:$0xff]
    %v489 = vld [vmem:[%s3 + $0x960] sm:$0xff]
    %v490 = vld [vmem:[%s3 + $0x968] sm:$0xff]
    %v491 = vld [vmem:[%s3 + $0x970] sm:$0xff]
    %v492 = vld [vmem:[%s3 + $0x978] sm:$0xff]
    %v493 = vld [vmem:[%s3 + $0x980] sm:$0xff]
    %v494 = vld [vmem:[%s3 + $0x988] sm:$0xf]
    %v495 = vld [vmem:[%s3 + $0x98c] sm:$0xff]
    %v496 = vld [vmem:[%s3 + $0x994] sm:$0xff]
    %v497 = vld [vmem:[%s3 + $0x99c] sm:$0xff]
    %v498 = vld [vmem:[%s3 + $0x9a4] sm:$0xff]
    %v499 = vld [vmem:[%s3 + $0x9ac] sm:$0xff]
    %v500 = vld [vmem:[%s3 + $0x9b4] sm:$0xff]
    %v501 = vld [vmem:[%s3 + $0x9bc] sm:$0xf]
    %v502 = vld [vmem:[%s3 + $0x9c0] sm:$0xff]
    %v503 = vld [vmem:[%s3 + $0x9c8] sm:$0xff]
    %v504 = vld [vmem:[%s3 + $0x9d0] sm:$0xff]
    %v505 = vld [vmem:[%s3 + $0x9d8] sm:$0xff]
    %v506 = vld [vmem:[%s3 + $0x9e0] sm:$0xff]
    %v507 = vld [vmem:[%s3 + $0x9e8] sm:$0xff]
    %v508 = vld [vmem:[%s3 + $0x9f0] sm:$0xf]
    %v509 = vld [vmem:[%s3 + $0x9f4] sm:$0xff]
    %v510 = vld [vmem:[%s3 + $0x9fc] sm:$0xff]
    %v511 = vld [vmem:[%s3 + $0xa04] sm:$0xff]
    %v512 = vld [vmem:[%s3 + $0xa0c] sm:$0xff]
    %v513 = vld [vmem:[%s3 + $0xa14] sm:$0xff]
    %v514 = vld [vmem:[%s3 + $0xa1c] sm:$0xff]
    %v515 = vld [vmem:[%s3 + $0xa24] sm:$0xf]
    %v516 = vld [vmem:[%s3 + $0xa28] sm:$0xff]
    %v517 = vld [vmem:[%s3 + $0xa30] sm:$0xff]
    %v518 = vld [vmem:[%s3 + $0xa38] sm:$0xff]
    %v519 = vld [vmem:[%s3 + $0xa40] sm:$0xff]
    %v520 = vld [vmem:[%s3 + $0xa48] sm:$0xff]
    %v521 = vld [vmem:[%s3 + $0xa50] sm:$0xff]
    %v522 = vld [vmem:[%s3 + $0xa58] sm:$0xf]
    %v523 = vld [vmem:[%s3 + $0xa5c] sm:$0xff]
    %v524 = vld [vmem:[%s3 + $0xa64] sm:$0xff]
    %v525 = vld [vmem:[%s3 + $0xa6c] sm:$0xff]
    %v526 = vld [vmem:[%s3 + $0xa74] sm:$0xff]
    %v527 = vld [vmem:[%s3 + $0xa7c] sm:$0xff]
    %v528 = vld [vmem:[%s3 + $0xa84] sm:$0xff]
    %v529 = vld [vmem:[%s3 + $0xa8c] sm:$0xf]
    %v530 = vld [vmem:[%s3 + $0xa90] sm:$0xff]
    %v531 = vld [vmem:[%s3 + $0xa98] sm:$0xff]
    %v532 = vld [vmem:[%s3 + $0xaa0] sm:$0xff]
    %v533 = vld [vmem:[%s3 + $0xaa8] sm:$0xff]
    %v534 = vld [vmem:[%s3 + $0xab0] sm:$0xff]
    %v535 = vld [vmem:[%s3 + $0xab8] sm:$0xff]
    %v536 = vld [vmem:[%s3 + $0xac0] sm:$0xf]
    %v537 = vld [vmem:[%s3 + $0xac4] sm:$0xff]
    %v538 = vld [vmem:[%s3 + $0xacc] sm:$0xff]
    %v539 = vld [vmem:[%s3 + $0xad4] sm:$0xff]
    %v540 = vld [vmem:[%s3 + $0xadc] sm:$0xff]
    %v541 = vld [vmem:[%s3 + $0xae4] sm:$0xff]
    %v542 = vld [vmem:[%s3 + $0xaec] sm:$0xff]
    %v543 = vld [vmem:[%s3 + $0xaf4] sm:$0xf]
    %v544 = vld [vmem:[%s3 + $0xaf8] sm:$0xff]
    %v545 = vld [vmem:[%s3 + $0xb00] sm:$0xff]
    %v546 = vld [vmem:[%s3 + $0xb08] sm:$0xff]
    %v547 = vld [vmem:[%s3 + $0xb10] sm:$0xff]
    %v548 = vld [vmem:[%s3 + $0xb18] sm:$0xff]
    %v549 = vld [vmem:[%s3 + $0xb20] sm:$0xff]
    %v550 = vld [vmem:[%s3 + $0xb28] sm:$0xf]
    %v551 = vld [vmem:[%s3 + $0xb2c] sm:$0xff]
    %v552 = vld [vmem:[%s3 + $0xb34] sm:$0xff]
    %v553 = vld [vmem:[%s3 + $0xb3c] sm:$0xff]
    %v554 = vld [vmem:[%s3 + $0xb44] sm:$0xff]
    %v555 = vld [vmem:[%s3 + $0xb4c] sm:$0xff]
    %v556 = vld [vmem:[%s3 + $0xb54] sm:$0xff]
    %v557 = vld [vmem:[%s3 + $0xb5c] sm:$0xf]
    %v558 = vld [vmem:[%s3 + $0xb60] sm:$0xff]
    %v559 = vld [vmem:[%s3 + $0xb68] sm:$0xff]
    %v560 = vld [vmem:[%s3 + $0xb70] sm:$0xff]
    %v561 = vld [vmem:[%s3 + $0xb78] sm:$0xff]
    %v562 = vld [vmem:[%s3 + $0xb80] sm:$0xff]
    %v563 = vld [vmem:[%s3 + $0xb88] sm:$0xff]
    %v564 = vld [vmem:[%s3 + $0xb90] sm:$0xf]
    %v565 = vld [vmem:[%s3 + $0xb94] sm:$0xff]
    %v566 = vld [vmem:[%s3 + $0xb9c] sm:$0xff]
    %v567 = vld [vmem:[%s3 + $0xba4] sm:$0xff]
    %v568 = vld [vmem:[%s3 + $0xbac] sm:$0xff]
    %v569 = vld [vmem:[%s3 + $0xbb4] sm:$0xff]
    %v570 = vld [vmem:[%s3 + $0xbbc] sm:$0xff]
    %v571 = vld [vmem:[%s3 + $0xbc4] sm:$0xf]
    %v572 = vld [vmem:[%s3 + $0xbc8] sm:$0xff]
    %v573 = vld [vmem:[%s3 + $0xbd0] sm:$0xff]
    %v574 = vld [vmem:[%s3 + $0xbd8] sm:$0xff]
    %v575 = vld [vmem:[%s3 + $0xbe0] sm:$0xff]
    %v576 = vld [vmem:[%s3 + $0xbe8] sm:$0xff]
    %v577 = vld [vmem:[%s3 + $0xbf0] sm:$0xff]
    %v578 = vld [vmem:[%s3 + $0xbf8] sm:$0xf]
    %v579 = vld [vmem:[%s3 + $0xbfc] sm:$0xff]
    %v580 = vld [vmem:[%s3 + $0xc04] sm:$0xff]
    %v581 = vld [vmem:[%s3 + $0xc0c] sm:$0xff]
    %v582 = vld [vmem:[%s3 + $0xc14] sm:$0xff]
    %v583 = vld [vmem:[%s3 + $0xc1c] sm:$0xff]
    %v584 = vld [vmem:[%s3 + $0xc24] sm:$0xff]
    %v585 = vld [vmem:[%s3 + $0xc2c] sm:$0xf]
    %v586 = vld [vmem:[%s3 + $0xc30] sm:$0xff]
    %v587 = vld [vmem:[%s3 + $0xc38] sm:$0xff]
    %v588 = vld [vmem:[%s3 + $0xc40] sm:$0xff]
    %v589 = vld [vmem:[%s3 + $0xc48] sm:$0xff]
    %v590 = vld [vmem:[%s3 + $0xc50] sm:$0xff]
    %v591 = vld [vmem:[%s3 + $0xc58] sm:$0xff]
    %v592 = vld [vmem:[%s3 + $0xc60] sm:$0xf]
    %v593 = vld [vmem:[%s3 + $0xc64] sm:$0xff]
    %v594 = vld [vmem:[%s3 + $0xc6c] sm:$0xff]
    %v595 = vld [vmem:[%s3 + $0xc74] sm:$0xff]
    %v596 = vld [vmem:[%s3 + $0xc7c] sm:$0xff]
    %v597 = vld [vmem:[%s3 + $0xc84] sm:$0xff]
    %v598 = vld [vmem:[%s3 + $0xc8c] sm:$0xff]
    %v599 = vld [vmem:[%s3 + $0xc94] sm:$0xf]
    %v600 = vld [vmem:[%s3 + $0xc98] sm:$0xff]
    %v601 = vld [vmem:[%s3 + $0xca0] sm:$0xff]
    %v602 = vld [vmem:[%s3 + $0xca8] sm:$0xff]
    %v603 = vld [vmem:[%s3 + $0xcb0] sm:$0xff]
    %v604 = vld [vmem:[%s3 + $0xcb8] sm:$0xff]
    %v605 = vld [vmem:[%s3 + $0xcc0] sm:$0xff]
    %v606 = vld [vmem:[%s3 + $0xcc8] sm:$0xf]
    %v607 = vld [vmem:[%s3 + $0xccc] sm:$0xff]
    %v608 = vld [vmem:[%s3 + $0xcd4] sm:$0xff]
    %v609 = vld [vmem:[%s3 + $0xcdc] sm:$0xff]
    %v610 = vld [vmem:[%s3 + $0xce4] sm:$0xff]
    %v611 = vld [vmem:[%s3 + $0xcec] sm:$0xff]
    %v612 = vld [vmem:[%s3 + $0xcf4] sm:$0xff]
    %v613 = vld [vmem:[%s3 + $0xcfc] sm:$0xf]
    %v614 = vld [vmem:[%s3 + $0xd00] sm:$0xff]
    %v615 = vld [vmem:[%s3 + $0xd08] sm:$0xff]
    %v616 = vld [vmem:[%s3 + $0xd10] sm:$0xff]
    %v617 = vld [vmem:[%s3 + $0xd18] sm:$0xff]
    %v618 = vld [vmem:[%s3 + $0xd20] sm:$0xff]
    %v619 = vld [vmem:[%s3 + $0xd28] sm:$0xff]
    %v620 = vld [vmem:[%s3 + $0xd30] sm:$0xf]
    %v621 = vld [vmem:[%s3 + $0xd34] sm:$0xff]
    %v622 = vld [vmem:[%s3 + $0xd3c] sm:$0xff]
    %v623 = vld [vmem:[%s3 + $0xd44] sm:$0xff]
    %v624 = vld [vmem:[%s3 + $0xd4c] sm:$0xff]
    %v625 = vld [vmem:[%s3 + $0xd54] sm:$0xff]
    %v626 = vld [vmem:[%s3 + $0xd5c] sm:$0xff]
    %v627 = vld [vmem:[%s3 + $0xd64] sm:$0xf]
    %v628 = vld [vmem:[%s3 + $0xd68] sm:$0xff]
    %v629 = vld [vmem:[%s3 + $0xd70] sm:$0xff]
    %v630 = vld [vmem:[%s3 + $0xd78] sm:$0xff]
    %v631 = vld [vmem:[%s3 + $0xd80] sm:$0xff]
    %v632 = vld [vmem:[%s3 + $0xd88] sm:$0xff]
    %v633 = vld [vmem:[%s3 + $0xd90] sm:$0xff]
    %v634 = vld [vmem:[%s3 + $0xd98] sm:$0xf]
    %v635 = vld [vmem:[%s3 + $0xd9c] sm:$0xff]
    %v636 = vld [vmem:[%s3 + $0xda4] sm:$0xff]
    %v637 = vld [vmem:[%s3 + $0xdac] sm:$0xff]
    %v638 = vld [vmem:[%s3 + $0xdb4] sm:$0xff]
    %v639 = vld [vmem:[%s3 + $0xdbc] sm:$0xff]
    %v640 = vld [vmem:[%s3 + $0xdc4] sm:$0xff]
    %v641 = vld [vmem:[%s3 + $0xdcc] sm:$0xf]
    %v642 = vld [vmem:[%s3 + $0xdd0] sm:$0xff]
    %v643 = vld [vmem:[%s3 + $0xdd8] sm:$0xff]
    %v644 = vld [vmem:[%s3 + $0xde0] sm:$0xff]
    %v645 = vld [vmem:[%s3 + $0xde8] sm:$0xff]
    %v646 = vld [vmem:[%s3 + $0xdf0] sm:$0xff]
    %v647 = vld [vmem:[%s3 + $0xdf8] sm:$0xff]
    %v648 = vld [vmem:[%s3 + $0xe00] sm:$0xf]
    %v649 = vld [vmem:[%s3 + $0xe04] sm:$0xff]
    %v650 = vld [vmem:[%s3 + $0xe0c] sm:$0xff]
    %v651 = vld [vmem:[%s3 + $0xe14] sm:$0xff]
    %v652 = vld [vmem:[%s3 + $0xe1c] sm:$0xff]
    %v653 = vld [vmem:[%s3 + $0xe24] sm:$0xff]
    %v654 = vld [vmem:[%s3 + $0xe2c] sm:$0xff]
    %v655 = vld [vmem:[%s3 + $0xe34] sm:$0xf]
    %v656 = vld [vmem:[%s3 + $0xe38] sm:$0xff]
    %v657 = vld [vmem:[%s3 + $0xe40] sm:$0xff]
    %v658 = vld [vmem:[%s3 + $0xe48] sm:$0xff]
    %v659 = vld [vmem:[%s3 + $0xe50] sm:$0xff]
    %v660 = vld [vmem:[%s3 + $0xe58] sm:$0xff]
    %v661 = vld [vmem:[%s3 + $0xe60] sm:$0xff]
    %v662 = vld [vmem:[%s3 + $0xe68] sm:$0xf]
    %v663 = vld [vmem:[%s3 + $0xe6c] sm:$0xff]
    %v664 = vld [vmem:[%s3 + $0xe74] sm:$0xff]
    %v665 = vld [vmem:[%s3 + $0xe7c] sm:$0xff]
    %v666 = vld [vmem:[%s3 + $0xe84] sm:$0xff]
    %v667 = vld [vmem:[%s3 + $0xe8c] sm:$0xff]
    %v668 = vld [vmem:[%s3 + $0xe94] sm:$0xff]
    %v669 = vld [vmem:[%s3 + $0xe9c] sm:$0xf]
    %v670 = vld [vmem:[%s3 + $0xea0] sm:$0xff]
    %v671 = vld [vmem:[%s3 + $0xea8] sm:$0xff]
    %v672 = vld [vmem:[%s3 + $0xeb0] sm:$0xff]
    %v673 = vld [vmem:[%s3 + $0xeb8] sm:$0xff]
    %v674 = vld [vmem:[%s3 + $0xec0] sm:$0xff]
    %v675 = vld [vmem:[%s3 + $0xec8] sm:$0xff]
    %v676 = vld [vmem:[%s3 + $0xed0] sm:$0xf]
    %v677 = vld [vmem:[%s3 + $0xed4] sm:$0xff]
    %v678 = vld [vmem:[%s3 + $0xedc] sm:$0xff]
    %v679 = vld [vmem:[%s3 + $0xee4] sm:$0xff]
    %v680 = vld [vmem:[%s3 + $0xeec] sm:$0xff]
    %v681 = vld [vmem:[%s3 + $0xef4] sm:$0xff]
    %v682 = vld [vmem:[%s3 + $0xefc] sm:$0xff]
    %v683 = vld [vmem:[%s3 + $0xf04] sm:$0xf]
    %v684 = vld [vmem:[%s3 + $0xf08] sm:$0xff]
    %v685 = vld [vmem:[%s3 + $0xf10] sm:$0xff]
    %v686 = vld [vmem:[%s3 + $0xf18] sm:$0xff]
    %v687 = vld [vmem:[%s3 + $0xf20] sm:$0xff]
    %v688 = vld [vmem:[%s3 + $0xf28] sm:$0xff]
    %v689 = vld [vmem:[%s3 + $0xf30] sm:$0xff]
    %v690 = vld [vmem:[%s3 + $0xf38] sm:$0xf]
    %v691 = vld [vmem:[%s3 + $0xf3c] sm:$0xff]
    %v692 = vld [vmem:[%s3 + $0xf44] sm:$0xff]
    %v693 = vld [vmem:[%s3 + $0xf4c] sm:$0xff]
    %v694 = vld [vmem:[%s3 + $0xf54] sm:$0xff]
    %v695 = vld [vmem:[%s3 + $0xf5c] sm:$0xff]
    %v696 = vld [vmem:[%s3 + $0xf64] sm:$0xff]
    %v697 = vld [vmem:[%s3 + $0xf6c] sm:$0xf]
    %v698 = vld [vmem:[%s3 + $0xf70] sm:$0xff]
    %v699 = vld [vmem:[%s3 + $0xf78] sm:$0xff]
    %v700 = vld [vmem:[%s3 + $0xf80] sm:$0xff]
    %v701 = vld [vmem:[%s3 + $0xf88] sm:$0xff]
    %v702 = vld [vmem:[%s3 + $0xf90] sm:$0xff]
    %v703 = vld [vmem:[%s3 + $0xf98] sm:$0xff]
    %v704 = vld [vmem:[%s3 + $0xfa0] sm:$0xf]
    %v705 = vld [vmem:[%s3 + $0xfa4] sm:$0xff]
    %v706 = vld [vmem:[%s3 + $0xfac] sm:$0xff]
    %v707 = vld [vmem:[%s3 + $0xfb4] sm:$0xff]
    %v708 = vld [vmem:[%s3 + $0xfbc] sm:$0xff]
    %v709 = vld [vmem:[%s3 + $0xfc4] sm:$0xff]
    %v710 = vld [vmem:[%s3 + $0xfcc] sm:$0xff]
    %v711 = vld [vmem:[%s3 + $0xfd4] sm:$0xf]
    %v712 = vld [vmem:[%s3 + $0xfd8] sm:$0xff]
    %v713 = vld [vmem:[%s3 + $0xfe0] sm:$0xff]
    %v714 = vld [vmem:[%s3 + $0xfe8] sm:$0xff]
    %v715 = vld [vmem:[%s3 + $0xff0] sm:$0xff]
    %v716 = vld [vmem:[%s3 + $0xff8] sm:$0xff]
    %v717 = vld [vmem:[%s3 + $0x1000] sm:$0xff]
    %v718 = vld [vmem:[%s3 + $0x1008] sm:$0xf]
    %v719 = vld [vmem:[%s3 + $0x100c] sm:$0xff]
    %v720 = vld [vmem:[%s3 + $0x1014] sm:$0xff]
    %v721 = vld [vmem:[%s3 + $0x101c] sm:$0xff]
    %v722 = vld [vmem:[%s3 + $0x1024] sm:$0xff]
    %v723 = vld [vmem:[%s3 + $0x102c] sm:$0xff]
    %v724 = vld [vmem:[%s3 + $0x1034] sm:$0xff]
    %v725 = vld [vmem:[%s3 + $0x103c] sm:$0xf]
    %v726 = vld [vmem:[%s3 + $0x1040] sm:$0xff]
    %v727 = vld [vmem:[%s3 + $0x1048] sm:$0xff]
    %v728 = vld [vmem:[%s3 + $0x1050] sm:$0xff]
    %v729 = vld [vmem:[%s3 + $0x1058] sm:$0xff]
    %v730 = vld [vmem:[%s3 + $0x1060] sm:$0xff]
    %v731 = vld [vmem:[%s3 + $0x1068] sm:$0xff]
    %v732 = vld [vmem:[%s3 + $0x1070] sm:$0xf]
    %v733 = vld [vmem:[%s3 + $0x1074] sm:$0xff]
    %v734 = vld [vmem:[%s3 + $0x107c] sm:$0xff]
    %v735 = vld [vmem:[%s3 + $0x1084] sm:$0xff]
    %v736 = vld [vmem:[%s3 + $0x108c] sm:$0xff]
    %v737 = vld [vmem:[%s3 + $0x1094] sm:$0xff]
    %v738 = vld [vmem:[%s3 + $0x109c] sm:$0xff]
    %v739 = vld [vmem:[%s3 + $0x10a4] sm:$0xf]
    %v740 = vld [vmem:[%s3 + $0x10a8] sm:$0xff]
    %v741 = vld [vmem:[%s3 + $0x10b0] sm:$0xff]
    %v742 = vld [vmem:[%s3 + $0x10b8] sm:$0xff]
    %v743 = vld [vmem:[%s3 + $0x10c0] sm:$0xff]
    %v744 = vld [vmem:[%s3 + $0x10c8] sm:$0xff]
    %v745 = vld [vmem:[%s3 + $0x10d0] sm:$0xff]
    %v746 = vld [vmem:[%s3 + $0x10d8] sm:$0xf]
    %v747 = vld [vmem:[%s3 + $0x10dc] sm:$0xff]
    %v748 = vld [vmem:[%s3 + $0x10e4] sm:$0xff]
    %v749 = vld [vmem:[%s3 + $0x10ec] sm:$0xff]
    %v750 = vld [vmem:[%s3 + $0x10f4] sm:$0xff]
    %v751 = vld [vmem:[%s3 + $0x10fc] sm:$0xff]
    %v752 = vld [vmem:[%s3 + $0x1104] sm:$0xff]
    %v753 = vld [vmem:[%s3 + $0x110c] sm:$0xf]
    %v754 = vld [vmem:[%s3 + $0x1110] sm:$0xff]
    %v755 = vld [vmem:[%s3 + $0x1118] sm:$0xff]
    %v756 = vld [vmem:[%s3 + $0x1120] sm:$0xff]
    %v757 = vld [vmem:[%s3 + $0x1128] sm:$0xff]
    %v758 = vld [vmem:[%s3 + $0x1130] sm:$0xff]
    %v759 = vld [vmem:[%s3 + $0x1138] sm:$0xff]
    %v760 = vld [vmem:[%s3 + $0x1140] sm:$0xf]
    %v761 = vld [vmem:[%s3 + $0x1144] sm:$0xff]
    %v762 = vld [vmem:[%s3 + $0x114c] sm:$0xff]
    %v763 = vld [vmem:[%s3 + $0x1154] sm:$0xff]
    %v764 = vld [vmem:[%s3 + $0x115c] sm:$0xff]
    %v765 = vld [vmem:[%s3 + $0x1164] sm:$0xff]
    %v766 = vld [vmem:[%s3 + $0x116c] sm:$0xff]
    %v767 = vld [vmem:[%s3 + $0x1174] sm:$0xf]
    %v768 = vld [vmem:[%s3 + $0x1178] sm:$0xff]
    %v769 = vld [vmem:[%s3 + $0x1180] sm:$0xff]
    %v770 = vld [vmem:[%s3 + $0x1188] sm:$0xff]
    %v771 = vld [vmem:[%s3 + $0x1190] sm:$0xff]
    %v772 = vld [vmem:[%s3 + $0x1198] sm:$0xff]
    %v773 = vld [vmem:[%s3 + $0x11a0] sm:$0xff]
    %v774 = vld [vmem:[%s3 + $0x11a8] sm:$0xf]
    %v775 = vld [vmem:[%s3 + $0x11ac] sm:$0xff]
    %v776 = vld [vmem:[%s3 + $0x11b4] sm:$0xff]
    %v777 = vld [vmem:[%s3 + $0x11bc] sm:$0xff]
    %v778 = vld [vmem:[%s3 + $0x11c4] sm:$0xff]
    %v779 = vld [vmem:[%s3 + $0x11cc] sm:$0xff]
    %v780 = vld [vmem:[%s3 + $0x11d4] sm:$0xff]
    %v781 = vld [vmem:[%s3 + $0x11dc] sm:$0xf]
    %v782 = vld [vmem:[%s3 + $0x11e0] sm:$0xff]
    %v783 = vld [vmem:[%s3 + $0x11e8] sm:$0xff]
    %v784 = vld [vmem:[%s3 + $0x11f0] sm:$0xff]
    %v785 = vld [vmem:[%s3 + $0x11f8] sm:$0xff]
    %v786 = vld [vmem:[%s3 + $0x1200] sm:$0xff]
    %v787 = vld [vmem:[%s3 + $0x1208] sm:$0xff]
    %v788 = vld [vmem:[%s3 + $0x1210] sm:$0xf]
    %v789 = vld [vmem:[%s3 + $0x1214] sm:$0xff]
    %v790 = vld [vmem:[%s3 + $0x121c] sm:$0xff]
    %v791 = vld [vmem:[%s3 + $0x1224] sm:$0xff]
    %v792 = vld [vmem:[%s3 + $0x122c] sm:$0xff]
    %v793 = vld [vmem:[%s3 + $0x1234] sm:$0xff]
    %v794 = vld [vmem:[%s3 + $0x123c] sm:$0xff]
    %v795 = vld [vmem:[%s3 + $0x1244] sm:$0xf]
    %v796 = vld [vmem:[%s3 + $0x1248] sm:$0xff]
    %v797 = vld [vmem:[%s3 + $0x1250] sm:$0xff]
    %v798 = vld [vmem:[%s3 + $0x1258] sm:$0xff]
    %v799 = vld [vmem:[%s3 + $0x1260] sm:$0xff]
    %v800 = vld [vmem:[%s3 + $0x1268] sm:$0xff]
    %v801 = vld [vmem:[%s3 + $0x1270] sm:$0xff]
    %v802 = vld [vmem:[%s3 + $0x1278] sm:$0xf]
    %v803 = vld [vmem:[%s3 + $0x127c] sm:$0xff]
    %v804 = vld [vmem:[%s3 + $0x1284] sm:$0xff]
    %v805 = vld [vmem:[%s3 + $0x128c] sm:$0xff]
    %v806 = vld [vmem:[%s3 + $0x1294] sm:$0xff]
    %v807 = vld [vmem:[%s3 + $0x129c] sm:$0xff]
    %v808 = vld [vmem:[%s3 + $0x12a4] sm:$0xff]
    %v809 = vld [vmem:[%s3 + $0x12ac] sm:$0xf]
    %v810 = vld [vmem:[%s3 + $0x12b0] sm:$0xff]
    %v811 = vld [vmem:[%s3 + $0x12b8] sm:$0xff]
    %v812 = vld [vmem:[%s3 + $0x12c0] sm:$0xff]
    %v813 = vld [vmem:[%s3 + $0x12c8] sm:$0xff]
    %v814 = vld [vmem:[%s3 + $0x12d0] sm:$0xff]
    %v815 = vld [vmem:[%s3 + $0x12d8] sm:$0xff]
    %v816 = vld [vmem:[%s3 + $0x12e0] sm:$0xf]
    %v817 = vld [vmem:[%s3 + $0x12e4] sm:$0xff]
    %v818 = vld [vmem:[%s3 + $0x12ec] sm:$0xff]
    %v819 = vld [vmem:[%s3 + $0x12f4] sm:$0xff]
    %v820 = vld [vmem:[%s3 + $0x12fc] sm:$0xff]
    %v821 = vld [vmem:[%s3 + $0x1304] sm:$0xff]
    %v822 = vld [vmem:[%s3 + $0x130c] sm:$0xff]
    %v823 = vld [vmem:[%s3 + $0x1314] sm:$0xf]
    %v824 = vld [vmem:[%s3 + $0x1318] sm:$0xff]
    %v825 = vld [vmem:[%s3 + $0x1320] sm:$0xff]
    %v826 = vld [vmem:[%s3 + $0x1328] sm:$0xff]
    %v827 = vld [vmem:[%s3 + $0x1330] sm:$0xff]
    %v828 = vld [vmem:[%s3 + $0x1338] sm:$0xff]
    %v829 = vld [vmem:[%s3 + $0x1340] sm:$0xff]
    %v830 = vld [vmem:[%s3 + $0x1348] sm:$0xf]
    %v831 = vld [vmem:[%s3 + $0x134c] sm:$0xff]
    %v832 = vld [vmem:[%s3 + $0x1354] sm:$0xff]
    %v833 = vld [vmem:[%s3 + $0x135c] sm:$0xff]
    %v834 = vld [vmem:[%s3 + $0x1364] sm:$0xff]
    %v835 = vld [vmem:[%s3 + $0x136c] sm:$0xff]
    %v836 = vld [vmem:[%s3 + $0x1374] sm:$0xff]
    %v837 = vld [vmem:[%s3 + $0x137c] sm:$0xf]
    %v838 = vld [vmem:[%s3 + $0x1380] sm:$0xff]
    %v839 = vld [vmem:[%s3 + $0x1388] sm:$0xff]
    %v840 = vld [vmem:[%s3 + $0x1390] sm:$0xff]
    %v841 = vld [vmem:[%s3 + $0x1398] sm:$0xff]
    %v842 = vld [vmem:[%s3 + $0x13a0] sm:$0xff]
    %v843 = vld [vmem:[%s3 + $0x13a8] sm:$0xff]
    %v844 = vld [vmem:[%s3 + $0x13b0] sm:$0xf]
    %v845 = vld [vmem:[%s3 + $0x13b4] sm:$0xff]
    %v846 = vld [vmem:[%s3 + $0x13bc] sm:$0xff]
    %v847 = vld [vmem:[%s3 + $0x13c4] sm:$0xff]
    %v848 = vld [vmem:[%s3 + $0x13cc] sm:$0xff]
    %v849 = vld [vmem:[%s3 + $0x13d4] sm:$0xff]
    %v850 = vld [vmem:[%s3 + $0x13dc] sm:$0xff]
    %v851 = vld [vmem:[%s3 + $0x13e4] sm:$0xf]
    %v852 = vld [vmem:[%s3 + $0x13e8] sm:$0xff]
    %v853 = vld [vmem:[%s3 + $0x13f0] sm:$0xff]
    %v854 = vld [vmem:[%s3 + $0x13f8] sm:$0xff]
    %v855 = vld [vmem:[%s3 + $0x1400] sm:$0xff]
    %v856 = vld [vmem:[%s3 + $0x1408] sm:$0xff]
    %v857 = vld [vmem:[%s3 + $0x1410] sm:$0xff]
    %v858 = vld [vmem:[%s3 + $0x1418] sm:$0xf]
    %v859 = vld [vmem:[%s3 + $0x141c] sm:$0xff]
    %v860 = vld [vmem:[%s3 + $0x1424] sm:$0xff]
    %v861 = vld [vmem:[%s3 + $0x142c] sm:$0xff]
    %v862 = vld [vmem:[%s3 + $0x1434] sm:$0xff]
    %v863 = vld [vmem:[%s3 + $0x143c] sm:$0xff]
    %v864 = vld [vmem:[%s3 + $0x1444] sm:$0xff]
    %v865 = vld [vmem:[%s3 + $0x144c] sm:$0xf]
    %v866 = vld [vmem:[%s3 + $0x1450] sm:$0xff]
    %v867 = vld [vmem:[%s3 + $0x1458] sm:$0xff]
    %v868 = vld [vmem:[%s3 + $0x1460] sm:$0xff]
    %v869 = vld [vmem:[%s3 + $0x1468] sm:$0xff]
    %v870 = vld [vmem:[%s3 + $0x1470] sm:$0xff]
    %v871 = vld [vmem:[%s3 + $0x1478] sm:$0xff]
    %v872 = vld [vmem:[%s3 + $0x1480] sm:$0xf]
    %v873 = vld [vmem:[%s3 + $0x1484] sm:$0xff]
    %v874 = vld [vmem:[%s3 + $0x148c] sm:$0xff]
    %v875 = vld [vmem:[%s3 + $0x1494] sm:$0xff]
    %v876 = vld [vmem:[%s3 + $0x149c] sm:$0xff]
    %v877 = vld [vmem:[%s3 + $0x14a4] sm:$0xff]
    %v878 = vld [vmem:[%s3 + $0x14ac] sm:$0xff]
    %v879 = vld [vmem:[%s3 + $0x14b4] sm:$0xf]
    %v880 = vld [vmem:[%s3 + $0x14b8] sm:$0xff]
    %v881 = vld [vmem:[%s3 + $0x14c0] sm:$0xff]
    %v882 = vld [vmem:[%s3 + $0x14c8] sm:$0xff]
    %v883 = vld [vmem:[%s3 + $0x14d0] sm:$0xff]
    %v884 = vld [vmem:[%s3 + $0x14d8] sm:$0xff]
    %v885 = vld [vmem:[%s3 + $0x14e0] sm:$0xff]
    %v886 = vld [vmem:[%s3 + $0x14e8] sm:$0xf]
    %v887 = vld [vmem:[%s3 + $0x14ec] sm:$0xff]
    %v888 = vld [vmem:[%s3 + $0x14f4] sm:$0xff]
    %v889 = vld [vmem:[%s3 + $0x14fc] sm:$0xff]
    %v890 = vld [vmem:[%s3 + $0x1504] sm:$0xff]
    %v891 = vld [vmem:[%s3 + $0x150c] sm:$0xff]
    %v892 = vld [vmem:[%s3 + $0x1514] sm:$0xff]
    %v893 = vld [vmem:[%s3 + $0x151c] sm:$0xf]
    %v894 = vld [vmem:[%s3 + $0x1520] sm:$0xff]
    %v895 = vld [vmem:[%s3 + $0x1528] sm:$0xff]
    %v896 = vld [vmem:[%s3 + $0x1530] sm:$0xff]
    %v897 = vld [vmem:[%s3 + $0x1538] sm:$0xff]
    %v898 = vld [vmem:[%s3 + $0x1540] sm:$0xff]
    %v899 = vld [vmem:[%s3 + $0x1548] sm:$0xff]
    %v900 = vld [vmem:[%s3 + $0x1550] sm:$0xf]
    %v901 = vld [vmem:[%s3 + $0x1554] sm:$0xff]
    %v902 = vld [vmem:[%s3 + $0x155c] sm:$0xff]
    %v903 = vld [vmem:[%s3 + $0x1564] sm:$0xff]
    %v904 = vld [vmem:[%s3 + $0x156c] sm:$0xff]
    %v905 = vld [vmem:[%s3 + $0x1574] sm:$0xff]
    %v906 = vld [vmem:[%s3 + $0x157c] sm:$0xff]
    %v907 = vld [vmem:[%s3 + $0x1584] sm:$0xf]
    %v908 = vld [vmem:[%s3 + $0x1588] sm:$0xff]
    %v909 = vld [vmem:[%s3 + $0x1590] sm:$0xff]
    %v910 = vld [vmem:[%s3 + $0x1598] sm:$0xff]
    %v911 = vld [vmem:[%s3 + $0x15a0] sm:$0xff]
    %v912 = vld [vmem:[%s3 + $0x15a8] sm:$0xff]
    %v913 = vld [vmem:[%s3 + $0x15b0] sm:$0xff]
    %v914 = vld [vmem:[%s3 + $0x15b8] sm:$0xf]
    %v915 = vld [vmem:[%s3 + $0x15bc] sm:$0xff]
    %v916 = vld [vmem:[%s3 + $0x15c4] sm:$0xff]
    %v917 = vld [vmem:[%s3 + $0x15cc] sm:$0xff]
    %v918 = vld [vmem:[%s3 + $0x15d4] sm:$0xff]
    %v919 = vld [vmem:[%s3 + $0x15dc] sm:$0xff]
    %v920 = vld [vmem:[%s3 + $0x15e4] sm:$0xff]
    %v921 = vld [vmem:[%s3 + $0x15ec] sm:$0xf]
    %v922 = vld [vmem:[%s3 + $0x15f0] sm:$0xff]
    %v923 = vld [vmem:[%s3 + $0x15f8] sm:$0xff]
    %v924 = vld [vmem:[%s3 + $0x1600] sm:$0xff]
    %v925 = vld [vmem:[%s3 + $0x1608] sm:$0xff]
    %v926 = vld [vmem:[%s3 + $0x1610] sm:$0xff]
    %v927 = vld [vmem:[%s3 + $0x1618] sm:$0xff]
    %v928 = vld [vmem:[%s3 + $0x1620] sm:$0xf]
    %v929 = vld [vmem:[%s3 + $0x1624] sm:$0xff]
    %v930 = vld [vmem:[%s3 + $0x162c] sm:$0xff]
    %v931 = vld [vmem:[%s3 + $0x1634] sm:$0xff]
    %v932 = vld [vmem:[%s3 + $0x163c] sm:$0xff]
    %v933 = vld [vmem:[%s3 + $0x1644] sm:$0xff]
    %v934 = vld [vmem:[%s3 + $0x164c] sm:$0xff]
    %v935 = vld [vmem:[%s3 + $0x1654] sm:$0xf]
    %v936 = vld [vmem:[%s3 + $0x1658] sm:$0xff]
    %v937 = vld [vmem:[%s3 + $0x1660] sm:$0xff]
    %v938 = vld [vmem:[%s3 + $0x1668] sm:$0xff]
    %v939 = vld [vmem:[%s3 + $0x1670] sm:$0xff]
    %v940 = vld [vmem:[%s3 + $0x1678] sm:$0xff]
    %v941 = vld [vmem:[%s3 + $0x1680] sm:$0xff]
    %v942 = vld [vmem:[%s3 + $0x1688] sm:$0xf]
    %v943 = vld [vmem:[%s3 + $0x168c] sm:$0xff]
    %v944 = vld [vmem:[%s3 + $0x1694] sm:$0xff]
    %v945 = vld [vmem:[%s3 + $0x169c] sm:$0xff]
    %v946 = vld [vmem:[%s3 + $0x16a4] sm:$0xff]
    %v947 = vld [vmem:[%s3 + $0x16ac] sm:$0xff]
    %v948 = vld [vmem:[%s3 + $0x16b4] sm:$0xff]
    %v949 = vld [vmem:[%s3 + $0x16bc] sm:$0xf]
    %v950 = vld [vmem:[%s3 + $0x16c0] sm:$0xff]
    %v951 = vld [vmem:[%s3 + $0x16c8] sm:$0xff]
    %v952 = vld [vmem:[%s3 + $0x16d0] sm:$0xff]
    %v953 = vld [vmem:[%s3 + $0x16d8] sm:$0xff]
    %v954 = vld [vmem:[%s3 + $0x16e0] sm:$0xff]
    %v955 = vld [vmem:[%s3 + $0x16e8] sm:$0xff]
    %v956 = vld [vmem:[%s3 + $0x16f0] sm:$0xf]
    %v957 = vld [vmem:[%s3 + $0x16f4] sm:$0xff]
    %v958 = vld [vmem:[%s3 + $0x16fc] sm:$0xff]
    %v959 = vld [vmem:[%s3 + $0x1704] sm:$0xff]
    %v960 = vld [vmem:[%s3 + $0x170c] sm:$0xff]
    %v961 = vld [vmem:[%s3 + $0x1714] sm:$0xff]
    %v962 = vld [vmem:[%s3 + $0x171c] sm:$0xff]
    %v963 = vld [vmem:[%s3 + $0x1724] sm:$0xf]
    %v964 = vld [vmem:[%s3 + $0x1728] sm:$0xff]
    %v965 = vld [vmem:[%s3 + $0x1730] sm:$0xff]
    %v966 = vld [vmem:[%s3 + $0x1738] sm:$0xff]
    %v967 = vld [vmem:[%s3 + $0x1740] sm:$0xff]
    %v968 = vld [vmem:[%s3 + $0x1748] sm:$0xff]
    %v969 = vld [vmem:[%s3 + $0x1750] sm:$0xff]
    %v970 = vld [vmem:[%s3 + $0x1758] sm:$0xf]
    %v971 = vld [vmem:[%s3 + $0x175c] sm:$0xff]
    %v972 = vld [vmem:[%s3 + $0x1764] sm:$0xff]
    %v973 = vld [vmem:[%s3 + $0x176c] sm:$0xff]
    %v974 = vld [vmem:[%s3 + $0x1774] sm:$0xff]
    %v975 = vld [vmem:[%s3 + $0x177c] sm:$0xff]
    %v976 = vld [vmem:[%s3 + $0x1784] sm:$0xff]
    %v977 = vld [vmem:[%s3 + $0x178c] sm:$0xf]
    %v978 = vld [vmem:[%s3 + $0x1790] sm:$0xff]
    %v979 = vld [vmem:[%s3 + $0x1798] sm:$0xff]
    %v980 = vld [vmem:[%s3 + $0x17a0] sm:$0xff]
    %v981 = vld [vmem:[%s3 + $0x17a8] sm:$0xff]
    %v982 = vld [vmem:[%s3 + $0x17b0] sm:$0xff]
    %v983 = vld [vmem:[%s3 + $0x17b8] sm:$0xff]
    %v984 = vld [vmem:[%s3 + $0x17c0] sm:$0xf]
    %v985 = vld [vmem:[%s3 + $0x17c4] sm:$0xff]
    %v986 = vld [vmem:[%s3 + $0x17cc] sm:$0xff]
    %v987 = vld [vmem:[%s3 + $0x17d4] sm:$0xff]
    %v988 = vld [vmem:[%s3 + $0x17dc] sm:$0xff]
    %v989 = vld [vmem:[%s3 + $0x17e4] sm:$0xff]
    %v990 = vld [vmem:[%s3 + $0x17ec] sm:$0xff]
    %v991 = vld [vmem:[%s3 + $0x17f4] sm:$0xf]
    %v992 = vld [vmem:[%s3 + $0x17f8] sm:$0xff]
    %v993 = vld [vmem:[%s3 + $0x1800] sm:$0xff]
    %v994 = vld [vmem:[%s3 + $0x1808] sm:$0xff]
    %v995 = vld [vmem:[%s3 + $0x1810] sm:$0xff]
    %v996 = vld [vmem:[%s3 + $0x1818] sm:$0xff]
    %v997 = vld [vmem:[%s3 + $0x1820] sm:$0xff]
    %v998 = vld [vmem:[%s3 + $0x1828] sm:$0xf]
    %v999 = vld [vmem:[%s3 + $0x182c] sm:$0xff]
    %v1000 = vld [vmem:[%s3 + $0x1834] sm:$0xff]
    %v1001 = vld [vmem:[%s3 + $0x183c] sm:$0xff]
    %v1002 = vld [vmem:[%s3 + $0x1844] sm:$0xff]
    %v1003 = vld [vmem:[%s3 + $0x184c] sm:$0xff]
    %v1004 = vld [vmem:[%s3 + $0x1854] sm:$0xff]
    %v1005 = vld [vmem:[%s3 + $0x185c] sm:$0xf]
    %v1006 = vld [vmem:[%s3 + $0x1860] sm:$0xff]
    %v1007 = vld [vmem:[%s3 + $0x1868] sm:$0xff]
    %v1008 = vld [vmem:[%s3 + $0x1870] sm:$0xff]
    %v1009 = vld [vmem:[%s3 + $0x1878] sm:$0xff]
    %v1010 = vld [vmem:[%s3 + $0x1880] sm:$0xff]
    %v1011 = vld [vmem:[%s3 + $0x1888] sm:$0xff]
    %v1012 = vld [vmem:[%s3 + $0x1890] sm:$0xf]
    %v1013 = vld [vmem:[%s3 + $0x1894] sm:$0xff]
    %v1014 = vld [vmem:[%s3 + $0x189c] sm:$0xff]
    %v1015 = vld [vmem:[%s3 + $0x18a4] sm:$0xff]
    %v1016 = vld [vmem:[%s3 + $0x18ac] sm:$0xff]
    %v1017 = vld [vmem:[%s3 + $0x18b4] sm:$0xff]
    %v1018 = vld [vmem:[%s3 + $0x18bc] sm:$0xff]
    %v1019 = vld [vmem:[%s3 + $0x18c4] sm:$0xf]
    %v1020 = vld [vmem:[%s3 + $0x18c8] sm:$0xff]
    %v1021 = vld [vmem:[%s3 + $0x18d0] sm:$0xff]
    %v1022 = vld [vmem:[%s3 + $0x18d8] sm:$0xff]
    %v1023 = vld [vmem:[%s3 + $0x18e0] sm:$0xff]
    %v1024 = vld [vmem:[%s3 + $0x18e8] sm:$0xff]
    %v1025 = vld [vmem:[%s3 + $0x18f0] sm:$0xff]
    %v1026 = vld [vmem:[%s3 + $0x18f8] sm:$0xf]
    %v1027 = vld [vmem:[%s3 + $0x18fc] sm:$0xff]
    %v1028 = vld [vmem:[%s3 + $0x1904] sm:$0xff]
    %v1029 = vld [vmem:[%s3 + $0x190c] sm:$0xff]
    %v1030 = vld [vmem:[%s3 + $0x1914] sm:$0xff]
    %v1031 = vld [vmem:[%s3 + $0x191c] sm:$0xff]
    %v1032 = vld [vmem:[%s3 + $0x1924] sm:$0xff]
    %v1033 = vld [vmem:[%s3 + $0x192c] sm:$0xf]
    %v1034 = vld [vmem:[%s3 + $0x1930] sm:$0xff]
    %v1035 = vld [vmem:[%s3 + $0x1938] sm:$0xff]
    %v1036 = vld [vmem:[%s3 + $0x1940] sm:$0xff]
    %v1037 = vld [vmem:[%s3 + $0x1948] sm:$0xff]
    %v1038 = vld [vmem:[%s3 + $0x1950] sm:$0xff]
    %v1039 = vld [vmem:[%s3 + $0x1958] sm:$0xff]
    %v1040 = vld [vmem:[%s3 + $0x1960] sm:$0xf]
    %v1041 = vld [vmem:[%s3 + $0x1964] sm:$0xff]
    %v1042 = vld [vmem:[%s3 + $0x196c] sm:$0xff]
    %v1043 = vld [vmem:[%s3 + $0x1974] sm:$0xff]
    %v1044 = vld [vmem:[%s3 + $0x197c] sm:$0xff]
    %v1045 = vld [vmem:[%s3 + $0x1984] sm:$0xff]
    %v1046 = vld [vmem:[%s3 + $0x198c] sm:$0xff]
    %v1047 = vld [vmem:[%s3 + $0x1994] sm:$0xf]
    %v1048 = vld [vmem:[%s3 + $0x1998] sm:$0xff]
    %v1049 = vld [vmem:[%s3 + $0x19a0] sm:$0xff]
    %v1050 = vld [vmem:[%s3 + $0x19a8] sm:$0xff]
    %v1051 = vld [vmem:[%s3 + $0x19b0] sm:$0xff]
    %v1052 = vld [vmem:[%s3 + $0x19b8] sm:$0xff]
    %v1053 = vld [vmem:[%s3 + $0x19c0] sm:$0xff]
    %v1054 = vld [vmem:[%s3 + $0x19c8] sm:$0xf]
    %v1055 = vld [vmem:[%s3 + $0x19cc] sm:$0xff]
    %v1056 = vld [vmem:[%s3 + $0x19d4] sm:$0xff]
    %v1057 = vld [vmem:[%s3 + $0x19dc] sm:$0xff]
    %v1058 = vld [vmem:[%s3 + $0x19e4] sm:$0xff]
    %v1059 = vld [vmem:[%s3 + $0x19ec] sm:$0xff]
    %v1060 = vld [vmem:[%s3 + $0x19f4] sm:$0xff]
    %v1061 = vld [vmem:[%s3 + $0x19fc] sm:$0xf]
    %v1062 = vld [vmem:[%s4] sm:$0xff]
    %v1063 = vld [vmem:[%s4 + $0x8] sm:$0x1f]
    %v1066 = vlaneseq
    %v1067 = vshrl.u32 %v1066, 7
    %v1068 = vsub.s32 0, %v1067
    %v1069 = vrot.slane %v1062, %v1068
    %v1070 = vlaneseq
    %v1071 = vshrl.u32 %v1070, 7
    %v1072 = vsub.s32 1, %v1071
    %v1073 = vrot.slane %v1062, %v1072
    %v1074 = vlaneseq
    %v1075 = vshrl.u32 %v1074, 7
    %v1076 = vsub.s32 2, %v1075
    %v1077 = vrot.slane %v1062, %v1076
    %v1078 = vlaneseq
    %v1079 = vshrl.u32 %v1078, 7
    %v1080 = vsub.s32 3, %v1079
    %v1081 = vrot.slane %v1062, %v1080
    %v1082 = vlaneseq
    %v1083 = vshrl.u32 %v1082, 7
    %v1084 = vsub.s32 4, %v1083
    %v1085 = vrot.slane %v1062, %v1084
    %v1086 = vlaneseq
    %v1087 = vshrl.u32 %v1086, 7
    %v1088 = vsub.s32 5, %v1087
    %v1089 = vrot.slane %v1062, %v1088
    %v1090 = vlaneseq
    %v1091 = vshrl.u32 %v1090, 7
    %v1092 = vsub.s32 6, %v1091
    %v1093 = vrot.slane %v1062, %v1092
    %v1094 = vlaneseq
    %v1095 = vshrl.u32 %v1094, 7
    %v1096 = vsub.s32 7, %v1095
    %v1097 = vrot.slane %v1062, %v1096
    %v1098 = vlaneseq
    %v1099 = vshrl.u32 %v1098, 7
    %v1100 = vsub.s32 0, %v1099
    %v1101 = vrot.slane %v1063, %v1100
    %v1102 = vlaneseq
    %v1103 = vshrl.u32 %v1102, 7
    %v1104 = vsub.s32 1, %v1103
    %v1105 = vrot.slane %v1063, %v1104
    %v1106 = vlaneseq
    %v1107 = vshrl.u32 %v1106, 7
    %v1108 = vsub.s32 2, %v1107
    %v1109 = vrot.slane %v1063, %v1108
    %v1110 = vlaneseq
    %v1111 = vshrl.u32 %v1110, 7
    %v1112 = vsub.s32 3, %v1111
    %v1113 = vrot.slane %v1063, %v1112
    %v1114 = vlaneseq
    %v1115 = vshrl.u32 %v1114, 7
    %v1116 = vsub.s32 4, %v1115
    %v1117 = vrot.slane %v1063, %v1116
    %v2027 = vunpack.c.l.b16 %v166
    %v2028 = vunpack.c.h.b16 %v166
    %v2029 = vunpack.c.l.b16 %v167
    %v2030 = vunpack.c.h.b16 %v167
    %v2031 = vunpack.c.l.b16 %v168
    %v2032 = vunpack.c.h.b16 %v168
    %v2033 = vunpack.c.l.b16 %v169
    %v2034 = vunpack.c.h.b16 %v169
    %v2035 = vunpack.c.l.b16 %v170
    %v2036 = vunpack.c.h.b16 %v170
    %v2037 = vunpack.c.l.b16 %v171
    %v2038 = vunpack.c.h.b16 %v171
    %v2039 = vunpack.c.l.b16 %v172
    %v2040 = vunpack.c.l.b16 %v173
    %v2041 = vunpack.c.h.b16 %v173
    %v2042 = vunpack.c.l.b16 %v174
    %v2043 = vunpack.c.h.b16 %v174
    %v2044 = vunpack.c.l.b16 %v175
    %v2045 = vunpack.c.h.b16 %v175
    %v2046 = vunpack.c.l.b16 %v176
    %v2047 = vunpack.c.h.b16 %v176
    %v2048 = vunpack.c.l.b16 %v177
    %v2049 = vunpack.c.h.b16 %v177
    %v2050 = vunpack.c.l.b16 %v178
    %v2051 = vunpack.c.h.b16 %v178
    %v2052 = vunpack.c.l.b16 %v179
    %v2053 = vunpack.c.l.b16 %v180
    %v2054 = vunpack.c.h.b16 %v180
    %v2055 = vunpack.c.l.b16 %v181
    %v2056 = vunpack.c.h.b16 %v181
    %v2057 = vunpack.c.l.b16 %v182
    %v2058 = vunpack.c.h.b16 %v182
    %v2059 = vunpack.c.l.b16 %v183
    %v2060 = vunpack.c.h.b16 %v183
    %v2061 = vunpack.c.l.b16 %v184
    %v2062 = vunpack.c.h.b16 %v184
    %v2063 = vunpack.c.l.b16 %v185
    %v2064 = vunpack.c.h.b16 %v185
    %v2065 = vunpack.c.l.b16 %v186
    %v2066 = vunpack.c.l.b16 %v187
    %v2067 = vunpack.c.h.b16 %v187
    %v2068 = vunpack.c.l.b16 %v188
    %v2069 = vunpack.c.h.b16 %v188
    %v2070 = vunpack.c.l.b16 %v189
    %v2071 = vunpack.c.h.b16 %v189
    %v2072 = vunpack.c.l.b16 %v190
    %v2073 = vunpack.c.h.b16 %v190
    %v2074 = vunpack.c.l.b16 %v191
    %v2075 = vunpack.c.h.b16 %v191
    %v2076 = vunpack.c.l.b16 %v192
    %v2077 = vunpack.c.h.b16 %v192
    %v2078 = vunpack.c.l.b16 %v193
    %v2079 = vunpack.c.l.b16 %v194
    %v2080 = vunpack.c.h.b16 %v194
    %v2081 = vunpack.c.l.b16 %v195
    %v2082 = vunpack.c.h.b16 %v195
    %v2083 = vunpack.c.l.b16 %v196
    %v2084 = vunpack.c.h.b16 %v196
    %v2085 = vunpack.c.l.b16 %v197
    %v2086 = vunpack.c.h.b16 %v197
    %v2087 = vunpack.c.l.b16 %v198
    %v2088 = vunpack.c.h.b16 %v198
    %v2089 = vunpack.c.l.b16 %v199
    %v2090 = vunpack.c.h.b16 %v199
    %v2091 = vunpack.c.l.b16 %v200
    %v2092 = vunpack.c.l.b16 %v201
    %v2093 = vunpack.c.h.b16 %v201
    %v2094 = vunpack.c.l.b16 %v202
    %v2095 = vunpack.c.h.b16 %v202
    %v2096 = vunpack.c.l.b16 %v203
    %v2097 = vunpack.c.h.b16 %v203
    %v2098 = vunpack.c.l.b16 %v204
    %v2099 = vunpack.c.h.b16 %v204
    %v2100 = vunpack.c.l.b16 %v205
    %v2101 = vunpack.c.h.b16 %v205
    %v2102 = vunpack.c.l.b16 %v206
    %v2103 = vunpack.c.h.b16 %v206
    %v2104 = vunpack.c.l.b16 %v207
    %v2105 = vunpack.c.l.b16 %v208
    %v2106 = vunpack.c.h.b16 %v208
    %v2107 = vunpack.c.l.b16 %v209
    %v2108 = vunpack.c.h.b16 %v209
    %v2109 = vunpack.c.l.b16 %v210
    %v2110 = vunpack.c.h.b16 %v210
    %v2111 = vunpack.c.l.b16 %v211
    %v2112 = vunpack.c.h.b16 %v211
    %v2113 = vunpack.c.l.b16 %v212
    %v2114 = vunpack.c.h.b16 %v212
    %v2115 = vunpack.c.l.b16 %v213
    %v2116 = vunpack.c.h.b16 %v213
    %v2117 = vunpack.c.l.b16 %v214
    %v2118 = vunpack.c.l.b16 %v215
    %v2119 = vunpack.c.h.b16 %v215
    %v2120 = vunpack.c.l.b16 %v216
    %v2121 = vunpack.c.h.b16 %v216
    %v2122 = vunpack.c.l.b16 %v217
    %v2123 = vunpack.c.h.b16 %v217
    %v2124 = vunpack.c.l.b16 %v218
    %v2125 = vunpack.c.h.b16 %v218
    %v2126 = vunpack.c.l.b16 %v219
    %v2127 = vunpack.c.h.b16 %v219
    %v2128 = vunpack.c.l.b16 %v220
    %v2129 = vunpack.c.h.b16 %v220
    %v2130 = vunpack.c.l.b16 %v221
    %v2131 = vunpack.c.l.b16 %v222
    %v2132 = vunpack.c.h.b16 %v222
    %v2133 = vunpack.c.l.b16 %v223
    %v2134 = vunpack.c.h.b16 %v223
    %v2135 = vunpack.c.l.b16 %v224
    %v2136 = vunpack.c.h.b16 %v224
    %v2137 = vunpack.c.l.b16 %v225
    %v2138 = vunpack.c.h.b16 %v225
    %v2139 = vunpack.c.l.b16 %v226
    %v2140 = vunpack.c.h.b16 %v226
    %v2141 = vunpack.c.l.b16 %v227
    %v2142 = vunpack.c.h.b16 %v227
    %v2143 = vunpack.c.l.b16 %v228
    %v2144 = vunpack.c.l.b16 %v229
    %v2145 = vunpack.c.h.b16 %v229
    %v2146 = vunpack.c.l.b16 %v230
    %v2147 = vunpack.c.h.b16 %v230
    %v2148 = vunpack.c.l.b16 %v231
    %v2149 = vunpack.c.h.b16 %v231
    %v2150 = vunpack.c.l.b16 %v232
    %v2151 = vunpack.c.h.b16 %v232
    %v2152 = vunpack.c.l.b16 %v233
    %v2153 = vunpack.c.h.b16 %v233
    %v2154 = vunpack.c.l.b16 %v234
    %v2155 = vunpack.c.h.b16 %v234
    %v2156 = vunpack.c.l.b16 %v235
    %v2157 = vunpack.c.l.b16 %v236
    %v2158 = vunpack.c.h.b16 %v236
    %v2159 = vunpack.c.l.b16 %v237
    %v2160 = vunpack.c.h.b16 %v237
    %v2161 = vunpack.c.l.b16 %v238
    %v2162 = vunpack.c.h.b16 %v238
    %v2163 = vunpack.c.l.b16 %v239
    %v2164 = vunpack.c.h.b16 %v239
    %v2165 = vunpack.c.l.b16 %v240
    %v2166 = vunpack.c.h.b16 %v240
    %v2167 = vunpack.c.l.b16 %v241
    %v2168 = vunpack.c.h.b16 %v241
    %v2169 = vunpack.c.l.b16 %v242
    %v2170 = vunpack.c.l.b16 %v243
    %v2171 = vunpack.c.h.b16 %v243
    %v2172 = vunpack.c.l.b16 %v244
    %v2173 = vunpack.c.h.b16 %v244
    %v2174 = vunpack.c.l.b16 %v245
    %v2175 = vunpack.c.h.b16 %v245
    %v2176 = vunpack.c.l.b16 %v246
    %v2177 = vunpack.c.h.b16 %v246
    %v2178 = vunpack.c.l.b16 %v247
    %v2179 = vunpack.c.h.b16 %v247
    %v2180 = vunpack.c.l.b16 %v248
    %v2181 = vunpack.c.h.b16 %v248
    %v2182 = vunpack.c.l.b16 %v249
    %v2183 = vunpack.c.l.b16 %v250
    %v2184 = vunpack.c.h.b16 %v250
    %v2185 = vunpack.c.l.b16 %v251
    %v2186 = vunpack.c.h.b16 %v251
    %v2187 = vunpack.c.l.b16 %v252
    %v2188 = vunpack.c.h.b16 %v252
    %v2189 = vunpack.c.l.b16 %v253
    %v2190 = vunpack.c.h.b16 %v253
    %v2191 = vunpack.c.l.b16 %v254
    %v2192 = vunpack.c.h.b16 %v254
    %v2193 = vunpack.c.l.b16 %v255
    %v2194 = vunpack.c.h.b16 %v255
    %v2195 = vunpack.c.l.b16 %v256
    %v2196 = vunpack.c.l.b16 %v257
    %v2197 = vunpack.c.h.b16 %v257
    %v2198 = vunpack.c.l.b16 %v258
    %v2199 = vunpack.c.h.b16 %v258
    %v2200 = vunpack.c.l.b16 %v259
    %v2201 = vunpack.c.h.b16 %v259
    %v2202 = vunpack.c.l.b16 %v260
    %v2203 = vunpack.c.h.b16 %v260
    %v2204 = vunpack.c.l.b16 %v261
    %v2205 = vunpack.c.h.b16 %v261
    %v2206 = vunpack.c.l.b16 %v262
    %v2207 = vunpack.c.h.b16 %v262
    %v2208 = vunpack.c.l.b16 %v263
    %v2209 = vunpack.c.l.b16 %v264
    %v2210 = vunpack.c.h.b16 %v264
    %v2211 = vunpack.c.l.b16 %v265
    %v2212 = vunpack.c.h.b16 %v265
    %v2213 = vunpack.c.l.b16 %v266
    %v2214 = vunpack.c.h.b16 %v266
    %v2215 = vunpack.c.l.b16 %v267
    %v2216 = vunpack.c.h.b16 %v267
    %v2217 = vunpack.c.l.b16 %v268
    %v2218 = vunpack.c.h.b16 %v268
    %v2219 = vunpack.c.l.b16 %v269
    %v2220 = vunpack.c.h.b16 %v269
    %v2221 = vunpack.c.l.b16 %v270
    %v2222 = vunpack.c.l.b16 %v271
    %v2223 = vunpack.c.h.b16 %v271
    %v2224 = vunpack.c.l.b16 %v272
    %v2225 = vunpack.c.h.b16 %v272
    %v2226 = vunpack.c.l.b16 %v273
    %v2227 = vunpack.c.h.b16 %v273
    %v2228 = vunpack.c.l.b16 %v274
    %v2229 = vunpack.c.h.b16 %v274
    %v2230 = vunpack.c.l.b16 %v275
    %v2231 = vunpack.c.h.b16 %v275
    %v2232 = vunpack.c.l.b16 %v276
    %v2233 = vunpack.c.h.b16 %v276
    %v2234 = vunpack.c.l.b16 %v277
    %v2235 = vunpack.c.l.b16 %v278
    %v2236 = vunpack.c.h.b16 %v278
    %v2237 = vunpack.c.l.b16 %v279
    %v2238 = vunpack.c.h.b16 %v279
    %v2239 = vunpack.c.l.b16 %v280
    %v2240 = vunpack.c.h.b16 %v280
    %v2241 = vunpack.c.l.b16 %v281
    %v2242 = vunpack.c.h.b16 %v281
    %v2243 = vunpack.c.l.b16 %v282
    %v2244 = vunpack.c.h.b16 %v282
    %v2245 = vunpack.c.l.b16 %v283
    %v2246 = vunpack.c.h.b16 %v283
    %v2247 = vunpack.c.l.b16 %v284
    %v2248 = vunpack.c.l.b16 %v285
    %v2249 = vunpack.c.h.b16 %v285
    %v2250 = vunpack.c.l.b16 %v286
    %v2251 = vunpack.c.h.b16 %v286
    %v2252 = vunpack.c.l.b16 %v287
    %v2253 = vunpack.c.h.b16 %v287
    %v2254 = vunpack.c.l.b16 %v288
    %v2255 = vunpack.c.h.b16 %v288
    %v2256 = vunpack.c.l.b16 %v289
    %v2257 = vunpack.c.h.b16 %v289
    %v2258 = vunpack.c.l.b16 %v290
    %v2259 = vunpack.c.h.b16 %v290
    %v2260 = vunpack.c.l.b16 %v291
    %v2261 = vunpack.c.l.b16 %v292
    %v2262 = vunpack.c.h.b16 %v292
    %v2263 = vunpack.c.l.b16 %v293
    %v2264 = vunpack.c.h.b16 %v293
    %v2265 = vunpack.c.l.b16 %v294
    %v2266 = vunpack.c.h.b16 %v294
    %v2267 = vunpack.c.l.b16 %v295
    %v2268 = vunpack.c.h.b16 %v295
    %v2269 = vunpack.c.l.b16 %v296
    %v2270 = vunpack.c.h.b16 %v296
    %v2271 = vunpack.c.l.b16 %v297
    %v2272 = vunpack.c.h.b16 %v297
    %v2273 = vunpack.c.l.b16 %v298
    %v2274 = vunpack.c.l.b16 %v299
    %v2275 = vunpack.c.h.b16 %v299
    %v2276 = vunpack.c.l.b16 %v300
    %v2277 = vunpack.c.h.b16 %v300
    %v2278 = vunpack.c.l.b16 %v301
    %v2279 = vunpack.c.h.b16 %v301
    %v2280 = vunpack.c.l.b16 %v302
    %v2281 = vunpack.c.h.b16 %v302
    %v2282 = vunpack.c.l.b16 %v303
    %v2283 = vunpack.c.h.b16 %v303
    %v2284 = vunpack.c.l.b16 %v304
    %v2285 = vunpack.c.h.b16 %v304
    %v2286 = vunpack.c.l.b16 %v305
    %v2287 = vunpack.c.l.b16 %v306
    %v2288 = vunpack.c.h.b16 %v306
    %v2289 = vunpack.c.l.b16 %v307
    %v2290 = vunpack.c.h.b16 %v307
    %v2291 = vunpack.c.l.b16 %v308
    %v2292 = vunpack.c.h.b16 %v308
    %v2293 = vunpack.c.l.b16 %v309
    %v2294 = vunpack.c.h.b16 %v309
    %v2295 = vunpack.c.l.b16 %v310
    %v2296 = vunpack.c.h.b16 %v310
    %v2297 = vunpack.c.l.b16 %v311
    %v2298 = vunpack.c.h.b16 %v311
    %v2299 = vunpack.c.l.b16 %v312
    %v2300 = vunpack.c.l.b16 %v313
    %v2301 = vunpack.c.h.b16 %v313
    %v2302 = vunpack.c.l.b16 %v314
    %v2303 = vunpack.c.h.b16 %v314
    %v2304 = vunpack.c.l.b16 %v315
    %v2305 = vunpack.c.h.b16 %v315
    %v2306 = vunpack.c.l.b16 %v316
    %v2307 = vunpack.c.h.b16 %v316
    %v2308 = vunpack.c.l.b16 %v317
    %v2309 = vunpack.c.h.b16 %v317
    %v2310 = vunpack.c.l.b16 %v318
    %v2311 = vunpack.c.h.b16 %v318
    %v2312 = vunpack.c.l.b16 %v319
    %v2313 = vunpack.c.l.b16 %v320
    %v2314 = vunpack.c.h.b16 %v320
    %v2315 = vunpack.c.l.b16 %v321
    %v2316 = vunpack.c.h.b16 %v321
    %v2317 = vunpack.c.l.b16 %v322
    %v2318 = vunpack.c.h.b16 %v322
    %v2319 = vunpack.c.l.b16 %v323
    %v2320 = vunpack.c.h.b16 %v323
    %v2321 = vunpack.c.l.b16 %v324
    %v2322 = vunpack.c.h.b16 %v324
    %v2323 = vunpack.c.l.b16 %v325
    %v2324 = vunpack.c.h.b16 %v325
    %v2325 = vunpack.c.l.b16 %v326
    %v2326 = vunpack.c.l.b16 %v327
    %v2327 = vunpack.c.h.b16 %v327
    %v2328 = vunpack.c.l.b16 %v328
    %v2329 = vunpack.c.h.b16 %v328
    %v2330 = vunpack.c.l.b16 %v329
    %v2331 = vunpack.c.h.b16 %v329
    %v2332 = vunpack.c.l.b16 %v330
    %v2333 = vunpack.c.h.b16 %v330
    %v2334 = vunpack.c.l.b16 %v331
    %v2335 = vunpack.c.h.b16 %v331
    %v2336 = vunpack.c.l.b16 %v332
    %v2337 = vunpack.c.h.b16 %v332
    %v2338 = vunpack.c.l.b16 %v333
    %v2339 = vunpack.c.l.b16 %v334
    %v2340 = vunpack.c.h.b16 %v334
    %v2341 = vunpack.c.l.b16 %v335
    %v2342 = vunpack.c.h.b16 %v335
    %v2343 = vunpack.c.l.b16 %v336
    %v2344 = vunpack.c.h.b16 %v336
    %v2345 = vunpack.c.l.b16 %v337
    %v2346 = vunpack.c.h.b16 %v337
    %v2347 = vunpack.c.l.b16 %v338
    %v2348 = vunpack.c.h.b16 %v338
    %v2349 = vunpack.c.l.b16 %v339
    %v2350 = vunpack.c.h.b16 %v339
    %v2351 = vunpack.c.l.b16 %v340
    %v2352 = vunpack.c.l.b16 %v341
    %v2353 = vunpack.c.h.b16 %v341
    %v2354 = vunpack.c.l.b16 %v342
    %v2355 = vunpack.c.h.b16 %v342
    %v2356 = vunpack.c.l.b16 %v343
    %v2357 = vunpack.c.h.b16 %v343
    %v2358 = vunpack.c.l.b16 %v344
    %v2359 = vunpack.c.h.b16 %v344
    %v2360 = vunpack.c.l.b16 %v345
    %v2361 = vunpack.c.h.b16 %v345
    %v2362 = vunpack.c.l.b16 %v346
    %v2363 = vunpack.c.h.b16 %v346
    %v2364 = vunpack.c.l.b16 %v347
    %v2365 = vunpack.c.l.b16 %v348
    %v2366 = vunpack.c.h.b16 %v348
    %v2367 = vunpack.c.l.b16 %v349
    %v2368 = vunpack.c.h.b16 %v349
    %v2369 = vunpack.c.l.b16 %v350
    %v2370 = vunpack.c.h.b16 %v350
    %v2371 = vunpack.c.l.b16 %v351
    %v2372 = vunpack.c.h.b16 %v351
    %v2373 = vunpack.c.l.b16 %v352
    %v2374 = vunpack.c.h.b16 %v352
    %v2375 = vunpack.c.l.b16 %v353
    %v2376 = vunpack.c.h.b16 %v353
    %v2377 = vunpack.c.l.b16 %v354
    %v2378 = vunpack.c.l.b16 %v355
    %v2379 = vunpack.c.h.b16 %v355
    %v2380 = vunpack.c.l.b16 %v356
    %v2381 = vunpack.c.h.b16 %v356
    %v2382 = vunpack.c.l.b16 %v357
    %v2383 = vunpack.c.h.b16 %v357
    %v2384 = vunpack.c.l.b16 %v358
    %v2385 = vunpack.c.h.b16 %v358
    %v2386 = vunpack.c.l.b16 %v359
    %v2387 = vunpack.c.h.b16 %v359
    %v2388 = vunpack.c.l.b16 %v360
    %v2389 = vunpack.c.h.b16 %v360
    %v2390 = vunpack.c.l.b16 %v361
    %v2391 = vunpack.c.l.b16 %v362
    %v2392 = vunpack.c.h.b16 %v362
    %v2393 = vunpack.c.l.b16 %v363
    %v2394 = vunpack.c.h.b16 %v363
    %v2395 = vunpack.c.l.b16 %v364
    %v2396 = vunpack.c.h.b16 %v364
    %v2397 = vunpack.c.l.b16 %v365
    %v2398 = vunpack.c.h.b16 %v365
    %v2399 = vunpack.c.l.b16 %v366
    %v2400 = vunpack.c.h.b16 %v366
    %v2401 = vunpack.c.l.b16 %v367
    %v2402 = vunpack.c.h.b16 %v367
    %v2403 = vunpack.c.l.b16 %v368
    %v2404 = vunpack.c.l.b16 %v369
    %v2405 = vunpack.c.h.b16 %v369
    %v2406 = vunpack.c.l.b16 %v370
    %v2407 = vunpack.c.h.b16 %v370
    %v2408 = vunpack.c.l.b16 %v371
    %v2409 = vunpack.c.h.b16 %v371
    %v2410 = vunpack.c.l.b16 %v372
    %v2411 = vunpack.c.h.b16 %v372
    %v2412 = vunpack.c.l.b16 %v373
    %v2413 = vunpack.c.h.b16 %v373
    %v2414 = vunpack.c.l.b16 %v374
    %v2415 = vunpack.c.h.b16 %v374
    %v2416 = vunpack.c.l.b16 %v375
    %v2417 = vunpack.c.l.b16 %v376
    %v2418 = vunpack.c.h.b16 %v376
    %v2419 = vunpack.c.l.b16 %v377
    %v2420 = vunpack.c.h.b16 %v377
    %v2421 = vunpack.c.l.b16 %v378
    %v2422 = vunpack.c.h.b16 %v378
    %v2423 = vunpack.c.l.b16 %v379
    %v2424 = vunpack.c.h.b16 %v379
    %v2425 = vunpack.c.l.b16 %v380
    %v2426 = vunpack.c.h.b16 %v380
    %v2427 = vunpack.c.l.b16 %v381
    %v2428 = vunpack.c.h.b16 %v381
    %v2429 = vunpack.c.l.b16 %v382
    %v2430 = vunpack.c.l.b16 %v383
    %v2431 = vunpack.c.h.b16 %v383
    %v2432 = vunpack.c.l.b16 %v384
    %v2433 = vunpack.c.h.b16 %v384
    %v2434 = vunpack.c.l.b16 %v385
    %v2435 = vunpack.c.h.b16 %v385
    %v2436 = vunpack.c.l.b16 %v386
    %v2437 = vunpack.c.h.b16 %v386
    %v2438 = vunpack.c.l.b16 %v387
    %v2439 = vunpack.c.h.b16 %v387
    %v2440 = vunpack.c.l.b16 %v388
    %v2441 = vunpack.c.h.b16 %v388
    %v2442 = vunpack.c.l.b16 %v389
    %v2443 = vunpack.c.l.b16 %v390
    %v2444 = vunpack.c.h.b16 %v390
    %v2445 = vunpack.c.l.b16 %v391
    %v2446 = vunpack.c.h.b16 %v391
    %v2447 = vunpack.c.l.b16 %v392
    %v2448 = vunpack.c.h.b16 %v392
    %v2449 = vunpack.c.l.b16 %v393
    %v2450 = vunpack.c.h.b16 %v393
    %v2451 = vunpack.c.l.b16 %v394
    %v2452 = vunpack.c.h.b16 %v394
    %v2453 = vunpack.c.l.b16 %v395
    %v2454 = vunpack.c.h.b16 %v395
    %v2455 = vunpack.c.l.b16 %v396
    %v2456 = vunpack.c.l.b16 %v397
    %v2457 = vunpack.c.h.b16 %v397
    %v2458 = vunpack.c.l.b16 %v398
    %v2459 = vunpack.c.h.b16 %v398
    %v2460 = vunpack.c.l.b16 %v399
    %v2461 = vunpack.c.h.b16 %v399
    %v2462 = vunpack.c.l.b16 %v400
    %v2463 = vunpack.c.h.b16 %v400
    %v2464 = vunpack.c.l.b16 %v401
    %v2465 = vunpack.c.h.b16 %v401
    %v2466 = vunpack.c.l.b16 %v402
    %v2467 = vunpack.c.h.b16 %v402
    %v2468 = vunpack.c.l.b16 %v403
    %v2469 = vunpack.c.l.b16 %v404
    %v2470 = vunpack.c.h.b16 %v404
    %v2471 = vunpack.c.l.b16 %v405
    %v2472 = vunpack.c.h.b16 %v405
    %v2473 = vunpack.c.l.b16 %v406
    %v2474 = vunpack.c.h.b16 %v406
    %v2475 = vunpack.c.l.b16 %v407
    %v2476 = vunpack.c.h.b16 %v407
    %v2477 = vunpack.c.l.b16 %v408
    %v2478 = vunpack.c.h.b16 %v408
    %v2479 = vunpack.c.l.b16 %v409
    %v2480 = vunpack.c.h.b16 %v409
    %v2481 = vunpack.c.l.b16 %v410
    %v2482 = vunpack.c.l.b16 %v411
    %v2483 = vunpack.c.h.b16 %v411
    %v2484 = vunpack.c.l.b16 %v412
    %v2485 = vunpack.c.h.b16 %v412
    %v2486 = vunpack.c.l.b16 %v413
    %v2487 = vunpack.c.h.b16 %v413
    %v2488 = vunpack.c.l.b16 %v414
    %v2489 = vunpack.c.h.b16 %v414
    %v2490 = vunpack.c.l.b16 %v415
    %v2491 = vunpack.c.h.b16 %v415
    %v2492 = vunpack.c.l.b16 %v416
    %v2493 = vunpack.c.h.b16 %v416
    %v2494 = vunpack.c.l.b16 %v417
    %v2495 = vunpack.c.l.b16 %v418
    %v2496 = vunpack.c.h.b16 %v418
    %v2497 = vunpack.c.l.b16 %v419
    %v2498 = vunpack.c.h.b16 %v419
    %v2499 = vunpack.c.l.b16 %v420
    %v2500 = vunpack.c.h.b16 %v420
    %v2501 = vunpack.c.l.b16 %v421
    %v2502 = vunpack.c.h.b16 %v421
    %v2503 = vunpack.c.l.b16 %v422
    %v2504 = vunpack.c.h.b16 %v422
    %v2505 = vunpack.c.l.b16 %v423
    %v2506 = vunpack.c.h.b16 %v423
    %v2507 = vunpack.c.l.b16 %v424
    %v2508 = vunpack.c.l.b16 %v425
    %v2509 = vunpack.c.h.b16 %v425
    %v2510 = vunpack.c.l.b16 %v426
    %v2511 = vunpack.c.h.b16 %v426
    %v2512 = vunpack.c.l.b16 %v427
    %v2513 = vunpack.c.h.b16 %v427
    %v2514 = vunpack.c.l.b16 %v428
    %v2515 = vunpack.c.h.b16 %v428
    %v2516 = vunpack.c.l.b16 %v429
    %v2517 = vunpack.c.h.b16 %v429
    %v2518 = vunpack.c.l.b16 %v430
    %v2519 = vunpack.c.h.b16 %v430
    %v2520 = vunpack.c.l.b16 %v431
    %v2521 = vunpack.c.l.b16 %v432
    %v2522 = vunpack.c.h.b16 %v432
    %v2523 = vunpack.c.l.b16 %v433
    %v2524 = vunpack.c.h.b16 %v433
    %v2525 = vunpack.c.l.b16 %v434
    %v2526 = vunpack.c.h.b16 %v434
    %v2527 = vunpack.c.l.b16 %v435
    %v2528 = vunpack.c.h.b16 %v435
    %v2529 = vunpack.c.l.b16 %v436
    %v2530 = vunpack.c.h.b16 %v436
    %v2531 = vunpack.c.l.b16 %v437
    %v2532 = vunpack.c.h.b16 %v437
    %v2533 = vunpack.c.l.b16 %v438
    %v2534 = vunpack.c.l.b16 %v439
    %v2535 = vunpack.c.h.b16 %v439
    %v2536 = vunpack.c.l.b16 %v440
    %v2537 = vunpack.c.h.b16 %v440
    %v2538 = vunpack.c.l.b16 %v441
    %v2539 = vunpack.c.h.b16 %v441
    %v2540 = vunpack.c.l.b16 %v442
    %v2541 = vunpack.c.h.b16 %v442
    %v2542 = vunpack.c.l.b16 %v443
    %v2543 = vunpack.c.h.b16 %v443
    %v2544 = vunpack.c.l.b16 %v444
    %v2545 = vunpack.c.h.b16 %v444
    %v2546 = vunpack.c.l.b16 %v445
    %v2547 = vunpack.c.l.b16 %v446
    %v2548 = vunpack.c.h.b16 %v446
    %v2549 = vunpack.c.l.b16 %v447
    %v2550 = vunpack.c.h.b16 %v447
    %v2551 = vunpack.c.l.b16 %v448
    %v2552 = vunpack.c.h.b16 %v448
    %v2553 = vunpack.c.l.b16 %v449
    %v2554 = vunpack.c.h.b16 %v449
    %v2555 = vunpack.c.l.b16 %v450
    %v2556 = vunpack.c.h.b16 %v450
    %v2557 = vunpack.c.l.b16 %v451
    %v2558 = vunpack.c.h.b16 %v451
    %v2559 = vunpack.c.l.b16 %v452
    %v2560 = vunpack.c.l.b16 %v453
    %v2561 = vunpack.c.h.b16 %v453
    %v2562 = vunpack.c.l.b16 %v454
    %v2563 = vunpack.c.h.b16 %v454
    %v2564 = vunpack.c.l.b16 %v455
    %v2565 = vunpack.c.h.b16 %v455
    %v2566 = vunpack.c.l.b16 %v456
    %v2567 = vunpack.c.h.b16 %v456
    %v2568 = vunpack.c.l.b16 %v457
    %v2569 = vunpack.c.h.b16 %v457
    %v2570 = vunpack.c.l.b16 %v458
    %v2571 = vunpack.c.h.b16 %v458
    %v2572 = vunpack.c.l.b16 %v459
    %v2573 = vunpack.c.l.b16 %v460
    %v2574 = vunpack.c.h.b16 %v460
    %v2575 = vunpack.c.l.b16 %v461
    %v2576 = vunpack.c.h.b16 %v461
    %v2577 = vunpack.c.l.b16 %v462
    %v2578 = vunpack.c.h.b16 %v462
    %v2579 = vunpack.c.l.b16 %v463
    %v2580 = vunpack.c.h.b16 %v463
    %v2581 = vunpack.c.l.b16 %v464
    %v2582 = vunpack.c.h.b16 %v464
    %v2583 = vunpack.c.l.b16 %v465
    %v2584 = vunpack.c.h.b16 %v465
    %v2585 = vunpack.c.l.b16 %v466
    %v2586 = vunpack.c.l.b16 %v467
    %v2587 = vunpack.c.h.b16 %v467
    %v2588 = vunpack.c.l.b16 %v468
    %v2589 = vunpack.c.h.b16 %v468
    %v2590 = vunpack.c.l.b16 %v469
    %v2591 = vunpack.c.h.b16 %v469
    %v2592 = vunpack.c.l.b16 %v470
    %v2593 = vunpack.c.h.b16 %v470
    %v2594 = vunpack.c.l.b16 %v471
    %v2595 = vunpack.c.h.b16 %v471
    %v2596 = vunpack.c.l.b16 %v472
    %v2597 = vunpack.c.h.b16 %v472
    %v2598 = vunpack.c.l.b16 %v473
    %v2599 = vunpack.c.l.b16 %v474
    %v2600 = vunpack.c.h.b16 %v474
    %v2601 = vunpack.c.l.b16 %v475
    %v2602 = vunpack.c.h.b16 %v475
    %v2603 = vunpack.c.l.b16 %v476
    %v2604 = vunpack.c.h.b16 %v476
    %v2605 = vunpack.c.l.b16 %v477
    %v2606 = vunpack.c.h.b16 %v477
    %v2607 = vunpack.c.l.b16 %v478
    %v2608 = vunpack.c.h.b16 %v478
    %v2609 = vunpack.c.l.b16 %v479
    %v2610 = vunpack.c.h.b16 %v479
    %v2611 = vunpack.c.l.b16 %v480
    %v2612 = vunpack.c.l.b16 %v481
    %v2613 = vunpack.c.h.b16 %v481
    %v2614 = vunpack.c.l.b16 %v482
    %v2615 = vunpack.c.h.b16 %v482
    %v2616 = vunpack.c.l.b16 %v483
    %v2617 = vunpack.c.h.b16 %v483
    %v2618 = vunpack.c.l.b16 %v484
    %v2619 = vunpack.c.h.b16 %v484
    %v2620 = vunpack.c.l.b16 %v485
    %v2621 = vunpack.c.h.b16 %v485
    %v2622 = vunpack.c.l.b16 %v486
    %v2623 = vunpack.c.h.b16 %v486
    %v2624 = vunpack.c.l.b16 %v487
    %v2625 = vunpack.c.l.b16 %v488
    %v2626 = vunpack.c.h.b16 %v488
    %v2627 = vunpack.c.l.b16 %v489
    %v2628 = vunpack.c.h.b16 %v489
    %v2629 = vunpack.c.l.b16 %v490
    %v2630 = vunpack.c.h.b16 %v490
    %v2631 = vunpack.c.l.b16 %v491
    %v2632 = vunpack.c.h.b16 %v491
    %v2633 = vunpack.c.l.b16 %v492
    %v2634 = vunpack.c.h.b16 %v492
    %v2635 = vunpack.c.l.b16 %v493
    %v2636 = vunpack.c.h.b16 %v493
    %v2637 = vunpack.c.l.b16 %v494
    %v2638 = vunpack.c.l.b16 %v495
    %v2639 = vunpack.c.h.b16 %v495
    %v2640 = vunpack.c.l.b16 %v496
    %v2641 = vunpack.c.h.b16 %v496
    %v2642 = vunpack.c.l.b16 %v497
    %v2643 = vunpack.c.h.b16 %v497
    %v2644 = vunpack.c.l.b16 %v498
    %v2645 = vunpack.c.h.b16 %v498
    %v2646 = vunpack.c.l.b16 %v499
    %v2647 = vunpack.c.h.b16 %v499
    %v2648 = vunpack.c.l.b16 %v500
    %v2649 = vunpack.c.h.b16 %v500
    %v2650 = vunpack.c.l.b16 %v501
    %v2651 = vunpack.c.l.b16 %v502
    %v2652 = vunpack.c.h.b16 %v502
    %v2653 = vunpack.c.l.b16 %v503
    %v2654 = vunpack.c.h.b16 %v503
    %v2655 = vunpack.c.l.b16 %v504
    %v2656 = vunpack.c.h.b16 %v504
    %v2657 = vunpack.c.l.b16 %v505
    %v2658 = vunpack.c.h.b16 %v505
    %v2659 = vunpack.c.l.b16 %v506
    %v2660 = vunpack.c.h.b16 %v506
    %v2661 = vunpack.c.l.b16 %v507
    %v2662 = vunpack.c.h.b16 %v507
    %v2663 = vunpack.c.l.b16 %v508
    %v2664 = vunpack.c.l.b16 %v509
    %v2665 = vunpack.c.h.b16 %v509
    %v2666 = vunpack.c.l.b16 %v510
    %v2667 = vunpack.c.h.b16 %v510
    %v2668 = vunpack.c.l.b16 %v511
    %v2669 = vunpack.c.h.b16 %v511
    %v2670 = vunpack.c.l.b16 %v512
    %v2671 = vunpack.c.h.b16 %v512
    %v2672 = vunpack.c.l.b16 %v513
    %v2673 = vunpack.c.h.b16 %v513
    %v2674 = vunpack.c.l.b16 %v514
    %v2675 = vunpack.c.h.b16 %v514
    %v2676 = vunpack.c.l.b16 %v515
    %v2677 = vunpack.c.l.b16 %v516
    %v2678 = vunpack.c.h.b16 %v516
    %v2679 = vunpack.c.l.b16 %v517
    %v2680 = vunpack.c.h.b16 %v517
    %v2681 = vunpack.c.l.b16 %v518
    %v2682 = vunpack.c.h.b16 %v518
    %v2683 = vunpack.c.l.b16 %v519
    %v2684 = vunpack.c.h.b16 %v519
    %v2685 = vunpack.c.l.b16 %v520
    %v2686 = vunpack.c.h.b16 %v520
    %v2687 = vunpack.c.l.b16 %v521
    %v2688 = vunpack.c.h.b16 %v521
    %v2689 = vunpack.c.l.b16 %v522
    %v2690 = vunpack.c.l.b16 %v523
    %v2691 = vunpack.c.h.b16 %v523
    %v2692 = vunpack.c.l.b16 %v524
    %v2693 = vunpack.c.h.b16 %v524
    %v2694 = vunpack.c.l.b16 %v525
    %v2695 = vunpack.c.h.b16 %v525
    %v2696 = vunpack.c.l.b16 %v526
    %v2697 = vunpack.c.h.b16 %v526
    %v2698 = vunpack.c.l.b16 %v527
    %v2699 = vunpack.c.h.b16 %v527
    %v2700 = vunpack.c.l.b16 %v528
    %v2701 = vunpack.c.h.b16 %v528
    %v2702 = vunpack.c.l.b16 %v529
    %v2703 = vunpack.c.l.b16 %v530
    %v2704 = vunpack.c.h.b16 %v530
    %v2705 = vunpack.c.l.b16 %v531
    %v2706 = vunpack.c.h.b16 %v531
    %v2707 = vunpack.c.l.b16 %v532
    %v2708 = vunpack.c.h.b16 %v532
    %v2709 = vunpack.c.l.b16 %v533
    %v2710 = vunpack.c.h.b16 %v533
    %v2711 = vunpack.c.l.b16 %v534
    %v2712 = vunpack.c.h.b16 %v534
    %v2713 = vunpack.c.l.b16 %v535
    %v2714 = vunpack.c.h.b16 %v535
    %v2715 = vunpack.c.l.b16 %v536
    %v2716 = vunpack.c.l.b16 %v537
    %v2717 = vunpack.c.h.b16 %v537
    %v2718 = vunpack.c.l.b16 %v538
    %v2719 = vunpack.c.h.b16 %v538
    %v2720 = vunpack.c.l.b16 %v539
    %v2721 = vunpack.c.h.b16 %v539
    %v2722 = vunpack.c.l.b16 %v540
    %v2723 = vunpack.c.h.b16 %v540
    %v2724 = vunpack.c.l.b16 %v541
    %v2725 = vunpack.c.h.b16 %v541
    %v2726 = vunpack.c.l.b16 %v542
    %v2727 = vunpack.c.h.b16 %v542
    %v2728 = vunpack.c.l.b16 %v543
    %v2729 = vunpack.c.l.b16 %v544
    %v2730 = vunpack.c.h.b16 %v544
    %v2731 = vunpack.c.l.b16 %v545
    %v2732 = vunpack.c.h.b16 %v545
    %v2733 = vunpack.c.l.b16 %v546
    %v2734 = vunpack.c.h.b16 %v546
    %v2735 = vunpack.c.l.b16 %v547
    %v2736 = vunpack.c.h.b16 %v547
    %v2737 = vunpack.c.l.b16 %v548
    %v2738 = vunpack.c.h.b16 %v548
    %v2739 = vunpack.c.l.b16 %v549
    %v2740 = vunpack.c.h.b16 %v549
    %v2741 = vunpack.c.l.b16 %v550
    %v2742 = vunpack.c.l.b16 %v551
    %v2743 = vunpack.c.h.b16 %v551
    %v2744 = vunpack.c.l.b16 %v552
    %v2745 = vunpack.c.h.b16 %v552
    %v2746 = vunpack.c.l.b16 %v553
    %v2747 = vunpack.c.h.b16 %v553
    %v2748 = vunpack.c.l.b16 %v554
    %v2749 = vunpack.c.h.b16 %v554
    %v2750 = vunpack.c.l.b16 %v555
    %v2751 = vunpack.c.h.b16 %v555
    %v2752 = vunpack.c.l.b16 %v556
    %v2753 = vunpack.c.h.b16 %v556
    %v2754 = vunpack.c.l.b16 %v557
    %v2755 = vunpack.c.l.b16 %v558
    %v2756 = vunpack.c.h.b16 %v558
    %v2757 = vunpack.c.l.b16 %v559
    %v2758 = vunpack.c.h.b16 %v559
    %v2759 = vunpack.c.l.b16 %v560
    %v2760 = vunpack.c.h.b16 %v560
    %v2761 = vunpack.c.l.b16 %v561
    %v2762 = vunpack.c.h.b16 %v561
    %v2763 = vunpack.c.l.b16 %v562
    %v2764 = vunpack.c.h.b16 %v562
    %v2765 = vunpack.c.l.b16 %v563
    %v2766 = vunpack.c.h.b16 %v563
    %v2767 = vunpack.c.l.b16 %v564
    %v2768 = vunpack.c.l.b16 %v565
    %v2769 = vunpack.c.h.b16 %v565
    %v2770 = vunpack.c.l.b16 %v566
    %v2771 = vunpack.c.h.b16 %v566
    %v2772 = vunpack.c.l.b16 %v567
    %v2773 = vunpack.c.h.b16 %v567
    %v2774 = vunpack.c.l.b16 %v568
    %v2775 = vunpack.c.h.b16 %v568
    %v2776 = vunpack.c.l.b16 %v569
    %v2777 = vunpack.c.h.b16 %v569
    %v2778 = vunpack.c.l.b16 %v570
    %v2779 = vunpack.c.h.b16 %v570
    %v2780 = vunpack.c.l.b16 %v571
    %v2781 = vunpack.c.l.b16 %v572
    %v2782 = vunpack.c.h.b16 %v572
    %v2783 = vunpack.c.l.b16 %v573
    %v2784 = vunpack.c.h.b16 %v573
    %v2785 = vunpack.c.l.b16 %v574
    %v2786 = vunpack.c.h.b16 %v574
    %v2787 = vunpack.c.l.b16 %v575
    %v2788 = vunpack.c.h.b16 %v575
    %v2789 = vunpack.c.l.b16 %v576
    %v2790 = vunpack.c.h.b16 %v576
    %v2791 = vunpack.c.l.b16 %v577
    %v2792 = vunpack.c.h.b16 %v577
    %v2793 = vunpack.c.l.b16 %v578
    %v2794 = vunpack.c.l.b16 %v579
    %v2795 = vunpack.c.h.b16 %v579
    %v2796 = vunpack.c.l.b16 %v580
    %v2797 = vunpack.c.h.b16 %v580
    %v2798 = vunpack.c.l.b16 %v581
    %v2799 = vunpack.c.h.b16 %v581
    %v2800 = vunpack.c.l.b16 %v582
    %v2801 = vunpack.c.h.b16 %v582
    %v2802 = vunpack.c.l.b16 %v583
    %v2803 = vunpack.c.h.b16 %v583
    %v2804 = vunpack.c.l.b16 %v584
    %v2805 = vunpack.c.h.b16 %v584
    %v2806 = vunpack.c.l.b16 %v585
    %v2807 = vunpack.c.l.b16 %v586
    %v2808 = vunpack.c.h.b16 %v586
    %v2809 = vunpack.c.l.b16 %v587
    %v2810 = vunpack.c.h.b16 %v587
    %v2811 = vunpack.c.l.b16 %v588
    %v2812 = vunpack.c.h.b16 %v588
    %v2813 = vunpack.c.l.b16 %v589
    %v2814 = vunpack.c.h.b16 %v589
    %v2815 = vunpack.c.l.b16 %v590
    %v2816 = vunpack.c.h.b16 %v590
    %v2817 = vunpack.c.l.b16 %v591
    %v2818 = vunpack.c.h.b16 %v591
    %v2819 = vunpack.c.l.b16 %v592
    %v2820 = vunpack.c.l.b16 %v593
    %v2821 = vunpack.c.h.b16 %v593
    %v2822 = vunpack.c.l.b16 %v594
    %v2823 = vunpack.c.h.b16 %v594
    %v2824 = vunpack.c.l.b16 %v595
    %v2825 = vunpack.c.h.b16 %v595
    %v2826 = vunpack.c.l.b16 %v596
    %v2827 = vunpack.c.h.b16 %v596
    %v2828 = vunpack.c.l.b16 %v597
    %v2829 = vunpack.c.h.b16 %v597
    %v2830 = vunpack.c.l.b16 %v598
    %v2831 = vunpack.c.h.b16 %v598
    %v2832 = vunpack.c.l.b16 %v599
    %v2833 = vunpack.c.l.b16 %v600
    %v2834 = vunpack.c.h.b16 %v600
    %v2835 = vunpack.c.l.b16 %v601
    %v2836 = vunpack.c.h.b16 %v601
    %v2837 = vunpack.c.l.b16 %v602
    %v2838 = vunpack.c.h.b16 %v602
    %v2839 = vunpack.c.l.b16 %v603
    %v2840 = vunpack.c.h.b16 %v603
    %v2841 = vunpack.c.l.b16 %v604
    %v2842 = vunpack.c.h.b16 %v604
    %v2843 = vunpack.c.l.b16 %v605
    %v2844 = vunpack.c.h.b16 %v605
    %v2845 = vunpack.c.l.b16 %v606
    %v2846 = vunpack.c.l.b16 %v607
    %v2847 = vunpack.c.h.b16 %v607
    %v2848 = vunpack.c.l.b16 %v608
    %v2849 = vunpack.c.h.b16 %v608
    %v2850 = vunpack.c.l.b16 %v609
    %v2851 = vunpack.c.h.b16 %v609
    %v2852 = vunpack.c.l.b16 %v610
    %v2853 = vunpack.c.h.b16 %v610
    %v2854 = vunpack.c.l.b16 %v611
    %v2855 = vunpack.c.h.b16 %v611
    %v2856 = vunpack.c.l.b16 %v612
    %v2857 = vunpack.c.h.b16 %v612
    %v2858 = vunpack.c.l.b16 %v613
    %v2859 = vunpack.c.l.b16 %v614
    %v2860 = vunpack.c.h.b16 %v614
    %v2861 = vunpack.c.l.b16 %v615
    %v2862 = vunpack.c.h.b16 %v615
    %v2863 = vunpack.c.l.b16 %v616
    %v2864 = vunpack.c.h.b16 %v616
    %v2865 = vunpack.c.l.b16 %v617
    %v2866 = vunpack.c.h.b16 %v617
    %v2867 = vunpack.c.l.b16 %v618
    %v2868 = vunpack.c.h.b16 %v618
    %v2869 = vunpack.c.l.b16 %v619
    %v2870 = vunpack.c.h.b16 %v619
    %v2871 = vunpack.c.l.b16 %v620
    %v2872 = vunpack.c.l.b16 %v621
    %v2873 = vunpack.c.h.b16 %v621
    %v2874 = vunpack.c.l.b16 %v622
    %v2875 = vunpack.c.h.b16 %v622
    %v2876 = vunpack.c.l.b16 %v623
    %v2877 = vunpack.c.h.b16 %v623
    %v2878 = vunpack.c.l.b16 %v624
    %v2879 = vunpack.c.h.b16 %v624
    %v2880 = vunpack.c.l.b16 %v625
    %v2881 = vunpack.c.h.b16 %v625
    %v2882 = vunpack.c.l.b16 %v626
    %v2883 = vunpack.c.h.b16 %v626
    %v2884 = vunpack.c.l.b16 %v627
    %v2885 = vunpack.c.l.b16 %v628
    %v2886 = vunpack.c.h.b16 %v628
    %v2887 = vunpack.c.l.b16 %v629
    %v2888 = vunpack.c.h.b16 %v629
    %v2889 = vunpack.c.l.b16 %v630
    %v2890 = vunpack.c.h.b16 %v630
    %v2891 = vunpack.c.l.b16 %v631
    %v2892 = vunpack.c.h.b16 %v631
    %v2893 = vunpack.c.l.b16 %v632
    %v2894 = vunpack.c.h.b16 %v632
    %v2895 = vunpack.c.l.b16 %v633
    %v2896 = vunpack.c.h.b16 %v633
    %v2897 = vunpack.c.l.b16 %v634
    %v2898 = vunpack.c.l.b16 %v635
    %v2899 = vunpack.c.h.b16 %v635
    %v2900 = vunpack.c.l.b16 %v636
    %v2901 = vunpack.c.h.b16 %v636
    %v2902 = vunpack.c.l.b16 %v637
    %v2903 = vunpack.c.h.b16 %v637
    %v2904 = vunpack.c.l.b16 %v638
    %v2905 = vunpack.c.h.b16 %v638
    %v2906 = vunpack.c.l.b16 %v639
    %v2907 = vunpack.c.h.b16 %v639
    %v2908 = vunpack.c.l.b16 %v640
    %v2909 = vunpack.c.h.b16 %v640
    %v2910 = vunpack.c.l.b16 %v641
    %v2911 = vunpack.c.l.b16 %v642
    %v2912 = vunpack.c.h.b16 %v642
    %v2913 = vunpack.c.l.b16 %v643
    %v2914 = vunpack.c.h.b16 %v643
    %v2915 = vunpack.c.l.b16 %v644
    %v2916 = vunpack.c.h.b16 %v644
    %v2917 = vunpack.c.l.b16 %v645
    %v2918 = vunpack.c.h.b16 %v645
    %v2919 = vunpack.c.l.b16 %v646
    %v2920 = vunpack.c.h.b16 %v646
    %v2921 = vunpack.c.l.b16 %v647
    %v2922 = vunpack.c.h.b16 %v647
    %v2923 = vunpack.c.l.b16 %v648
    %v2924 = vunpack.c.l.b16 %v649
    %v2925 = vunpack.c.h.b16 %v649
    %v2926 = vunpack.c.l.b16 %v650
    %v2927 = vunpack.c.h.b16 %v650
    %v2928 = vunpack.c.l.b16 %v651
    %v2929 = vunpack.c.h.b16 %v651
    %v2930 = vunpack.c.l.b16 %v652
    %v2931 = vunpack.c.h.b16 %v652
    %v2932 = vunpack.c.l.b16 %v653
    %v2933 = vunpack.c.h.b16 %v653
    %v2934 = vunpack.c.l.b16 %v654
    %v2935 = vunpack.c.h.b16 %v654
    %v2936 = vunpack.c.l.b16 %v655
    %v2937 = vunpack.c.l.b16 %v656
    %v2938 = vunpack.c.h.b16 %v656
    %v2939 = vunpack.c.l.b16 %v657
    %v2940 = vunpack.c.h.b16 %v657
    %v2941 = vunpack.c.l.b16 %v658
    %v2942 = vunpack.c.h.b16 %v658
    %v2943 = vunpack.c.l.b16 %v659
    %v2944 = vunpack.c.h.b16 %v659
    %v2945 = vunpack.c.l.b16 %v660
    %v2946 = vunpack.c.h.b16 %v660
    %v2947 = vunpack.c.l.b16 %v661
    %v2948 = vunpack.c.h.b16 %v661
    %v2949 = vunpack.c.l.b16 %v662
    %v2950 = vunpack.c.l.b16 %v663
    %v2951 = vunpack.c.h.b16 %v663
    %v2952 = vunpack.c.l.b16 %v664
    %v2953 = vunpack.c.h.b16 %v664
    %v2954 = vunpack.c.l.b16 %v665
    %v2955 = vunpack.c.h.b16 %v665
    %v2956 = vunpack.c.l.b16 %v666
    %v2957 = vunpack.c.h.b16 %v666
    %v2958 = vunpack.c.l.b16 %v667
    %v2959 = vunpack.c.h.b16 %v667
    %v2960 = vunpack.c.l.b16 %v668
    %v2961 = vunpack.c.h.b16 %v668
    %v2962 = vunpack.c.l.b16 %v669
    %v2963 = vunpack.c.l.b16 %v670
    %v2964 = vunpack.c.h.b16 %v670
    %v2965 = vunpack.c.l.b16 %v671
    %v2966 = vunpack.c.h.b16 %v671
    %v2967 = vunpack.c.l.b16 %v672
    %v2968 = vunpack.c.h.b16 %v672
    %v2969 = vunpack.c.l.b16 %v673
    %v2970 = vunpack.c.h.b16 %v673
    %v2971 = vunpack.c.l.b16 %v674
    %v2972 = vunpack.c.h.b16 %v674
    %v2973 = vunpack.c.l.b16 %v675
    %v2974 = vunpack.c.h.b16 %v675
    %v2975 = vunpack.c.l.b16 %v676
    %v2976 = vunpack.c.l.b16 %v677
    %v2977 = vunpack.c.h.b16 %v677
    %v2978 = vunpack.c.l.b16 %v678
    %v2979 = vunpack.c.h.b16 %v678
    %v2980 = vunpack.c.l.b16 %v679
    %v2981 = vunpack.c.h.b16 %v679
    %v2982 = vunpack.c.l.b16 %v680
    %v2983 = vunpack.c.h.b16 %v680
    %v2984 = vunpack.c.l.b16 %v681
    %v2985 = vunpack.c.h.b16 %v681
    %v2986 = vunpack.c.l.b16 %v682
    %v2987 = vunpack.c.h.b16 %v682
    %v2988 = vunpack.c.l.b16 %v683
    %v2989 = vunpack.c.l.b16 %v684
    %v2990 = vunpack.c.h.b16 %v684
    %v2991 = vunpack.c.l.b16 %v685
    %v2992 = vunpack.c.h.b16 %v685
    %v2993 = vunpack.c.l.b16 %v686
    %v2994 = vunpack.c.h.b16 %v686
    %v2995 = vunpack.c.l.b16 %v687
    %v2996 = vunpack.c.h.b16 %v687
    %v2997 = vunpack.c.l.b16 %v688
    %v2998 = vunpack.c.h.b16 %v688
    %v2999 = vunpack.c.l.b16 %v689
    %v3000 = vunpack.c.h.b16 %v689
    %v3001 = vunpack.c.l.b16 %v690
    %v3002 = vunpack.c.l.b16 %v691
    %v3003 = vunpack.c.h.b16 %v691
    %v3004 = vunpack.c.l.b16 %v692
    %v3005 = vunpack.c.h.b16 %v692
    %v3006 = vunpack.c.l.b16 %v693
    %v3007 = vunpack.c.h.b16 %v693
    %v3008 = vunpack.c.l.b16 %v694
    %v3009 = vunpack.c.h.b16 %v694
    %v3010 = vunpack.c.l.b16 %v695
    %v3011 = vunpack.c.h.b16 %v695
    %v3012 = vunpack.c.l.b16 %v696
    %v3013 = vunpack.c.h.b16 %v696
    %v3014 = vunpack.c.l.b16 %v697
    %v3015 = vunpack.c.l.b16 %v698
    %v3016 = vunpack.c.h.b16 %v698
    %v3017 = vunpack.c.l.b16 %v699
    %v3018 = vunpack.c.h.b16 %v699
    %v3019 = vunpack.c.l.b16 %v700
    %v3020 = vunpack.c.h.b16 %v700
    %v3021 = vunpack.c.l.b16 %v701
    %v3022 = vunpack.c.h.b16 %v701
    %v3023 = vunpack.c.l.b16 %v702
    %v3024 = vunpack.c.h.b16 %v702
    %v3025 = vunpack.c.l.b16 %v703
    %v3026 = vunpack.c.h.b16 %v703
    %v3027 = vunpack.c.l.b16 %v704
    %v3028 = vunpack.c.l.b16 %v705
    %v3029 = vunpack.c.h.b16 %v705
    %v3030 = vunpack.c.l.b16 %v706
    %v3031 = vunpack.c.h.b16 %v706
    %v3032 = vunpack.c.l.b16 %v707
    %v3033 = vunpack.c.h.b16 %v707
    %v3034 = vunpack.c.l.b16 %v708
    %v3035 = vunpack.c.h.b16 %v708
    %v3036 = vunpack.c.l.b16 %v709
    %v3037 = vunpack.c.h.b16 %v709
    %v3038 = vunpack.c.l.b16 %v710
    %v3039 = vunpack.c.h.b16 %v710
    %v3040 = vunpack.c.l.b16 %v711
    %v3041 = vunpack.c.l.b16 %v712
    %v3042 = vunpack.c.h.b16 %v712
    %v3043 = vunpack.c.l.b16 %v713
    %v3044 = vunpack.c.h.b16 %v713
    %v3045 = vunpack.c.l.b16 %v714
    %v3046 = vunpack.c.h.b16 %v714
    %v3047 = vunpack.c.l.b16 %v715
    %v3048 = vunpack.c.h.b16 %v715
    %v3049 = vunpack.c.l.b16 %v716
    %v3050 = vunpack.c.h.b16 %v716
    %v3051 = vunpack.c.l.b16 %v717
    %v3052 = vunpack.c.h.b16 %v717
    %v3053 = vunpack.c.l.b16 %v718
    %v3054 = vunpack.c.l.b16 %v719
    %v3055 = vunpack.c.h.b16 %v719
    %v3056 = vunpack.c.l.b16 %v720
    %v3057 = vunpack.c.h.b16 %v720
    %v3058 = vunpack.c.l.b16 %v721
    %v3059 = vunpack.c.h.b16 %v721
    %v3060 = vunpack.c.l.b16 %v722
    %v3061 = vunpack.c.h.b16 %v722
    %v3062 = vunpack.c.l.b16 %v723
    %v3063 = vunpack.c.h.b16 %v723
    %v3064 = vunpack.c.l.b16 %v724
    %v3065 = vunpack.c.h.b16 %v724
    %v3066 = vunpack.c.l.b16 %v725
    %v3067 = vunpack.c.l.b16 %v726
    %v3068 = vunpack.c.h.b16 %v726
    %v3069 = vunpack.c.l.b16 %v727
    %v3070 = vunpack.c.h.b16 %v727
    %v3071 = vunpack.c.l.b16 %v728
    %v3072 = vunpack.c.h.b16 %v728
    %v3073 = vunpack.c.l.b16 %v729
    %v3074 = vunpack.c.h.b16 %v729
    %v3075 = vunpack.c.l.b16 %v730
    %v3076 = vunpack.c.h.b16 %v730
    %v3077 = vunpack.c.l.b16 %v731
    %v3078 = vunpack.c.h.b16 %v731
    %v3079 = vunpack.c.l.b16 %v732
    %v3080 = vunpack.c.l.b16 %v733
    %v3081 = vunpack.c.h.b16 %v733
    %v3082 = vunpack.c.l.b16 %v734
    %v3083 = vunpack.c.h.b16 %v734
    %v3084 = vunpack.c.l.b16 %v735
    %v3085 = vunpack.c.h.b16 %v735
    %v3086 = vunpack.c.l.b16 %v736
    %v3087 = vunpack.c.h.b16 %v736
    %v3088 = vunpack.c.l.b16 %v737
    %v3089 = vunpack.c.h.b16 %v737
    %v3090 = vunpack.c.l.b16 %v738
    %v3091 = vunpack.c.h.b16 %v738
    %v3092 = vunpack.c.l.b16 %v739
    %v3093 = vunpack.c.l.b16 %v740
    %v3094 = vunpack.c.h.b16 %v740
    %v3095 = vunpack.c.l.b16 %v741
    %v3096 = vunpack.c.h.b16 %v741
    %v3097 = vunpack.c.l.b16 %v742
    %v3098 = vunpack.c.h.b16 %v742
    %v3099 = vunpack.c.l.b16 %v743
    %v3100 = vunpack.c.h.b16 %v743
    %v3101 = vunpack.c.l.b16 %v744
    %v3102 = vunpack.c.h.b16 %v744
    %v3103 = vunpack.c.l.b16 %v745
    %v3104 = vunpack.c.h.b16 %v745
    %v3105 = vunpack.c.l.b16 %v746
    %v3106 = vunpack.c.l.b16 %v747
    %v3107 = vunpack.c.h.b16 %v747
    %v3108 = vunpack.c.l.b16 %v748
    %v3109 = vunpack.c.h.b16 %v748
    %v3110 = vunpack.c.l.b16 %v749
    %v3111 = vunpack.c.h.b16 %v749
    %v3112 = vunpack.c.l.b16 %v750
    %v3113 = vunpack.c.h.b16 %v750
    %v3114 = vunpack.c.l.b16 %v751
    %v3115 = vunpack.c.h.b16 %v751
    %v3116 = vunpack.c.l.b16 %v752
    %v3117 = vunpack.c.h.b16 %v752
    %v3118 = vunpack.c.l.b16 %v753
    %v3119 = vunpack.c.l.b16 %v754
    %v3120 = vunpack.c.h.b16 %v754
    %v3121 = vunpack.c.l.b16 %v755
    %v3122 = vunpack.c.h.b16 %v755
    %v3123 = vunpack.c.l.b16 %v756
    %v3124 = vunpack.c.h.b16 %v756
    %v3125 = vunpack.c.l.b16 %v757
    %v3126 = vunpack.c.h.b16 %v757
    %v3127 = vunpack.c.l.b16 %v758
    %v3128 = vunpack.c.h.b16 %v758
    %v3129 = vunpack.c.l.b16 %v759
    %v3130 = vunpack.c.h.b16 %v759
    %v3131 = vunpack.c.l.b16 %v760
    %v3132 = vunpack.c.l.b16 %v761
    %v3133 = vunpack.c.h.b16 %v761
    %v3134 = vunpack.c.l.b16 %v762
    %v3135 = vunpack.c.h.b16 %v762
    %v3136 = vunpack.c.l.b16 %v763
    %v3137 = vunpack.c.h.b16 %v763
    %v3138 = vunpack.c.l.b16 %v764
    %v3139 = vunpack.c.h.b16 %v764
    %v3140 = vunpack.c.l.b16 %v765
    %v3141 = vunpack.c.h.b16 %v765
    %v3142 = vunpack.c.l.b16 %v766
    %v3143 = vunpack.c.h.b16 %v766
    %v3144 = vunpack.c.l.b16 %v767
    %v3145 = vunpack.c.l.b16 %v768
    %v3146 = vunpack.c.h.b16 %v768
    %v3147 = vunpack.c.l.b16 %v769
    %v3148 = vunpack.c.h.b16 %v769
    %v3149 = vunpack.c.l.b16 %v770
    %v3150 = vunpack.c.h.b16 %v770
    %v3151 = vunpack.c.l.b16 %v771
    %v3152 = vunpack.c.h.b16 %v771
    %v3153 = vunpack.c.l.b16 %v772
    %v3154 = vunpack.c.h.b16 %v772
    %v3155 = vunpack.c.l.b16 %v773
    %v3156 = vunpack.c.h.b16 %v773
    %v3157 = vunpack.c.l.b16 %v774
    %v3158 = vunpack.c.l.b16 %v775
    %v3159 = vunpack.c.h.b16 %v775
    %v3160 = vunpack.c.l.b16 %v776
    %v3161 = vunpack.c.h.b16 %v776
    %v3162 = vunpack.c.l.b16 %v777
    %v3163 = vunpack.c.h.b16 %v777
    %v3164 = vunpack.c.l.b16 %v778
    %v3165 = vunpack.c.h.b16 %v778
    %v3166 = vunpack.c.l.b16 %v779
    %v3167 = vunpack.c.h.b16 %v779
    %v3168 = vunpack.c.l.b16 %v780
    %v3169 = vunpack.c.h.b16 %v780
    %v3170 = vunpack.c.l.b16 %v781
    %v3171 = vunpack.c.l.b16 %v782
    %v3172 = vunpack.c.h.b16 %v782
    %v3173 = vunpack.c.l.b16 %v783
    %v3174 = vunpack.c.h.b16 %v783
    %v3175 = vunpack.c.l.b16 %v784
    %v3176 = vunpack.c.h.b16 %v784
    %v3177 = vunpack.c.l.b16 %v785
    %v3178 = vunpack.c.h.b16 %v785
    %v3179 = vunpack.c.l.b16 %v786
    %v3180 = vunpack.c.h.b16 %v786
    %v3181 = vunpack.c.l.b16 %v787
    %v3182 = vunpack.c.h.b16 %v787
    %v3183 = vunpack.c.l.b16 %v788
    %v3184 = vunpack.c.l.b16 %v789
    %v3185 = vunpack.c.h.b16 %v789
    %v3186 = vunpack.c.l.b16 %v790
    %v3187 = vunpack.c.h.b16 %v790
    %v3188 = vunpack.c.l.b16 %v791
    %v3189 = vunpack.c.h.b16 %v791
    %v3190 = vunpack.c.l.b16 %v792
    %v3191 = vunpack.c.h.b16 %v792
    %v3192 = vunpack.c.l.b16 %v793
    %v3193 = vunpack.c.h.b16 %v793
    %v3194 = vunpack.c.l.b16 %v794
    %v3195 = vunpack.c.h.b16 %v794
    %v3196 = vunpack.c.l.b16 %v795
    %v3197 = vunpack.c.l.b16 %v796
    %v3198 = vunpack.c.h.b16 %v796
    %v3199 = vunpack.c.l.b16 %v797
    %v3200 = vunpack.c.h.b16 %v797
    %v3201 = vunpack.c.l.b16 %v798
    %v3202 = vunpack.c.h.b16 %v798
    %v3203 = vunpack.c.l.b16 %v799
    %v3204 = vunpack.c.h.b16 %v799
    %v3205 = vunpack.c.l.b16 %v800
    %v3206 = vunpack.c.h.b16 %v800
    %v3207 = vunpack.c.l.b16 %v801
    %v3208 = vunpack.c.h.b16 %v801
    %v3209 = vunpack.c.l.b16 %v802
    %v3210 = vunpack.c.l.b16 %v803
    %v3211 = vunpack.c.h.b16 %v803
    %v3212 = vunpack.c.l.b16 %v804
    %v3213 = vunpack.c.h.b16 %v804
    %v3214 = vunpack.c.l.b16 %v805
    %v3215 = vunpack.c.h.b16 %v805
    %v3216 = vunpack.c.l.b16 %v806
    %v3217 = vunpack.c.h.b16 %v806
    %v3218 = vunpack.c.l.b16 %v807
    %v3219 = vunpack.c.h.b16 %v807
    %v3220 = vunpack.c.l.b16 %v808
    %v3221 = vunpack.c.h.b16 %v808
    %v3222 = vunpack.c.l.b16 %v809
    %v3223 = vunpack.c.l.b16 %v810
    %v3224 = vunpack.c.h.b16 %v810
    %v3225 = vunpack.c.l.b16 %v811
    %v3226 = vunpack.c.h.b16 %v811
    %v3227 = vunpack.c.l.b16 %v812
    %v3228 = vunpack.c.h.b16 %v812
    %v3229 = vunpack.c.l.b16 %v813
    %v3230 = vunpack.c.h.b16 %v813
    %v3231 = vunpack.c.l.b16 %v814
    %v3232 = vunpack.c.h.b16 %v814
    %v3233 = vunpack.c.l.b16 %v815
    %v3234 = vunpack.c.h.b16 %v815
    %v3235 = vunpack.c.l.b16 %v816
    %v3236 = vunpack.c.l.b16 %v817
    %v3237 = vunpack.c.h.b16 %v817
    %v3238 = vunpack.c.l.b16 %v818
    %v3239 = vunpack.c.h.b16 %v818
    %v3240 = vunpack.c.l.b16 %v819
    %v3241 = vunpack.c.h.b16 %v819
    %v3242 = vunpack.c.l.b16 %v820
    %v3243 = vunpack.c.h.b16 %v820
    %v3244 = vunpack.c.l.b16 %v821
    %v3245 = vunpack.c.h.b16 %v821
    %v3246 = vunpack.c.l.b16 %v822
    %v3247 = vunpack.c.h.b16 %v822
    %v3248 = vunpack.c.l.b16 %v823
    %v3249 = vunpack.c.l.b16 %v824
    %v3250 = vunpack.c.h.b16 %v824
    %v3251 = vunpack.c.l.b16 %v825
    %v3252 = vunpack.c.h.b16 %v825
    %v3253 = vunpack.c.l.b16 %v826
    %v3254 = vunpack.c.h.b16 %v826
    %v3255 = vunpack.c.l.b16 %v827
    %v3256 = vunpack.c.h.b16 %v827
    %v3257 = vunpack.c.l.b16 %v828
    %v3258 = vunpack.c.h.b16 %v828
    %v3259 = vunpack.c.l.b16 %v829
    %v3260 = vunpack.c.h.b16 %v829
    %v3261 = vunpack.c.l.b16 %v830
    %v3262 = vunpack.c.l.b16 %v831
    %v3263 = vunpack.c.h.b16 %v831
    %v3264 = vunpack.c.l.b16 %v832
    %v3265 = vunpack.c.h.b16 %v832
    %v3266 = vunpack.c.l.b16 %v833
    %v3267 = vunpack.c.h.b16 %v833
    %v3268 = vunpack.c.l.b16 %v834
    %v3269 = vunpack.c.h.b16 %v834
    %v3270 = vunpack.c.l.b16 %v835
    %v3271 = vunpack.c.h.b16 %v835
    %v3272 = vunpack.c.l.b16 %v836
    %v3273 = vunpack.c.h.b16 %v836
    %v3274 = vunpack.c.l.b16 %v837
    %v3275 = vunpack.c.l.b16 %v838
    %v3276 = vunpack.c.h.b16 %v838
    %v3277 = vunpack.c.l.b16 %v839
    %v3278 = vunpack.c.h.b16 %v839
    %v3279 = vunpack.c.l.b16 %v840
    %v3280 = vunpack.c.h.b16 %v840
    %v3281 = vunpack.c.l.b16 %v841
    %v3282 = vunpack.c.h.b16 %v841
    %v3283 = vunpack.c.l.b16 %v842
    %v3284 = vunpack.c.h.b16 %v842
    %v3285 = vunpack.c.l.b16 %v843
    %v3286 = vunpack.c.h.b16 %v843
    %v3287 = vunpack.c.l.b16 %v844
    %v3288 = vunpack.c.l.b16 %v845
    %v3289 = vunpack.c.h.b16 %v845
    %v3290 = vunpack.c.l.b16 %v846
    %v3291 = vunpack.c.h.b16 %v846
    %v3292 = vunpack.c.l.b16 %v847
    %v3293 = vunpack.c.h.b16 %v847
    %v3294 = vunpack.c.l.b16 %v848
    %v3295 = vunpack.c.h.b16 %v848
    %v3296 = vunpack.c.l.b16 %v849
    %v3297 = vunpack.c.h.b16 %v849
    %v3298 = vunpack.c.l.b16 %v850
    %v3299 = vunpack.c.h.b16 %v850
    %v3300 = vunpack.c.l.b16 %v851
    %v3301 = vunpack.c.l.b16 %v852
    %v3302 = vunpack.c.h.b16 %v852
    %v3303 = vunpack.c.l.b16 %v853
    %v3304 = vunpack.c.h.b16 %v853
    %v3305 = vunpack.c.l.b16 %v854
    %v3306 = vunpack.c.h.b16 %v854
    %v3307 = vunpack.c.l.b16 %v855
    %v3308 = vunpack.c.h.b16 %v855
    %v3309 = vunpack.c.l.b16 %v856
    %v3310 = vunpack.c.h.b16 %v856
    %v3311 = vunpack.c.l.b16 %v857
    %v3312 = vunpack.c.h.b16 %v857
    %v3313 = vunpack.c.l.b16 %v858
    %v3314 = vunpack.c.l.b16 %v859
    %v3315 = vunpack.c.h.b16 %v859
    %v3316 = vunpack.c.l.b16 %v860
    %v3317 = vunpack.c.h.b16 %v860
    %v3318 = vunpack.c.l.b16 %v861
    %v3319 = vunpack.c.h.b16 %v861
    %v3320 = vunpack.c.l.b16 %v862
    %v3321 = vunpack.c.h.b16 %v862
    %v3322 = vunpack.c.l.b16 %v863
    %v3323 = vunpack.c.h.b16 %v863
    %v3324 = vunpack.c.l.b16 %v864
    %v3325 = vunpack.c.h.b16 %v864
    %v3326 = vunpack.c.l.b16 %v865
    %v3327 = vunpack.c.l.b16 %v866
    %v3328 = vunpack.c.h.b16 %v866
    %v3329 = vunpack.c.l.b16 %v867
    %v3330 = vunpack.c.h.b16 %v867
    %v3331 = vunpack.c.l.b16 %v868
    %v3332 = vunpack.c.h.b16 %v868
    %v3333 = vunpack.c.l.b16 %v869
    %v3334 = vunpack.c.h.b16 %v869
    %v3335 = vunpack.c.l.b16 %v870
    %v3336 = vunpack.c.h.b16 %v870
    %v3337 = vunpack.c.l.b16 %v871
    %v3338 = vunpack.c.h.b16 %v871
    %v3339 = vunpack.c.l.b16 %v872
    %v3340 = vunpack.c.l.b16 %v873
    %v3341 = vunpack.c.h.b16 %v873
    %v3342 = vunpack.c.l.b16 %v874
    %v3343 = vunpack.c.h.b16 %v874
    %v3344 = vunpack.c.l.b16 %v875
    %v3345 = vunpack.c.h.b16 %v875
    %v3346 = vunpack.c.l.b16 %v876
    %v3347 = vunpack.c.h.b16 %v876
    %v3348 = vunpack.c.l.b16 %v877
    %v3349 = vunpack.c.h.b16 %v877
    %v3350 = vunpack.c.l.b16 %v878
    %v3351 = vunpack.c.h.b16 %v878
    %v3352 = vunpack.c.l.b16 %v879
    %v3353 = vunpack.c.l.b16 %v880
    %v3354 = vunpack.c.h.b16 %v880
    %v3355 = vunpack.c.l.b16 %v881
    %v3356 = vunpack.c.h.b16 %v881
    %v3357 = vunpack.c.l.b16 %v882
    %v3358 = vunpack.c.h.b16 %v882
    %v3359 = vunpack.c.l.b16 %v883
    %v3360 = vunpack.c.h.b16 %v883
    %v3361 = vunpack.c.l.b16 %v884
    %v3362 = vunpack.c.h.b16 %v884
    %v3363 = vunpack.c.l.b16 %v885
    %v3364 = vunpack.c.h.b16 %v885
    %v3365 = vunpack.c.l.b16 %v886
    %v3366 = vunpack.c.l.b16 %v887
    %v3367 = vunpack.c.h.b16 %v887
    %v3368 = vunpack.c.l.b16 %v888
    %v3369 = vunpack.c.h.b16 %v888
    %v3370 = vunpack.c.l.b16 %v889
    %v3371 = vunpack.c.h.b16 %v889
    %v3372 = vunpack.c.l.b16 %v890
    %v3373 = vunpack.c.h.b16 %v890
    %v3374 = vunpack.c.l.b16 %v891
    %v3375 = vunpack.c.h.b16 %v891
    %v3376 = vunpack.c.l.b16 %v892
    %v3377 = vunpack.c.h.b16 %v892
    %v3378 = vunpack.c.l.b16 %v893
    %v3379 = vunpack.c.l.b16 %v894
    %v3380 = vunpack.c.h.b16 %v894
    %v3381 = vunpack.c.l.b16 %v895
    %v3382 = vunpack.c.h.b16 %v895
    %v3383 = vunpack.c.l.b16 %v896
    %v3384 = vunpack.c.h.b16 %v896
    %v3385 = vunpack.c.l.b16 %v897
    %v3386 = vunpack.c.h.b16 %v897
    %v3387 = vunpack.c.l.b16 %v898
    %v3388 = vunpack.c.h.b16 %v898
    %v3389 = vunpack.c.l.b16 %v899
    %v3390 = vunpack.c.h.b16 %v899
    %v3391 = vunpack.c.l.b16 %v900
    %v3392 = vunpack.c.l.b16 %v901
    %v3393 = vunpack.c.h.b16 %v901
    %v3394 = vunpack.c.l.b16 %v902
    %v3395 = vunpack.c.h.b16 %v902
    %v3396 = vunpack.c.l.b16 %v903
    %v3397 = vunpack.c.h.b16 %v903
    %v3398 = vunpack.c.l.b16 %v904
    %v3399 = vunpack.c.h.b16 %v904
    %v3400 = vunpack.c.l.b16 %v905
    %v3401 = vunpack.c.h.b16 %v905
    %v3402 = vunpack.c.l.b16 %v906
    %v3403 = vunpack.c.h.b16 %v906
    %v3404 = vunpack.c.l.b16 %v907
    %v3405 = vunpack.c.l.b16 %v908
    %v3406 = vunpack.c.h.b16 %v908
    %v3407 = vunpack.c.l.b16 %v909
    %v3408 = vunpack.c.h.b16 %v909
    %v3409 = vunpack.c.l.b16 %v910
    %v3410 = vunpack.c.h.b16 %v910
    %v3411 = vunpack.c.l.b16 %v911
    %v3412 = vunpack.c.h.b16 %v911
    %v3413 = vunpack.c.l.b16 %v912
    %v3414 = vunpack.c.h.b16 %v912
    %v3415 = vunpack.c.l.b16 %v913
    %v3416 = vunpack.c.h.b16 %v913
    %v3417 = vunpack.c.l.b16 %v914
    %v3418 = vunpack.c.l.b16 %v915
    %v3419 = vunpack.c.h.b16 %v915
    %v3420 = vunpack.c.l.b16 %v916
    %v3421 = vunpack.c.h.b16 %v916
    %v3422 = vunpack.c.l.b16 %v917
    %v3423 = vunpack.c.h.b16 %v917
    %v3424 = vunpack.c.l.b16 %v918
    %v3425 = vunpack.c.h.b16 %v918
    %v3426 = vunpack.c.l.b16 %v919
    %v3427 = vunpack.c.h.b16 %v919
    %v3428 = vunpack.c.l.b16 %v920
    %v3429 = vunpack.c.h.b16 %v920
    %v3430 = vunpack.c.l.b16 %v921
    %v3431 = vunpack.c.l.b16 %v922
    %v3432 = vunpack.c.h.b16 %v922
    %v3433 = vunpack.c.l.b16 %v923
    %v3434 = vunpack.c.h.b16 %v923
    %v3435 = vunpack.c.l.b16 %v924
    %v3436 = vunpack.c.h.b16 %v924
    %v3437 = vunpack.c.l.b16 %v925
    %v3438 = vunpack.c.h.b16 %v925
    %v3439 = vunpack.c.l.b16 %v926
    %v3440 = vunpack.c.h.b16 %v926
    %v3441 = vunpack.c.l.b16 %v927
    %v3442 = vunpack.c.h.b16 %v927
    %v3443 = vunpack.c.l.b16 %v928
    %v3444 = vunpack.c.l.b16 %v929
    %v3445 = vunpack.c.h.b16 %v929
    %v3446 = vunpack.c.l.b16 %v930
    %v3447 = vunpack.c.h.b16 %v930
    %v3448 = vunpack.c.l.b16 %v931
    %v3449 = vunpack.c.h.b16 %v931
    %v3450 = vunpack.c.l.b16 %v932
    %v3451 = vunpack.c.h.b16 %v932
    %v3452 = vunpack.c.l.b16 %v933
    %v3453 = vunpack.c.h.b16 %v933
    %v3454 = vunpack.c.l.b16 %v934
    %v3455 = vunpack.c.h.b16 %v934
    %v3456 = vunpack.c.l.b16 %v935
    %v3457 = vunpack.c.l.b16 %v936
    %v3458 = vunpack.c.h.b16 %v936
    %v3459 = vunpack.c.l.b16 %v937
    %v3460 = vunpack.c.h.b16 %v937
    %v3461 = vunpack.c.l.b16 %v938
    %v3462 = vunpack.c.h.b16 %v938
    %v3463 = vunpack.c.l.b16 %v939
    %v3464 = vunpack.c.h.b16 %v939
    %v3465 = vunpack.c.l.b16 %v940
    %v3466 = vunpack.c.h.b16 %v940
    %v3467 = vunpack.c.l.b16 %v941
    %v3468 = vunpack.c.h.b16 %v941
    %v3469 = vunpack.c.l.b16 %v942
    %v3470 = vunpack.c.l.b16 %v943
    %v3471 = vunpack.c.h.b16 %v943
    %v3472 = vunpack.c.l.b16 %v944
    %v3473 = vunpack.c.h.b16 %v944
    %v3474 = vunpack.c.l.b16 %v945
    %v3475 = vunpack.c.h.b16 %v945
    %v3476 = vunpack.c.l.b16 %v946
    %v3477 = vunpack.c.h.b16 %v946
    %v3478 = vunpack.c.l.b16 %v947
    %v3479 = vunpack.c.h.b16 %v947
    %v3480 = vunpack.c.l.b16 %v948
    %v3481 = vunpack.c.h.b16 %v948
    %v3482 = vunpack.c.l.b16 %v949
    %v3483 = vunpack.c.l.b16 %v950
    %v3484 = vunpack.c.h.b16 %v950
    %v3485 = vunpack.c.l.b16 %v951
    %v3486 = vunpack.c.h.b16 %v951
    %v3487 = vunpack.c.l.b16 %v952
    %v3488 = vunpack.c.h.b16 %v952
    %v3489 = vunpack.c.l.b16 %v953
    %v3490 = vunpack.c.h.b16 %v953
    %v3491 = vunpack.c.l.b16 %v954
    %v3492 = vunpack.c.h.b16 %v954
    %v3493 = vunpack.c.l.b16 %v955
    %v3494 = vunpack.c.h.b16 %v955
    %v3495 = vunpack.c.l.b16 %v956
    %v3496 = vunpack.c.l.b16 %v957
    %v3497 = vunpack.c.h.b16 %v957
    %v3498 = vunpack.c.l.b16 %v958
    %v3499 = vunpack.c.h.b16 %v958
    %v3500 = vunpack.c.l.b16 %v959
    %v3501 = vunpack.c.h.b16 %v959
    %v3502 = vunpack.c.l.b16 %v960
    %v3503 = vunpack.c.h.b16 %v960
    %v3504 = vunpack.c.l.b16 %v961
    %v3505 = vunpack.c.h.b16 %v961
    %v3506 = vunpack.c.l.b16 %v962
    %v3507 = vunpack.c.h.b16 %v962
    %v3508 = vunpack.c.l.b16 %v963
    %v3509 = vunpack.c.l.b16 %v964
    %v3510 = vunpack.c.h.b16 %v964
    %v3511 = vunpack.c.l.b16 %v965
    %v3512 = vunpack.c.h.b16 %v965
    %v3513 = vunpack.c.l.b16 %v966
    %v3514 = vunpack.c.h.b16 %v966
    %v3515 = vunpack.c.l.b16 %v967
    %v3516 = vunpack.c.h.b16 %v967
    %v3517 = vunpack.c.l.b16 %v968
    %v3518 = vunpack.c.h.b16 %v968
    %v3519 = vunpack.c.l.b16 %v969
    %v3520 = vunpack.c.h.b16 %v969
    %v3521 = vunpack.c.l.b16 %v970
    %v3522 = vunpack.c.l.b16 %v971
    %v3523 = vunpack.c.h.b16 %v971
    %v3524 = vunpack.c.l.b16 %v972
    %v3525 = vunpack.c.h.b16 %v972
    %v3526 = vunpack.c.l.b16 %v973
    %v3527 = vunpack.c.h.b16 %v973
    %v3528 = vunpack.c.l.b16 %v974
    %v3529 = vunpack.c.h.b16 %v974
    %v3530 = vunpack.c.l.b16 %v975
    %v3531 = vunpack.c.h.b16 %v975
    %v3532 = vunpack.c.l.b16 %v976
    %v3533 = vunpack.c.h.b16 %v976
    %v3534 = vunpack.c.l.b16 %v977
    %v3535 = vunpack.c.l.b16 %v978
    %v3536 = vunpack.c.h.b16 %v978
    %v3537 = vunpack.c.l.b16 %v979
    %v3538 = vunpack.c.h.b16 %v979
    %v3539 = vunpack.c.l.b16 %v980
    %v3540 = vunpack.c.h.b16 %v980
    %v3541 = vunpack.c.l.b16 %v981
    %v3542 = vunpack.c.h.b16 %v981
    %v3543 = vunpack.c.l.b16 %v982
    %v3544 = vunpack.c.h.b16 %v982
    %v3545 = vunpack.c.l.b16 %v983
    %v3546 = vunpack.c.h.b16 %v983
    %v3547 = vunpack.c.l.b16 %v984
    %v3548 = vunpack.c.l.b16 %v985
    %v3549 = vunpack.c.h.b16 %v985
    %v3550 = vunpack.c.l.b16 %v986
    %v3551 = vunpack.c.h.b16 %v986
    %v3552 = vunpack.c.l.b16 %v987
    %v3553 = vunpack.c.h.b16 %v987
    %v3554 = vunpack.c.l.b16 %v988
    %v3555 = vunpack.c.h.b16 %v988
    %v3556 = vunpack.c.l.b16 %v989
    %v3557 = vunpack.c.h.b16 %v989
    %v3558 = vunpack.c.l.b16 %v990
    %v3559 = vunpack.c.h.b16 %v990
    %v3560 = vunpack.c.l.b16 %v991
    %v3561 = vunpack.c.l.b16 %v992
    %v3562 = vunpack.c.h.b16 %v992
    %v3563 = vunpack.c.l.b16 %v993
    %v3564 = vunpack.c.h.b16 %v993
    %v3565 = vunpack.c.l.b16 %v994
    %v3566 = vunpack.c.h.b16 %v994
    %v3567 = vunpack.c.l.b16 %v995
    %v3568 = vunpack.c.h.b16 %v995
    %v3569 = vunpack.c.l.b16 %v996
    %v3570 = vunpack.c.h.b16 %v996
    %v3571 = vunpack.c.l.b16 %v997
    %v3572 = vunpack.c.h.b16 %v997
    %v3573 = vunpack.c.l.b16 %v998
    %v3574 = vunpack.c.l.b16 %v999
    %v3575 = vunpack.c.h.b16 %v999
    %v3576 = vunpack.c.l.b16 %v1000
    %v3577 = vunpack.c.h.b16 %v1000
    %v3578 = vunpack.c.l.b16 %v1001
    %v3579 = vunpack.c.h.b16 %v1001
    %v3580 = vunpack.c.l.b16 %v1002
    %v3581 = vunpack.c.h.b16 %v1002
    %v3582 = vunpack.c.l.b16 %v1003
    %v3583 = vunpack.c.h.b16 %v1003
    %v3584 = vunpack.c.l.b16 %v1004
    %v3585 = vunpack.c.h.b16 %v1004
    %v3586 = vunpack.c.l.b16 %v1005
    %v3587 = vunpack.c.l.b16 %v1006
    %v3588 = vunpack.c.h.b16 %v1006
    %v3589 = vunpack.c.l.b16 %v1007
    %v3590 = vunpack.c.h.b16 %v1007
    %v3591 = vunpack.c.l.b16 %v1008
    %v3592 = vunpack.c.h.b16 %v1008
    %v3593 = vunpack.c.l.b16 %v1009
    %v3594 = vunpack.c.h.b16 %v1009
    %v3595 = vunpack.c.l.b16 %v1010
    %v3596 = vunpack.c.h.b16 %v1010
    %v3597 = vunpack.c.l.b16 %v1011
    %v3598 = vunpack.c.h.b16 %v1011
    %v3599 = vunpack.c.l.b16 %v1012
    %v3600 = vunpack.c.l.b16 %v1013
    %v3601 = vunpack.c.h.b16 %v1013
    %v3602 = vunpack.c.l.b16 %v1014
    %v3603 = vunpack.c.h.b16 %v1014
    %v3604 = vunpack.c.l.b16 %v1015
    %v3605 = vunpack.c.h.b16 %v1015
    %v3606 = vunpack.c.l.b16 %v1016
    %v3607 = vunpack.c.h.b16 %v1016
    %v3608 = vunpack.c.l.b16 %v1017
    %v3609 = vunpack.c.h.b16 %v1017
    %v3610 = vunpack.c.l.b16 %v1018
    %v3611 = vunpack.c.h.b16 %v1018
    %v3612 = vunpack.c.l.b16 %v1019
    %v3613 = vunpack.c.l.b16 %v1020
    %v3614 = vunpack.c.h.b16 %v1020
    %v3615 = vunpack.c.l.b16 %v1021
    %v3616 = vunpack.c.h.b16 %v1021
    %v3617 = vunpack.c.l.b16 %v1022
    %v3618 = vunpack.c.h.b16 %v1022
    %v3619 = vunpack.c.l.b16 %v1023
    %v3620 = vunpack.c.h.b16 %v1023
    %v3621 = vunpack.c.l.b16 %v1024
    %v3622 = vunpack.c.h.b16 %v1024
    %v3623 = vunpack.c.l.b16 %v1025
    %v3624 = vunpack.c.h.b16 %v1025
    %v3625 = vunpack.c.l.b16 %v1026
    %v3626 = vunpack.c.l.b16 %v1027
    %v3627 = vunpack.c.h.b16 %v1027
    %v3628 = vunpack.c.l.b16 %v1028
    %v3629 = vunpack.c.h.b16 %v1028
    %v3630 = vunpack.c.l.b16 %v1029
    %v3631 = vunpack.c.h.b16 %v1029
    %v3632 = vunpack.c.l.b16 %v1030
    %v3633 = vunpack.c.h.b16 %v1030
    %v3634 = vunpack.c.l.b16 %v1031
    %v3635 = vunpack.c.h.b16 %v1031
    %v3636 = vunpack.c.l.b16 %v1032
    %v3637 = vunpack.c.h.b16 %v1032
    %v3638 = vunpack.c.l.b16 %v1033
    %v3639 = vunpack.c.l.b16 %v1034
    %v3640 = vunpack.c.h.b16 %v1034
    %v3641 = vunpack.c.l.b16 %v1035
    %v3642 = vunpack.c.h.b16 %v1035
    %v3643 = vunpack.c.l.b16 %v1036
    %v3644 = vunpack.c.h.b16 %v1036
    %v3645 = vunpack.c.l.b16 %v1037
    %v3646 = vunpack.c.h.b16 %v1037
    %v3647 = vunpack.c.l.b16 %v1038
    %v3648 = vunpack.c.h.b16 %v1038
    %v3649 = vunpack.c.l.b16 %v1039
    %v3650 = vunpack.c.h.b16 %v1039
    %v3651 = vunpack.c.l.b16 %v1040
    %v3652 = vunpack.c.l.b16 %v1041
    %v3653 = vunpack.c.h.b16 %v1041
    %v3654 = vunpack.c.l.b16 %v1042
    %v3655 = vunpack.c.h.b16 %v1042
    %v3656 = vunpack.c.l.b16 %v1043
    %v3657 = vunpack.c.h.b16 %v1043
    %v3658 = vunpack.c.l.b16 %v1044
    %v3659 = vunpack.c.h.b16 %v1044
    %v3660 = vunpack.c.l.b16 %v1045
    %v3661 = vunpack.c.h.b16 %v1045
    %v3662 = vunpack.c.l.b16 %v1046
    %v3663 = vunpack.c.h.b16 %v1046
    %v3664 = vunpack.c.l.b16 %v1047
    %v3665 = vunpack.c.l.b16 %v1048
    %v3666 = vunpack.c.h.b16 %v1048
    %v3667 = vunpack.c.l.b16 %v1049
    %v3668 = vunpack.c.h.b16 %v1049
    %v3669 = vunpack.c.l.b16 %v1050
    %v3670 = vunpack.c.h.b16 %v1050
    %v3671 = vunpack.c.l.b16 %v1051
    %v3672 = vunpack.c.h.b16 %v1051
    %v3673 = vunpack.c.l.b16 %v1052
    %v3674 = vunpack.c.h.b16 %v1052
    %v3675 = vunpack.c.l.b16 %v1053
    %v3676 = vunpack.c.h.b16 %v1053
    %v3677 = vunpack.c.l.b16 %v1054
    %v3678 = vunpack.c.l.b16 %v1055
    %v3679 = vunpack.c.h.b16 %v1055
    %v3680 = vunpack.c.l.b16 %v1056
    %v3681 = vunpack.c.h.b16 %v1056
    %v3682 = vunpack.c.l.b16 %v1057
    %v3683 = vunpack.c.h.b16 %v1057
    %v3684 = vunpack.c.l.b16 %v1058
    %v3685 = vunpack.c.h.b16 %v1058
    %v3686 = vunpack.c.l.b16 %v1059
    %v3687 = vunpack.c.h.b16 %v1059
    %v3688 = vunpack.c.l.b16 %v1060
    %v3689 = vunpack.c.h.b16 %v1060
    %v3690 = vunpack.c.l.b16 %v1061
    %v3691 = vpack.c.b16 %v2040, %v2027
    %v3692 = vpack.c.b16 %v2041, %v2028
    %v3693 = vpack.c.b16 %v2042, %v2029
    %v3694 = vpack.c.b16 %v2043, %v2030
    %v3695 = vpack.c.b16 %v2044, %v2031
    %v3696 = vpack.c.b16 %v2045, %v2032
    %v3697 = vpack.c.b16 %v2046, %v2033
    %v3698 = vpack.c.b16 %v2047, %v2034
    %v3699 = vpack.c.b16 %v2048, %v2035
    %v3700 = vpack.c.b16 %v2049, %v2036
    %v3701 = vpack.c.b16 %v2050, %v2037
    %v3702 = vpack.c.b16 %v2051, %v2038
    %v3703 = vpack.c.b16 %v2052, %v2039
    %v3704 = vpack.c.b16 %v2066, %v2053
    %v3705 = vpack.c.b16 %v2067, %v2054
    %v3706 = vpack.c.b16 %v2068, %v2055
    %v3707 = vpack.c.b16 %v2069, %v2056
    %v3708 = vpack.c.b16 %v2070, %v2057
    %v3709 = vpack.c.b16 %v2071, %v2058
    %v3710 = vpack.c.b16 %v2072, %v2059
    %v3711 = vpack.c.b16 %v2073, %v2060
    %v3712 = vpack.c.b16 %v2074, %v2061
    %v3713 = vpack.c.b16 %v2075, %v2062
    %v3714 = vpack.c.b16 %v2076, %v2063
    %v3715 = vpack.c.b16 %v2077, %v2064
    %v3716 = vpack.c.b16 %v2078, %v2065
    %v3717 = vpack.c.b16 %v2092, %v2079
    %v3718 = vpack.c.b16 %v2093, %v2080
    %v3719 = vpack.c.b16 %v2094, %v2081
    %v3720 = vpack.c.b16 %v2095, %v2082
    %v3721 = vpack.c.b16 %v2096, %v2083
    %v3722 = vpack.c.b16 %v2097, %v2084
    %v3723 = vpack.c.b16 %v2098, %v2085
    %v3724 = vpack.c.b16 %v2099, %v2086
    %v3725 = vpack.c.b16 %v2100, %v2087
    %v3726 = vpack.c.b16 %v2101, %v2088
    %v3727 = vpack.c.b16 %v2102, %v2089
    %v3728 = vpack.c.b16 %v2103, %v2090
    %v3729 = vpack.c.b16 %v2104, %v2091
    %v3730 = vpack.c.b16 %v2118, %v2105
    %v3731 = vpack.c.b16 %v2119, %v2106
    %v3732 = vpack.c.b16 %v2120, %v2107
    %v3733 = vpack.c.b16 %v2121, %v2108
    %v3734 = vpack.c.b16 %v2122, %v2109
    %v3735 = vpack.c.b16 %v2123, %v2110
    %v3736 = vpack.c.b16 %v2124, %v2111
    %v3737 = vpack.c.b16 %v2125, %v2112
    %v3738 = vpack.c.b16 %v2126, %v2113
    %v3739 = vpack.c.b16 %v2127, %v2114
    %v3740 = vpack.c.b16 %v2128, %v2115
    %v3741 = vpack.c.b16 %v2129, %v2116
    %v3742 = vpack.c.b16 %v2130, %v2117
    %v3743 = vpack.c.b16 %v2144, %v2131
    %v3744 = vpack.c.b16 %v2145, %v2132
    %v3745 = vpack.c.b16 %v2146, %v2133
    %v3746 = vpack.c.b16 %v2147, %v2134
    %v3747 = vpack.c.b16 %v2148, %v2135
    %v3748 = vpack.c.b16 %v2149, %v2136
    %v3749 = vpack.c.b16 %v2150, %v2137
    %v3750 = vpack.c.b16 %v2151, %v2138
    %v3751 = vpack.c.b16 %v2152, %v2139
    %v3752 = vpack.c.b16 %v2153, %v2140
    %v3753 = vpack.c.b16 %v2154, %v2141
    %v3754 = vpack.c.b16 %v2155, %v2142
    %v3755 = vpack.c.b16 %v2156, %v2143
    %v3756 = vpack.c.b16 %v2170, %v2157
    %v3757 = vpack.c.b16 %v2171, %v2158
    %v3758 = vpack.c.b16 %v2172, %v2159
    %v3759 = vpack.c.b16 %v2173, %v2160
    %v3760 = vpack.c.b16 %v2174, %v2161
    %v3761 = vpack.c.b16 %v2175, %v2162
    %v3762 = vpack.c.b16 %v2176, %v2163
    %v3763 = vpack.c.b16 %v2177, %v2164
    %v3764 = vpack.c.b16 %v2178, %v2165
    %v3765 = vpack.c.b16 %v2179, %v2166
    %v3766 = vpack.c.b16 %v2180, %v2167
    %v3767 = vpack.c.b16 %v2181, %v2168
    %v3768 = vpack.c.b16 %v2182, %v2169
    %v3769 = vpack.c.b16 %v2196, %v2183
    %v3770 = vpack.c.b16 %v2197, %v2184
    %v3771 = vpack.c.b16 %v2198, %v2185
    %v3772 = vpack.c.b16 %v2199, %v2186
    %v3773 = vpack.c.b16 %v2200, %v2187
    %v3774 = vpack.c.b16 %v2201, %v2188
    %v3775 = vpack.c.b16 %v2202, %v2189
    %v3776 = vpack.c.b16 %v2203, %v2190
    %v3777 = vpack.c.b16 %v2204, %v2191
    %v3778 = vpack.c.b16 %v2205, %v2192
    %v3779 = vpack.c.b16 %v2206, %v2193
    %v3780 = vpack.c.b16 %v2207, %v2194
    %v3781 = vpack.c.b16 %v2208, %v2195
    %v3782 = vpack.c.b16 %v2222, %v2209
    %v3783 = vpack.c.b16 %v2223, %v2210
    %v3784 = vpack.c.b16 %v2224, %v2211
    %v3785 = vpack.c.b16 %v2225, %v2212
    %v3786 = vpack.c.b16 %v2226, %v2213
    %v3787 = vpack.c.b16 %v2227, %v2214
    %v3788 = vpack.c.b16 %v2228, %v2215
    %v3789 = vpack.c.b16 %v2229, %v2216
    %v3790 = vpack.c.b16 %v2230, %v2217
    %v3791 = vpack.c.b16 %v2231, %v2218
    %v3792 = vpack.c.b16 %v2232, %v2219
    %v3793 = vpack.c.b16 %v2233, %v2220
    %v3794 = vpack.c.b16 %v2234, %v2221
    %v3795 = vpack.c.b16 %v2248, %v2235
    %v3796 = vpack.c.b16 %v2249, %v2236
    %v3797 = vpack.c.b16 %v2250, %v2237
    %v3798 = vpack.c.b16 %v2251, %v2238
    %v3799 = vpack.c.b16 %v2252, %v2239
    %v3800 = vpack.c.b16 %v2253, %v2240
    %v3801 = vpack.c.b16 %v2254, %v2241
    %v3802 = vpack.c.b16 %v2255, %v2242
    %v3803 = vpack.c.b16 %v2256, %v2243
    %v3804 = vpack.c.b16 %v2257, %v2244
    %v3805 = vpack.c.b16 %v2258, %v2245
    %v3806 = vpack.c.b16 %v2259, %v2246
    %v3807 = vpack.c.b16 %v2260, %v2247
    %v3808 = vpack.c.b16 %v2274, %v2261
    %v3809 = vpack.c.b16 %v2275, %v2262
    %v3810 = vpack.c.b16 %v2276, %v2263
    %v3811 = vpack.c.b16 %v2277, %v2264
    %v3812 = vpack.c.b16 %v2278, %v2265
    %v3813 = vpack.c.b16 %v2279, %v2266
    %v3814 = vpack.c.b16 %v2280, %v2267
    %v3815 = vpack.c.b16 %v2281, %v2268
    %v3816 = vpack.c.b16 %v2282, %v2269
    %v3817 = vpack.c.b16 %v2283, %v2270
    %v3818 = vpack.c.b16 %v2284, %v2271
    %v3819 = vpack.c.b16 %v2285, %v2272
    %v3820 = vpack.c.b16 %v2286, %v2273
    %v3821 = vpack.c.b16 %v2300, %v2287
    %v3822 = vpack.c.b16 %v2301, %v2288
    %v3823 = vpack.c.b16 %v2302, %v2289
    %v3824 = vpack.c.b16 %v2303, %v2290
    %v3825 = vpack.c.b16 %v2304, %v2291
    %v3826 = vpack.c.b16 %v2305, %v2292
    %v3827 = vpack.c.b16 %v2306, %v2293
    %v3828 = vpack.c.b16 %v2307, %v2294
    %v3829 = vpack.c.b16 %v2308, %v2295
    %v3830 = vpack.c.b16 %v2309, %v2296
    %v3831 = vpack.c.b16 %v2310, %v2297
    %v3832 = vpack.c.b16 %v2311, %v2298
    %v3833 = vpack.c.b16 %v2312, %v2299
    %v3834 = vpack.c.b16 %v2326, %v2313
    %v3835 = vpack.c.b16 %v2327, %v2314
    %v3836 = vpack.c.b16 %v2328, %v2315
    %v3837 = vpack.c.b16 %v2329, %v2316
    %v3838 = vpack.c.b16 %v2330, %v2317
    %v3839 = vpack.c.b16 %v2331, %v2318
    %v3840 = vpack.c.b16 %v2332, %v2319
    %v3841 = vpack.c.b16 %v2333, %v2320
    %v3842 = vpack.c.b16 %v2334, %v2321
    %v3843 = vpack.c.b16 %v2335, %v2322
    %v3844 = vpack.c.b16 %v2336, %v2323
    %v3845 = vpack.c.b16 %v2337, %v2324
    %v3846 = vpack.c.b16 %v2338, %v2325
    %v3847 = vpack.c.b16 %v2352, %v2339
    %v3848 = vpack.c.b16 %v2353, %v2340
    %v3849 = vpack.c.b16 %v2354, %v2341
    %v3850 = vpack.c.b16 %v2355, %v2342
    %v3851 = vpack.c.b16 %v2356, %v2343
    %v3852 = vpack.c.b16 %v2357, %v2344
    %v3853 = vpack.c.b16 %v2358, %v2345
    %v3854 = vpack.c.b16 %v2359, %v2346
    %v3855 = vpack.c.b16 %v2360, %v2347
    %v3856 = vpack.c.b16 %v2361, %v2348
    %v3857 = vpack.c.b16 %v2362, %v2349
    %v3858 = vpack.c.b16 %v2363, %v2350
    %v3859 = vpack.c.b16 %v2364, %v2351
    %v3860 = vpack.c.b16 %v2378, %v2365
    %v3861 = vpack.c.b16 %v2379, %v2366
    %v3862 = vpack.c.b16 %v2380, %v2367
    %v3863 = vpack.c.b16 %v2381, %v2368
    %v3864 = vpack.c.b16 %v2382, %v2369
    %v3865 = vpack.c.b16 %v2383, %v2370
    %v3866 = vpack.c.b16 %v2384, %v2371
    %v3867 = vpack.c.b16 %v2385, %v2372
    %v3868 = vpack.c.b16 %v2386, %v2373
    %v3869 = vpack.c.b16 %v2387, %v2374
    %v3870 = vpack.c.b16 %v2388, %v2375
    %v3871 = vpack.c.b16 %v2389, %v2376
    %v3872 = vpack.c.b16 %v2390, %v2377
    %v3873 = vpack.c.b16 %v2404, %v2391
    %v3874 = vpack.c.b16 %v2405, %v2392
    %v3875 = vpack.c.b16 %v2406, %v2393
    %v3876 = vpack.c.b16 %v2407, %v2394
    %v3877 = vpack.c.b16 %v2408, %v2395
    %v3878 = vpack.c.b16 %v2409, %v2396
    %v3879 = vpack.c.b16 %v2410, %v2397
    %v3880 = vpack.c.b16 %v2411, %v2398
    %v3881 = vpack.c.b16 %v2412, %v2399
    %v3882 = vpack.c.b16 %v2413, %v2400
    %v3883 = vpack.c.b16 %v2414, %v2401
    %v3884 = vpack.c.b16 %v2415, %v2402
    %v3885 = vpack.c.b16 %v2416, %v2403
    %v3886 = vpack.c.b16 %v2430, %v2417
    %v3887 = vpack.c.b16 %v2431, %v2418
    %v3888 = vpack.c.b16 %v2432, %v2419
    %v3889 = vpack.c.b16 %v2433, %v2420
    %v3890 = vpack.c.b16 %v2434, %v2421
    %v3891 = vpack.c.b16 %v2435, %v2422
    %v3892 = vpack.c.b16 %v2436, %v2423
    %v3893 = vpack.c.b16 %v2437, %v2424
    %v3894 = vpack.c.b16 %v2438, %v2425
    %v3895 = vpack.c.b16 %v2439, %v2426
    %v3896 = vpack.c.b16 %v2440, %v2427
    %v3897 = vpack.c.b16 %v2441, %v2428
    %v3898 = vpack.c.b16 %v2442, %v2429
    %v3899 = vpack.c.b16 %v2456, %v2443
    %v3900 = vpack.c.b16 %v2457, %v2444
    %v3901 = vpack.c.b16 %v2458, %v2445
    %v3902 = vpack.c.b16 %v2459, %v2446
    %v3903 = vpack.c.b16 %v2460, %v2447
    %v3904 = vpack.c.b16 %v2461, %v2448
    %v3905 = vpack.c.b16 %v2462, %v2449
    %v3906 = vpack.c.b16 %v2463, %v2450
    %v3907 = vpack.c.b16 %v2464, %v2451
    %v3908 = vpack.c.b16 %v2465, %v2452
    %v3909 = vpack.c.b16 %v2466, %v2453
    %v3910 = vpack.c.b16 %v2467, %v2454
    %v3911 = vpack.c.b16 %v2468, %v2455
    %v3912 = vpack.c.b16 %v2482, %v2469
    %v3913 = vpack.c.b16 %v2483, %v2470
    %v3914 = vpack.c.b16 %v2484, %v2471
    %v3915 = vpack.c.b16 %v2485, %v2472
    %v3916 = vpack.c.b16 %v2486, %v2473
    %v3917 = vpack.c.b16 %v2487, %v2474
    %v3918 = vpack.c.b16 %v2488, %v2475
    %v3919 = vpack.c.b16 %v2489, %v2476
    %v3920 = vpack.c.b16 %v2490, %v2477
    %v3921 = vpack.c.b16 %v2491, %v2478
    %v3922 = vpack.c.b16 %v2492, %v2479
    %v3923 = vpack.c.b16 %v2493, %v2480
    %v3924 = vpack.c.b16 %v2494, %v2481
    %v3925 = vpack.c.b16 %v2508, %v2495
    %v3926 = vpack.c.b16 %v2509, %v2496
    %v3927 = vpack.c.b16 %v2510, %v2497
    %v3928 = vpack.c.b16 %v2511, %v2498
    %v3929 = vpack.c.b16 %v2512, %v2499
    %v3930 = vpack.c.b16 %v2513, %v2500
    %v3931 = vpack.c.b16 %v2514, %v2501
    %v3932 = vpack.c.b16 %v2515, %v2502
    %v3933 = vpack.c.b16 %v2516, %v2503
    %v3934 = vpack.c.b16 %v2517, %v2504
    %v3935 = vpack.c.b16 %v2518, %v2505
    %v3936 = vpack.c.b16 %v2519, %v2506
    %v3937 = vpack.c.b16 %v2520, %v2507
    %v3938 = vpack.c.b16 %v2534, %v2521
    %v3939 = vpack.c.b16 %v2535, %v2522
    %v3940 = vpack.c.b16 %v2536, %v2523
    %v3941 = vpack.c.b16 %v2537, %v2524
    %v3942 = vpack.c.b16 %v2538, %v2525
    %v3943 = vpack.c.b16 %v2539, %v2526
    %v3944 = vpack.c.b16 %v2540, %v2527
    %v3945 = vpack.c.b16 %v2541, %v2528
    %v3946 = vpack.c.b16 %v2542, %v2529
    %v3947 = vpack.c.b16 %v2543, %v2530
    %v3948 = vpack.c.b16 %v2544, %v2531
    %v3949 = vpack.c.b16 %v2545, %v2532
    %v3950 = vpack.c.b16 %v2546, %v2533
    %v3951 = vpack.c.b16 %v2560, %v2547
    %v3952 = vpack.c.b16 %v2561, %v2548
    %v3953 = vpack.c.b16 %v2562, %v2549
    %v3954 = vpack.c.b16 %v2563, %v2550
    %v3955 = vpack.c.b16 %v2564, %v2551
    %v3956 = vpack.c.b16 %v2565, %v2552
    %v3957 = vpack.c.b16 %v2566, %v2553
    %v3958 = vpack.c.b16 %v2567, %v2554
    %v3959 = vpack.c.b16 %v2568, %v2555
    %v3960 = vpack.c.b16 %v2569, %v2556
    %v3961 = vpack.c.b16 %v2570, %v2557
    %v3962 = vpack.c.b16 %v2571, %v2558
    %v3963 = vpack.c.b16 %v2572, %v2559
    %v3964 = vpack.c.b16 %v2586, %v2573
    %v3965 = vpack.c.b16 %v2587, %v2574
    %v3966 = vpack.c.b16 %v2588, %v2575
    %v3967 = vpack.c.b16 %v2589, %v2576
    %v3968 = vpack.c.b16 %v2590, %v2577
    %v3969 = vpack.c.b16 %v2591, %v2578
    %v3970 = vpack.c.b16 %v2592, %v2579
    %v3971 = vpack.c.b16 %v2593, %v2580
    %v3972 = vpack.c.b16 %v2594, %v2581
    %v3973 = vpack.c.b16 %v2595, %v2582
    %v3974 = vpack.c.b16 %v2596, %v2583
    %v3975 = vpack.c.b16 %v2597, %v2584
    %v3976 = vpack.c.b16 %v2598, %v2585
    %v3977 = vpack.c.b16 %v2612, %v2599
    %v3978 = vpack.c.b16 %v2613, %v2600
    %v3979 = vpack.c.b16 %v2614, %v2601
    %v3980 = vpack.c.b16 %v2615, %v2602
    %v3981 = vpack.c.b16 %v2616, %v2603
    %v3982 = vpack.c.b16 %v2617, %v2604
    %v3983 = vpack.c.b16 %v2618, %v2605
    %v3984 = vpack.c.b16 %v2619, %v2606
    %v3985 = vpack.c.b16 %v2620, %v2607
    %v3986 = vpack.c.b16 %v2621, %v2608
    %v3987 = vpack.c.b16 %v2622, %v2609
    %v3988 = vpack.c.b16 %v2623, %v2610
    %v3989 = vpack.c.b16 %v2624, %v2611
    %v3990 = vpack.c.b16 %v2638, %v2625
    %v3991 = vpack.c.b16 %v2639, %v2626
    %v3992 = vpack.c.b16 %v2640, %v2627
    %v3993 = vpack.c.b16 %v2641, %v2628
    %v3994 = vpack.c.b16 %v2642, %v2629
    %v3995 = vpack.c.b16 %v2643, %v2630
    %v3996 = vpack.c.b16 %v2644, %v2631
    %v3997 = vpack.c.b16 %v2645, %v2632
    %v3998 = vpack.c.b16 %v2646, %v2633
    %v3999 = vpack.c.b16 %v2647, %v2634
    %v4000 = vpack.c.b16 %v2648, %v2635
    %v4001 = vpack.c.b16 %v2649, %v2636
    %v4002 = vpack.c.b16 %v2650, %v2637
    %v4003 = vpack.c.b16 %v2664, %v2651
    %v4004 = vpack.c.b16 %v2665, %v2652
    %v4005 = vpack.c.b16 %v2666, %v2653
    %v4006 = vpack.c.b16 %v2667, %v2654
    %v4007 = vpack.c.b16 %v2668, %v2655
    %v4008 = vpack.c.b16 %v2669, %v2656
    %v4009 = vpack.c.b16 %v2670, %v2657
    %v4010 = vpack.c.b16 %v2671, %v2658
    %v4011 = vpack.c.b16 %v2672, %v2659
    %v4012 = vpack.c.b16 %v2673, %v2660
    %v4013 = vpack.c.b16 %v2674, %v2661
    %v4014 = vpack.c.b16 %v2675, %v2662
    %v4015 = vpack.c.b16 %v2676, %v2663
    %v4016 = vpack.c.b16 %v2690, %v2677
    %v4017 = vpack.c.b16 %v2691, %v2678
    %v4018 = vpack.c.b16 %v2692, %v2679
    %v4019 = vpack.c.b16 %v2693, %v2680
    %v4020 = vpack.c.b16 %v2694, %v2681
    %v4021 = vpack.c.b16 %v2695, %v2682
    %v4022 = vpack.c.b16 %v2696, %v2683
    %v4023 = vpack.c.b16 %v2697, %v2684
    %v4024 = vpack.c.b16 %v2698, %v2685
    %v4025 = vpack.c.b16 %v2699, %v2686
    %v4026 = vpack.c.b16 %v2700, %v2687
    %v4027 = vpack.c.b16 %v2701, %v2688
    %v4028 = vpack.c.b16 %v2702, %v2689
    %v4029 = vpack.c.b16 %v2716, %v2703
    %v4030 = vpack.c.b16 %v2717, %v2704
    %v4031 = vpack.c.b16 %v2718, %v2705
    %v4032 = vpack.c.b16 %v2719, %v2706
    %v4033 = vpack.c.b16 %v2720, %v2707
    %v4034 = vpack.c.b16 %v2721, %v2708
    %v4035 = vpack.c.b16 %v2722, %v2709
    %v4036 = vpack.c.b16 %v2723, %v2710
    %v4037 = vpack.c.b16 %v2724, %v2711
    %v4038 = vpack.c.b16 %v2725, %v2712
    %v4039 = vpack.c.b16 %v2726, %v2713
    %v4040 = vpack.c.b16 %v2727, %v2714
    %v4041 = vpack.c.b16 %v2728, %v2715
    %v4042 = vpack.c.b16 %v2742, %v2729
    %v4043 = vpack.c.b16 %v2743, %v2730
    %v4044 = vpack.c.b16 %v2744, %v2731
    %v4045 = vpack.c.b16 %v2745, %v2732
    %v4046 = vpack.c.b16 %v2746, %v2733
    %v4047 = vpack.c.b16 %v2747, %v2734
    %v4048 = vpack.c.b16 %v2748, %v2735
    %v4049 = vpack.c.b16 %v2749, %v2736
    %v4050 = vpack.c.b16 %v2750, %v2737
    %v4051 = vpack.c.b16 %v2751, %v2738
    %v4052 = vpack.c.b16 %v2752, %v2739
    %v4053 = vpack.c.b16 %v2753, %v2740
    %v4054 = vpack.c.b16 %v2754, %v2741
    %v4055 = vpack.c.b16 %v2768, %v2755
    %v4056 = vpack.c.b16 %v2769, %v2756
    %v4057 = vpack.c.b16 %v2770, %v2757
    %v4058 = vpack.c.b16 %v2771, %v2758
    %v4059 = vpack.c.b16 %v2772, %v2759
    %v4060 = vpack.c.b16 %v2773, %v2760
    %v4061 = vpack.c.b16 %v2774, %v2761
    %v4062 = vpack.c.b16 %v2775, %v2762
    %v4063 = vpack.c.b16 %v2776, %v2763
    %v4064 = vpack.c.b16 %v2777, %v2764
    %v4065 = vpack.c.b16 %v2778, %v2765
    %v4066 = vpack.c.b16 %v2779, %v2766
    %v4067 = vpack.c.b16 %v2780, %v2767
    %v4068 = vpack.c.b16 %v2794, %v2781
    %v4069 = vpack.c.b16 %v2795, %v2782
    %v4070 = vpack.c.b16 %v2796, %v2783
    %v4071 = vpack.c.b16 %v2797, %v2784
    %v4072 = vpack.c.b16 %v2798, %v2785
    %v4073 = vpack.c.b16 %v2799, %v2786
    %v4074 = vpack.c.b16 %v2800, %v2787
    %v4075 = vpack.c.b16 %v2801, %v2788
    %v4076 = vpack.c.b16 %v2802, %v2789
    %v4077 = vpack.c.b16 %v2803, %v2790
    %v4078 = vpack.c.b16 %v2804, %v2791
    %v4079 = vpack.c.b16 %v2805, %v2792
    %v4080 = vpack.c.b16 %v2806, %v2793
    %v4081 = vpack.c.b16 %v2820, %v2807
    %v4082 = vpack.c.b16 %v2821, %v2808
    %v4083 = vpack.c.b16 %v2822, %v2809
    %v4084 = vpack.c.b16 %v2823, %v2810
    %v4085 = vpack.c.b16 %v2824, %v2811
    %v4086 = vpack.c.b16 %v2825, %v2812
    %v4087 = vpack.c.b16 %v2826, %v2813
    %v4088 = vpack.c.b16 %v2827, %v2814
    %v4089 = vpack.c.b16 %v2828, %v2815
    %v4090 = vpack.c.b16 %v2829, %v2816
    %v4091 = vpack.c.b16 %v2830, %v2817
    %v4092 = vpack.c.b16 %v2831, %v2818
    %v4093 = vpack.c.b16 %v2832, %v2819
    %v4094 = vpack.c.b16 %v2846, %v2833
    %v4095 = vpack.c.b16 %v2847, %v2834
    %v4096 = vpack.c.b16 %v2848, %v2835
    %v4097 = vpack.c.b16 %v2849, %v2836
    %v4098 = vpack.c.b16 %v2850, %v2837
    %v4099 = vpack.c.b16 %v2851, %v2838
    %v4100 = vpack.c.b16 %v2852, %v2839
    %v4101 = vpack.c.b16 %v2853, %v2840
    %v4102 = vpack.c.b16 %v2854, %v2841
    %v4103 = vpack.c.b16 %v2855, %v2842
    %v4104 = vpack.c.b16 %v2856, %v2843
    %v4105 = vpack.c.b16 %v2857, %v2844
    %v4106 = vpack.c.b16 %v2858, %v2845
    %v4107 = vpack.c.b16 %v2872, %v2859
    %v4108 = vpack.c.b16 %v2873, %v2860
    %v4109 = vpack.c.b16 %v2874, %v2861
    %v4110 = vpack.c.b16 %v2875, %v2862
    %v4111 = vpack.c.b16 %v2876, %v2863
    %v4112 = vpack.c.b16 %v2877, %v2864
    %v4113 = vpack.c.b16 %v2878, %v2865
    %v4114 = vpack.c.b16 %v2879, %v2866
    %v4115 = vpack.c.b16 %v2880, %v2867
    %v4116 = vpack.c.b16 %v2881, %v2868
    %v4117 = vpack.c.b16 %v2882, %v2869
    %v4118 = vpack.c.b16 %v2883, %v2870
    %v4119 = vpack.c.b16 %v2884, %v2871
    %v4120 = vpack.c.b16 %v2898, %v2885
    %v4121 = vpack.c.b16 %v2899, %v2886
    %v4122 = vpack.c.b16 %v2900, %v2887
    %v4123 = vpack.c.b16 %v2901, %v2888
    %v4124 = vpack.c.b16 %v2902, %v2889
    %v4125 = vpack.c.b16 %v2903, %v2890
    %v4126 = vpack.c.b16 %v2904, %v2891
    %v4127 = vpack.c.b16 %v2905, %v2892
    %v4128 = vpack.c.b16 %v2906, %v2893
    %v4129 = vpack.c.b16 %v2907, %v2894
    %v4130 = vpack.c.b16 %v2908, %v2895
    %v4131 = vpack.c.b16 %v2909, %v2896
    %v4132 = vpack.c.b16 %v2910, %v2897
    %v4133 = vpack.c.b16 %v2924, %v2911
    %v4134 = vpack.c.b16 %v2925, %v2912
    %v4135 = vpack.c.b16 %v2926, %v2913
    %v4136 = vpack.c.b16 %v2927, %v2914
    %v4137 = vpack.c.b16 %v2928, %v2915
    %v4138 = vpack.c.b16 %v2929, %v2916
    %v4139 = vpack.c.b16 %v2930, %v2917
    %v4140 = vpack.c.b16 %v2931, %v2918
    %v4141 = vpack.c.b16 %v2932, %v2919
    %v4142 = vpack.c.b16 %v2933, %v2920
    %v4143 = vpack.c.b16 %v2934, %v2921
    %v4144 = vpack.c.b16 %v2935, %v2922
    %v4145 = vpack.c.b16 %v2936, %v2923
    %v4146 = vpack.c.b16 %v2950, %v2937
    %v4147 = vpack.c.b16 %v2951, %v2938
    %v4148 = vpack.c.b16 %v2952, %v2939
    %v4149 = vpack.c.b16 %v2953, %v2940
    %v4150 = vpack.c.b16 %v2954, %v2941
    %v4151 = vpack.c.b16 %v2955, %v2942
    %v4152 = vpack.c.b16 %v2956, %v2943
    %v4153 = vpack.c.b16 %v2957, %v2944
    %v4154 = vpack.c.b16 %v2958, %v2945
    %v4155 = vpack.c.b16 %v2959, %v2946
    %v4156 = vpack.c.b16 %v2960, %v2947
    %v4157 = vpack.c.b16 %v2961, %v2948
    %v4158 = vpack.c.b16 %v2962, %v2949
    %v4159 = vpack.c.b16 %v2976, %v2963
    %v4160 = vpack.c.b16 %v2977, %v2964
    %v4161 = vpack.c.b16 %v2978, %v2965
    %v4162 = vpack.c.b16 %v2979, %v2966
    %v4163 = vpack.c.b16 %v2980, %v2967
    %v4164 = vpack.c.b16 %v2981, %v2968
    %v4165 = vpack.c.b16 %v2982, %v2969
    %v4166 = vpack.c.b16 %v2983, %v2970
    %v4167 = vpack.c.b16 %v2984, %v2971
    %v4168 = vpack.c.b16 %v2985, %v2972
    %v4169 = vpack.c.b16 %v2986, %v2973
    %v4170 = vpack.c.b16 %v2987, %v2974
    %v4171 = vpack.c.b16 %v2988, %v2975
    %v4172 = vpack.c.b16 %v3002, %v2989
    %v4173 = vpack.c.b16 %v3003, %v2990
    %v4174 = vpack.c.b16 %v3004, %v2991
    %v4175 = vpack.c.b16 %v3005, %v2992
    %v4176 = vpack.c.b16 %v3006, %v2993
    %v4177 = vpack.c.b16 %v3007, %v2994
    %v4178 = vpack.c.b16 %v3008, %v2995
    %v4179 = vpack.c.b16 %v3009, %v2996
    %v4180 = vpack.c.b16 %v3010, %v2997
    %v4181 = vpack.c.b16 %v3011, %v2998
    %v4182 = vpack.c.b16 %v3012, %v2999
    %v4183 = vpack.c.b16 %v3013, %v3000
    %v4184 = vpack.c.b16 %v3014, %v3001
    %v4185 = vpack.c.b16 %v3028, %v3015
    %v4186 = vpack.c.b16 %v3029, %v3016
    %v4187 = vpack.c.b16 %v3030, %v3017
    %v4188 = vpack.c.b16 %v3031, %v3018
    %v4189 = vpack.c.b16 %v3032, %v3019
    %v4190 = vpack.c.b16 %v3033, %v3020
    %v4191 = vpack.c.b16 %v3034, %v3021
    %v4192 = vpack.c.b16 %v3035, %v3022
    %v4193 = vpack.c.b16 %v3036, %v3023
    %v4194 = vpack.c.b16 %v3037, %v3024
    %v4195 = vpack.c.b16 %v3038, %v3025
    %v4196 = vpack.c.b16 %v3039, %v3026
    %v4197 = vpack.c.b16 %v3040, %v3027
    %v4198 = vpack.c.b16 %v3054, %v3041
    %v4199 = vpack.c.b16 %v3055, %v3042
    %v4200 = vpack.c.b16 %v3056, %v3043
    %v4201 = vpack.c.b16 %v3057, %v3044
    %v4202 = vpack.c.b16 %v3058, %v3045
    %v4203 = vpack.c.b16 %v3059, %v3046
    %v4204 = vpack.c.b16 %v3060, %v3047
    %v4205 = vpack.c.b16 %v3061, %v3048
    %v4206 = vpack.c.b16 %v3062, %v3049
    %v4207 = vpack.c.b16 %v3063, %v3050
    %v4208 = vpack.c.b16 %v3064, %v3051
    %v4209 = vpack.c.b16 %v3065, %v3052
    %v4210 = vpack.c.b16 %v3066, %v3053
    %v4211 = vpack.c.b16 %v3080, %v3067
    %v4212 = vpack.c.b16 %v3081, %v3068
    %v4213 = vpack.c.b16 %v3082, %v3069
    %v4214 = vpack.c.b16 %v3083, %v3070
    %v4215 = vpack.c.b16 %v3084, %v3071
    %v4216 = vpack.c.b16 %v3085, %v3072
    %v4217 = vpack.c.b16 %v3086, %v3073
    %v4218 = vpack.c.b16 %v3087, %v3074
    %v4219 = vpack.c.b16 %v3088, %v3075
    %v4220 = vpack.c.b16 %v3089, %v3076
    %v4221 = vpack.c.b16 %v3090, %v3077
    %v4222 = vpack.c.b16 %v3091, %v3078
    %v4223 = vpack.c.b16 %v3092, %v3079
    %v4224 = vpack.c.b16 %v3106, %v3093
    %v4225 = vpack.c.b16 %v3107, %v3094
    %v4226 = vpack.c.b16 %v3108, %v3095
    %v4227 = vpack.c.b16 %v3109, %v3096
    %v4228 = vpack.c.b16 %v3110, %v3097
    %v4229 = vpack.c.b16 %v3111, %v3098
    %v4230 = vpack.c.b16 %v3112, %v3099
    %v4231 = vpack.c.b16 %v3113, %v3100
    %v4232 = vpack.c.b16 %v3114, %v3101
    %v4233 = vpack.c.b16 %v3115, %v3102
    %v4234 = vpack.c.b16 %v3116, %v3103
    %v4235 = vpack.c.b16 %v3117, %v3104
    %v4236 = vpack.c.b16 %v3118, %v3105
    %v4237 = vpack.c.b16 %v3132, %v3119
    %v4238 = vpack.c.b16 %v3133, %v3120
    %v4239 = vpack.c.b16 %v3134, %v3121
    %v4240 = vpack.c.b16 %v3135, %v3122
    %v4241 = vpack.c.b16 %v3136, %v3123
    %v4242 = vpack.c.b16 %v3137, %v3124
    %v4243 = vpack.c.b16 %v3138, %v3125
    %v4244 = vpack.c.b16 %v3139, %v3126
    %v4245 = vpack.c.b16 %v3140, %v3127
    %v4246 = vpack.c.b16 %v3141, %v3128
    %v4247 = vpack.c.b16 %v3142, %v3129
    %v4248 = vpack.c.b16 %v3143, %v3130
    %v4249 = vpack.c.b16 %v3144, %v3131
    %v4250 = vpack.c.b16 %v3158, %v3145
    %v4251 = vpack.c.b16 %v3159, %v3146
    %v4252 = vpack.c.b16 %v3160, %v3147
    %v4253 = vpack.c.b16 %v3161, %v3148
    %v4254 = vpack.c.b16 %v3162, %v3149
    %v4255 = vpack.c.b16 %v3163, %v3150
    %v4256 = vpack.c.b16 %v3164, %v3151
    %v4257 = vpack.c.b16 %v3165, %v3152
    %v4258 = vpack.c.b16 %v3166, %v3153
    %v4259 = vpack.c.b16 %v3167, %v3154
    %v4260 = vpack.c.b16 %v3168, %v3155
    %v4261 = vpack.c.b16 %v3169, %v3156
    %v4262 = vpack.c.b16 %v3170, %v3157
    %v4263 = vpack.c.b16 %v3184, %v3171
    %v4264 = vpack.c.b16 %v3185, %v3172
    %v4265 = vpack.c.b16 %v3186, %v3173
    %v4266 = vpack.c.b16 %v3187, %v3174
    %v4267 = vpack.c.b16 %v3188, %v3175
    %v4268 = vpack.c.b16 %v3189, %v3176
    %v4269 = vpack.c.b16 %v3190, %v3177
    %v4270 = vpack.c.b16 %v3191, %v3178
    %v4271 = vpack.c.b16 %v3192, %v3179
    %v4272 = vpack.c.b16 %v3193, %v3180
    %v4273 = vpack.c.b16 %v3194, %v3181
    %v4274 = vpack.c.b16 %v3195, %v3182
    %v4275 = vpack.c.b16 %v3196, %v3183
    %v4276 = vpack.c.b16 %v3210, %v3197
    %v4277 = vpack.c.b16 %v3211, %v3198
    %v4278 = vpack.c.b16 %v3212, %v3199
    %v4279 = vpack.c.b16 %v3213, %v3200
    %v4280 = vpack.c.b16 %v3214, %v3201
    %v4281 = vpack.c.b16 %v3215, %v3202
    %v4282 = vpack.c.b16 %v3216, %v3203
    %v4283 = vpack.c.b16 %v3217, %v3204
    %v4284 = vpack.c.b16 %v3218, %v3205
    %v4285 = vpack.c.b16 %v3219, %v3206
    %v4286 = vpack.c.b16 %v3220, %v3207
    %v4287 = vpack.c.b16 %v3221, %v3208
    %v4288 = vpack.c.b16 %v3222, %v3209
    %v4289 = vpack.c.b16 %v3236, %v3223
    %v4290 = vpack.c.b16 %v3237, %v3224
    %v4291 = vpack.c.b16 %v3238, %v3225
    %v4292 = vpack.c.b16 %v3239, %v3226
    %v4293 = vpack.c.b16 %v3240, %v3227
    %v4294 = vpack.c.b16 %v3241, %v3228
    %v4295 = vpack.c.b16 %v3242, %v3229
    %v4296 = vpack.c.b16 %v3243, %v3230
    %v4297 = vpack.c.b16 %v3244, %v3231
    %v4298 = vpack.c.b16 %v3245, %v3232
    %v4299 = vpack.c.b16 %v3246, %v3233
    %v4300 = vpack.c.b16 %v3247, %v3234
    %v4301 = vpack.c.b16 %v3248, %v3235
    %v4302 = vpack.c.b16 %v3262, %v3249
    %v4303 = vpack.c.b16 %v3263, %v3250
    %v4304 = vpack.c.b16 %v3264, %v3251
    %v4305 = vpack.c.b16 %v3265, %v3252
    %v4306 = vpack.c.b16 %v3266, %v3253
    %v4307 = vpack.c.b16 %v3267, %v3254
    %v4308 = vpack.c.b16 %v3268, %v3255
    %v4309 = vpack.c.b16 %v3269, %v3256
    %v4310 = vpack.c.b16 %v3270, %v3257
    %v4311 = vpack.c.b16 %v3271, %v3258
    %v4312 = vpack.c.b16 %v3272, %v3259
    %v4313 = vpack.c.b16 %v3273, %v3260
    %v4314 = vpack.c.b16 %v3274, %v3261
    %v4315 = vpack.c.b16 %v3288, %v3275
    %v4316 = vpack.c.b16 %v3289, %v3276
    %v4317 = vpack.c.b16 %v3290, %v3277
    %v4318 = vpack.c.b16 %v3291, %v3278
    %v4319 = vpack.c.b16 %v3292, %v3279
    %v4320 = vpack.c.b16 %v3293, %v3280
    %v4321 = vpack.c.b16 %v3294, %v3281
    %v4322 = vpack.c.b16 %v3295, %v3282
    %v4323 = vpack.c.b16 %v3296, %v3283
    %v4324 = vpack.c.b16 %v3297, %v3284
    %v4325 = vpack.c.b16 %v3298, %v3285
    %v4326 = vpack.c.b16 %v3299, %v3286
    %v4327 = vpack.c.b16 %v3300, %v3287
    %v4328 = vpack.c.b16 %v3314, %v3301
    %v4329 = vpack.c.b16 %v3315, %v3302
    %v4330 = vpack.c.b16 %v3316, %v3303
    %v4331 = vpack.c.b16 %v3317, %v3304
    %v4332 = vpack.c.b16 %v3318, %v3305
    %v4333 = vpack.c.b16 %v3319, %v3306
    %v4334 = vpack.c.b16 %v3320, %v3307
    %v4335 = vpack.c.b16 %v3321, %v3308
    %v4336 = vpack.c.b16 %v3322, %v3309
    %v4337 = vpack.c.b16 %v3323, %v3310
    %v4338 = vpack.c.b16 %v3324, %v3311
    %v4339 = vpack.c.b16 %v3325, %v3312
    %v4340 = vpack.c.b16 %v3326, %v3313
    %v4341 = vpack.c.b16 %v3340, %v3327
    %v4342 = vpack.c.b16 %v3341, %v3328
    %v4343 = vpack.c.b16 %v3342, %v3329
    %v4344 = vpack.c.b16 %v3343, %v3330
    %v4345 = vpack.c.b16 %v3344, %v3331
    %v4346 = vpack.c.b16 %v3345, %v3332
    %v4347 = vpack.c.b16 %v3346, %v3333
    %v4348 = vpack.c.b16 %v3347, %v3334
    %v4349 = vpack.c.b16 %v3348, %v3335
    %v4350 = vpack.c.b16 %v3349, %v3336
    %v4351 = vpack.c.b16 %v3350, %v3337
    %v4352 = vpack.c.b16 %v3351, %v3338
    %v4353 = vpack.c.b16 %v3352, %v3339
    %v4354 = vpack.c.b16 %v3366, %v3353
    %v4355 = vpack.c.b16 %v3367, %v3354
    %v4356 = vpack.c.b16 %v3368, %v3355
    %v4357 = vpack.c.b16 %v3369, %v3356
    %v4358 = vpack.c.b16 %v3370, %v3357
    %v4359 = vpack.c.b16 %v3371, %v3358
    %v4360 = vpack.c.b16 %v3372, %v3359
    %v4361 = vpack.c.b16 %v3373, %v3360
    %v4362 = vpack.c.b16 %v3374, %v3361
    %v4363 = vpack.c.b16 %v3375, %v3362
    %v4364 = vpack.c.b16 %v3376, %v3363
    %v4365 = vpack.c.b16 %v3377, %v3364
    %v4366 = vpack.c.b16 %v3378, %v3365
    %v4367 = vpack.c.b16 %v3392, %v3379
    %v4368 = vpack.c.b16 %v3393, %v3380
    %v4369 = vpack.c.b16 %v3394, %v3381
    %v4370 = vpack.c.b16 %v3395, %v3382
    %v4371 = vpack.c.b16 %v3396, %v3383
    %v4372 = vpack.c.b16 %v3397, %v3384
    %v4373 = vpack.c.b16 %v3398, %v3385
    %v4374 = vpack.c.b16 %v3399, %v3386
    %v4375 = vpack.c.b16 %v3400, %v3387
    %v4376 = vpack.c.b16 %v3401, %v3388
    %v4377 = vpack.c.b16 %v3402, %v3389
    %v4378 = vpack.c.b16 %v3403, %v3390
    %v4379 = vpack.c.b16 %v3404, %v3391
    %v4380 = vpack.c.b16 %v3418, %v3405
    %v4381 = vpack.c.b16 %v3419, %v3406
    %v4382 = vpack.c.b16 %v3420, %v3407
    %v4383 = vpack.c.b16 %v3421, %v3408
    %v4384 = vpack.c.b16 %v3422, %v3409
    %v4385 = vpack.c.b16 %v3423, %v3410
    %v4386 = vpack.c.b16 %v3424, %v3411
    %v4387 = vpack.c.b16 %v3425, %v3412
    %v4388 = vpack.c.b16 %v3426, %v3413
    %v4389 = vpack.c.b16 %v3427, %v3414
    %v4390 = vpack.c.b16 %v3428, %v3415
    %v4391 = vpack.c.b16 %v3429, %v3416
    %v4392 = vpack.c.b16 %v3430, %v3417
    %v4393 = vpack.c.b16 %v3444, %v3431
    %v4394 = vpack.c.b16 %v3445, %v3432
    %v4395 = vpack.c.b16 %v3446, %v3433
    %v4396 = vpack.c.b16 %v3447, %v3434
    %v4397 = vpack.c.b16 %v3448, %v3435
    %v4398 = vpack.c.b16 %v3449, %v3436
    %v4399 = vpack.c.b16 %v3450, %v3437
    %v4400 = vpack.c.b16 %v3451, %v3438
    %v4401 = vpack.c.b16 %v3452, %v3439
    %v4402 = vpack.c.b16 %v3453, %v3440
    %v4403 = vpack.c.b16 %v3454, %v3441
    %v4404 = vpack.c.b16 %v3455, %v3442
    %v4405 = vpack.c.b16 %v3456, %v3443
    %v4406 = vpack.c.b16 %v3470, %v3457
    %v4407 = vpack.c.b16 %v3471, %v3458
    %v4408 = vpack.c.b16 %v3472, %v3459
    %v4409 = vpack.c.b16 %v3473, %v3460
    %v4410 = vpack.c.b16 %v3474, %v3461
    %v4411 = vpack.c.b16 %v3475, %v3462
    %v4412 = vpack.c.b16 %v3476, %v3463
    %v4413 = vpack.c.b16 %v3477, %v3464
    %v4414 = vpack.c.b16 %v3478, %v3465
    %v4415 = vpack.c.b16 %v3479, %v3466
    %v4416 = vpack.c.b16 %v3480, %v3467
    %v4417 = vpack.c.b16 %v3481, %v3468
    %v4418 = vpack.c.b16 %v3482, %v3469
    %v4419 = vpack.c.b16 %v3496, %v3483
    %v4420 = vpack.c.b16 %v3497, %v3484
    %v4421 = vpack.c.b16 %v3498, %v3485
    %v4422 = vpack.c.b16 %v3499, %v3486
    %v4423 = vpack.c.b16 %v3500, %v3487
    %v4424 = vpack.c.b16 %v3501, %v3488
    %v4425 = vpack.c.b16 %v3502, %v3489
    %v4426 = vpack.c.b16 %v3503, %v3490
    %v4427 = vpack.c.b16 %v3504, %v3491
    %v4428 = vpack.c.b16 %v3505, %v3492
    %v4429 = vpack.c.b16 %v3506, %v3493
    %v4430 = vpack.c.b16 %v3507, %v3494
    %v4431 = vpack.c.b16 %v3508, %v3495
    %v4432 = vpack.c.b16 %v3522, %v3509
    %v4433 = vpack.c.b16 %v3523, %v3510
    %v4434 = vpack.c.b16 %v3524, %v3511
    %v4435 = vpack.c.b16 %v3525, %v3512
    %v4436 = vpack.c.b16 %v3526, %v3513
    %v4437 = vpack.c.b16 %v3527, %v3514
    %v4438 = vpack.c.b16 %v3528, %v3515
    %v4439 = vpack.c.b16 %v3529, %v3516
    %v4440 = vpack.c.b16 %v3530, %v3517
    %v4441 = vpack.c.b16 %v3531, %v3518
    %v4442 = vpack.c.b16 %v3532, %v3519
    %v4443 = vpack.c.b16 %v3533, %v3520
    %v4444 = vpack.c.b16 %v3534, %v3521
    %v4445 = vpack.c.b16 %v3548, %v3535
    %v4446 = vpack.c.b16 %v3549, %v3536
    %v4447 = vpack.c.b16 %v3550, %v3537
    %v4448 = vpack.c.b16 %v3551, %v3538
    %v4449 = vpack.c.b16 %v3552, %v3539
    %v4450 = vpack.c.b16 %v3553, %v3540
    %v4451 = vpack.c.b16 %v3554, %v3541
    %v4452 = vpack.c.b16 %v3555, %v3542
    %v4453 = vpack.c.b16 %v3556, %v3543
    %v4454 = vpack.c.b16 %v3557, %v3544
    %v4455 = vpack.c.b16 %v3558, %v3545
    %v4456 = vpack.c.b16 %v3559, %v3546
    %v4457 = vpack.c.b16 %v3560, %v3547
    %v4458 = vpack.c.b16 %v3574, %v3561
    %v4459 = vpack.c.b16 %v3575, %v3562
    %v4460 = vpack.c.b16 %v3576, %v3563
    %v4461 = vpack.c.b16 %v3577, %v3564
    %v4462 = vpack.c.b16 %v3578, %v3565
    %v4463 = vpack.c.b16 %v3579, %v3566
    %v4464 = vpack.c.b16 %v3580, %v3567
    %v4465 = vpack.c.b16 %v3581, %v3568
    %v4466 = vpack.c.b16 %v3582, %v3569
    %v4467 = vpack.c.b16 %v3583, %v3570
    %v4468 = vpack.c.b16 %v3584, %v3571
    %v4469 = vpack.c.b16 %v3585, %v3572
    %v4470 = vpack.c.b16 %v3586, %v3573
    %v4471 = vpack.c.b16 %v3600, %v3587
    %v4472 = vpack.c.b16 %v3601, %v3588
    %v4473 = vpack.c.b16 %v3602, %v3589
    %v4474 = vpack.c.b16 %v3603, %v3590
    %v4475 = vpack.c.b16 %v3604, %v3591
    %v4476 = vpack.c.b16 %v3605, %v3592
    %v4477 = vpack.c.b16 %v3606, %v3593
    %v4478 = vpack.c.b16 %v3607, %v3594
    %v4479 = vpack.c.b16 %v3608, %v3595
    %v4480 = vpack.c.b16 %v3609, %v3596
    %v4481 = vpack.c.b16 %v3610, %v3597
    %v4482 = vpack.c.b16 %v3611, %v3598
    %v4483 = vpack.c.b16 %v3612, %v3599
    %v4484 = vpack.c.b16 %v3626, %v3613
    %v4485 = vpack.c.b16 %v3627, %v3614
    %v4486 = vpack.c.b16 %v3628, %v3615
    %v4487 = vpack.c.b16 %v3629, %v3616
    %v4488 = vpack.c.b16 %v3630, %v3617
    %v4489 = vpack.c.b16 %v3631, %v3618
    %v4490 = vpack.c.b16 %v3632, %v3619
    %v4491 = vpack.c.b16 %v3633, %v3620
    %v4492 = vpack.c.b16 %v3634, %v3621
    %v4493 = vpack.c.b16 %v3635, %v3622
    %v4494 = vpack.c.b16 %v3636, %v3623
    %v4495 = vpack.c.b16 %v3637, %v3624
    %v4496 = vpack.c.b16 %v3638, %v3625
    %v4497 = vpack.c.b16 %v3652, %v3639
    %v4498 = vpack.c.b16 %v3653, %v3640
    %v4499 = vpack.c.b16 %v3654, %v3641
    %v4500 = vpack.c.b16 %v3655, %v3642
    %v4501 = vpack.c.b16 %v3656, %v3643
    %v4502 = vpack.c.b16 %v3657, %v3644
    %v4503 = vpack.c.b16 %v3658, %v3645
    %v4504 = vpack.c.b16 %v3659, %v3646
    %v4505 = vpack.c.b16 %v3660, %v3647
    %v4506 = vpack.c.b16 %v3661, %v3648
    %v4507 = vpack.c.b16 %v3662, %v3649
    %v4508 = vpack.c.b16 %v3663, %v3650
    %v4509 = vpack.c.b16 %v3664, %v3651
    %v4510 = vpack.c.b16 %v3678, %v3665
    %v4511 = vpack.c.b16 %v3679, %v3666
    %v4512 = vpack.c.b16 %v3680, %v3667
    %v4513 = vpack.c.b16 %v3681, %v3668
    %v4514 = vpack.c.b16 %v3682, %v3669
    %v4515 = vpack.c.b16 %v3683, %v3670
    %v4516 = vpack.c.b16 %v3684, %v3671
    %v4517 = vpack.c.b16 %v3685, %v3672
    %v4518 = vpack.c.b16 %v3686, %v3673
    %v4519 = vpack.c.b16 %v3687, %v3674
    %v4520 = vpack.c.b16 %v3688, %v3675
    %v4521 = vpack.c.b16 %v3689, %v3676
    %v4522 = vpack.c.b16 %v3690, %v3677
    %5355 = vmatprep.subr.bf16.mxu0 %v3692
    %5356 = vmatpush1.bf16.msra.mxu0 %v3691
    %5357 = vmatprep.subr.bf16.mxu0 %v3705
    %5358 = vmatpush1.bf16.msra.mxu0 %v3704
    %5359 = vmatprep.subr.bf16.mxu0 %v3718
    %5360 = vmatpush1.bf16.msra.mxu0 %v3717
    %5361 = vmatprep.subr.bf16.mxu0 %v3731
    %5362 = vmatpush1.bf16.msra.mxu0 %v3730
    %5363 = vmatprep.subr.bf16.mxu0 %v3744
    %5364 = vmatpush1.bf16.msra.mxu0 %v3743
    %5365 = vmatprep.subr.bf16.mxu0 %v3757
    %5366 = vmatpush1.bf16.msra.mxu0 %v3756
    %5367 = vmatprep.subr.bf16.mxu0 %v3770
    %5368 = vmatpush1.bf16.msra.mxu0 %v3769
    %5369 = vmatprep.subr.bf16.mxu0 %v3783
    %5370 = vmatpush1.bf16.msra.mxu0 %v3782
    %5371 = vmatprep.subr.bf16.mxu0 %v3796
    %5372 = vmatpush1.bf16.msra.mxu0 %v3795
    %5373 = vmatprep.subr.bf16.mxu0 %v3809
    %5374 = vmatpush1.bf16.msra.mxu0 %v3808
    %5375 = vmatprep.subr.bf16.mxu0 %v3822
    %5376 = vmatpush1.bf16.msra.mxu0 %v3821
    %5377 = vmatprep.subr.bf16.mxu0 %v3835
    %5378 = vmatpush1.bf16.msra.mxu0 %v3834
    %5379 = vmatprep.subr.bf16.mxu0 %v3848
    %5380 = vmatpush1.bf16.msra.mxu0 %v3847
    %5381 = vmatprep.subr.bf16.mxu0 %v3861
    %5382 = vmatpush1.bf16.msra.mxu0 %v3860
    %5383 = vmatprep.subr.bf16.mxu0 %v3874
    %5384 = vmatpush1.bf16.msra.mxu0 %v3873
    %5385 = vmatprep.subr.bf16.mxu0 %v3887
    %5386 = vmatpush1.bf16.msra.mxu0 %v3886
    %5387 = vmatprep.mubr.bf16.mxu0 %v159
    %5388 = vmatmul.mubr.bf16.gmra.mrb[0].mxu0 %v158
    %v5389 = vpop.f32.mrb[0].mxu0
    %v5390 = vadd.f32 %v1069, %v5389
    %v5391 = vpop.f32.mrb[0].mxu0
    %v5392 = vadd.f32 %v1073, %v5391
    %v5393 = vpop.f32.mrb[0].mxu0
    %v5394 = vpop.f32.mrb[0].mxu0
    %5395 = vdwg.mxu0
    %5396 = vmatprep.subr.bf16.mxu0 %v3900
    %5397 = vmatpush1.bf16.msra.mxu0 %v3899
    %5398 = vmatprep.subr.bf16.mxu0 %v3913
    %5399 = vmatpush1.bf16.msra.mxu0 %v3912
    %5400 = vmatprep.subr.bf16.mxu0 %v3926
    %5401 = vmatpush1.bf16.msra.mxu0 %v3925
    %5402 = vmatprep.subr.bf16.mxu0 %v3939
    %5403 = vmatpush1.bf16.msra.mxu0 %v3938
    %5404 = vmatprep.subr.bf16.mxu0 %v3952
    %5405 = vmatpush1.bf16.msra.mxu0 %v3951
    %5406 = vmatprep.subr.bf16.mxu0 %v3965
    %5407 = vmatpush1.bf16.msra.mxu0 %v3964
    %5408 = vmatprep.subr.bf16.mxu0 %v3978
    %5409 = vmatpush1.bf16.msra.mxu0 %v3977
    %5410 = vmatprep.subr.bf16.mxu0 %v3991
    %5411 = vmatpush1.bf16.msra.mxu0 %v3990
    %5412 = vmatprep.subr.bf16.mxu0 %v4004
    %5413 = vmatpush1.bf16.msra.mxu0 %v4003
    %5414 = vmatprep.subr.bf16.mxu0 %v4017
    %5415 = vmatpush1.bf16.msra.mxu0 %v4016
    %5416 = vmatprep.subr.bf16.mxu0 %v4030
    %5417 = vmatpush1.bf16.msra.mxu0 %v4029
    %5418 = vmatprep.subr.bf16.mxu0 %v4043
    %5419 = vmatpush1.bf16.msra.mxu0 %v4042
    %5420 = vmatprep.subr.bf16.mxu0 %v4056
    %5421 = vmatpush1.bf16.msra.mxu0 %v4055
    %5422 = vmatprep.subr.bf16.mxu0 %v4069
    %5423 = vmatpush1.bf16.msra.mxu0 %v4068
    %5424 = vmatprep.subr.bf16.mxu0 %v4082
    %5425 = vmatpush1.bf16.msra.mxu0 %v4081
    %5426 = vmatprep.subr.bf16.mxu0 %v4095
    %5427 = vmatpush1.bf16.msra.mxu0 %v4094
    %5428 = vmatprep.mubr.bf16.mxu0 %v161
    %5429 = vmatmul.mubr.bf16.gmra.mrb[0].mxu0 %v160
    %v5430 = vpop.f32.mrb[0].mxu0
    %v5431 = vadd.f32 %v5390, %v5430
    %v5432 = vpop.f32.mrb[0].mxu0
    %v5433 = vadd.f32 %v5392, %v5432
    %v5434 = vpop.f32.mrb[0].mxu0
    %v5435 = vpop.f32.mrb[0].mxu0
    %5436 = vdwg.mxu0
    %5437 = vmatprep.subr.bf16.mxu0 %v4108
    %5438 = vmatpush1.bf16.msra.mxu0 %v4107
    %5439 = vmatprep.subr.bf16.mxu0 %v4121
    %5440 = vmatpush1.bf16.msra.mxu0 %v4120
    %5441 = vmatprep.subr.bf16.mxu0 %v4134
    %5442 = vmatpush1.bf16.msra.mxu0 %v4133
    %5443 = vmatprep.subr.bf16.mxu0 %v4147
    %5444 = vmatpush1.bf16.msra.mxu0 %v4146
    %5445 = vmatprep.subr.bf16.mxu0 %v4160
    %5446 = vmatpush1.bf16.msra.mxu0 %v4159
    %5447 = vmatprep.subr.bf16.mxu0 %v4173
    %5448 = vmatpush1.bf16.msra.mxu0 %v4172
    %5449 = vmatprep.subr.bf16.mxu0 %v4186
    %5450 = vmatpush1.bf16.msra.mxu0 %v4185
    %5451 = vmatprep.subr.bf16.mxu0 %v4199
    %5452 = vmatpush1.bf16.msra.mxu0 %v4198
    %5453 = vmatprep.subr.bf16.mxu0 %v4212
    %5454 = vmatpush1.bf16.msra.mxu0 %v4211
    %5455 = vmatprep.subr.bf16.mxu0 %v4225
    %5456 = vmatpush1.bf16.msra.mxu0 %v4224
    %5457 = vmatprep.subr.bf16.mxu0 %v4238
    %5458 = vmatpush1.bf16.msra.mxu0 %v4237
    %5459 = vmatprep.subr.bf16.mxu0 %v4251
    %5460 = vmatpush1.bf16.msra.mxu0 %v4250
    %5461 = vmatprep.subr.bf16.mxu0 %v4264
    %5462 = vmatpush1.bf16.msra.mxu0 %v4263
    %5463 = vmatprep.subr.bf16.mxu0 %v4277
    %5464 = vmatpush1.bf16.msra.mxu0 %v4276
    %5465 = vmatprep.subr.bf16.mxu0 %v4290
    %5466 = vmatpush1.bf16.msra.mxu0 %v4289
    %5467 = vmatprep.subr.bf16.mxu0 %v4303
    %5468 = vmatpush1.bf16.msra.mxu0 %v4302
    %5469 = vmatprep.mubr.bf16.mxu0 %v163
    %5470 = vmatmul.mubr.bf16.gmra.mrb[0].mxu0 %v162
    %v5471 = vpop.f32.mrb[0].mxu0
    %v5472 = vadd.f32 %v5431, %v5471
    %v5473 = vpop.f32.mrb[0].mxu0
    %v5474 = vadd.f32 %v5433, %v5473
    %v5475 = vpop.f32.mrb[0].mxu0
    %v5476 = vpop.f32.mrb[0].mxu0
    %5477 = vdwg.mxu0
    %5478 = vmatprep.subr.bf16.mxu0 %v4316
    %5479 = vmatpush1.bf16.msra.mxu0 %v4315
    %5480 = vmatprep.subr.bf16.mxu0 %v4329
    %5481 = vmatpush1.bf16.msra.mxu0 %v4328
    %5482 = vmatprep.subr.bf16.mxu0 %v4342
    %5483 = vmatpush1.bf16.msra.mxu0 %v4341
    %5484 = vmatprep.subr.bf16.mxu0 %v4355
    %5485 = vmatpush1.bf16.msra.mxu0 %v4354
    %5486 = vmatprep.subr.bf16.mxu0 %v4368
    %5487 = vmatpush1.bf16.msra.mxu0 %v4367
    %5488 = vmatprep.subr.bf16.mxu0 %v4381
    %5489 = vmatpush1.bf16.msra.mxu0 %v4380
    %5490 = vmatprep.subr.bf16.mxu0 %v4394
    %5491 = vmatpush1.bf16.msra.mxu0 %v4393
    %5492 = vmatprep.subr.bf16.mxu0 %v4407
    %5493 = vmatpush1.bf16.msra.mxu0 %v4406
    %5494 = vmatprep.subr.bf16.mxu0 %v4420
    %5495 = vmatpush1.bf16.msra.mxu0 %v4419
    %5496 = vmatprep.subr.bf16.mxu0 %v4433
    %5497 = vmatpush1.bf16.msra.mxu0 %v4432
    %5498 = vmatprep.subr.bf16.mxu0 %v4446
    %5499 = vmatpush1.bf16.msra.mxu0 %v4445
    %5500 = vmatprep.subr.bf16.mxu0 %v4459
    %5501 = vmatpush1.bf16.msra.mxu0 %v4458
    %5502 = vmatprep.subr.bf16.mxu0 %v4472
    %5503 = vmatpush1.bf16.msra.mxu0 %v4471
    %5504 = vmatprep.subr.bf16.mxu0 %v4485
    %5505 = vmatpush1.bf16.msra.mxu0 %v4484
    %5506 = vmatprep.subr.bf16.mxu0 %v4498
    %5507 = vmatpush1.bf16.msra.mxu0 %v4497
    %5508 = vmatprep.subr.bf16.mxu0 %v4511
    %5509 = vmatpush1.bf16.msra.mxu0 %v4510
    %5510 = vmatprep.mubr.bf16.mxu0 %v165
    %5511 = vmatmul.mubr.bf16.gmra.mrb[0].mxu0 %v164
    %v5512 = vpop.f32.mrb[0].mxu0
    %v5513 = vadd.f32 %v5472, %v5512
    %v5514 = vpop.f32.mrb[0].mxu0
    %v5515 = vadd.f32 %v5474, %v5514
    %v5516 = vpop.f32.mrb[0].mxu0
    %v5517 = vpop.f32.mrb[0].mxu0
    %5518 = vdwg.mxu0
    %5519 = vmatprep.subr.bf16.mxu0 %v3694
    %5520 = vmatpush1.bf16.msra.mxu0 %v3693
    %5521 = vmatprep.subr.bf16.mxu0 %v3707
    %5522 = vmatpush1.bf16.msra.mxu0 %v3706
    %5523 = vmatprep.subr.bf16.mxu0 %v3720
    %5524 = vmatpush1.bf16.msra.mxu0 %v3719
    %5525 = vmatprep.subr.bf16.mxu0 %v3733
    %5526 = vmatpush1.bf16.msra.mxu0 %v3732
    %5527 = vmatprep.subr.bf16.mxu0 %v3746
    %5528 = vmatpush1.bf16.msra.mxu0 %v3745
    %5529 = vmatprep.subr.bf16.mxu0 %v3759
    %5530 = vmatpush1.bf16.msra.mxu0 %v3758
    %5531 = vmatprep.subr.bf16.mxu0 %v3772
    %5532 = vmatpush1.bf16.msra.mxu0 %v3771
    %5533 = vmatprep.subr.bf16.mxu0 %v3785
    %5534 = vmatpush1.bf16.msra.mxu0 %v3784
    %5535 = vmatprep.subr.bf16.mxu0 %v3798
    %5536 = vmatpush1.bf16.msra.mxu0 %v3797
    %5537 = vmatprep.subr.bf16.mxu0 %v3811
    %5538 = vmatpush1.bf16.msra.mxu0 %v3810
    %5539 = vmatprep.subr.bf16.mxu0 %v3824
    %5540 = vmatpush1.bf16.msra.mxu0 %v3823
    %5541 = vmatprep.subr.bf16.mxu0 %v3837
    %5542 = vmatpush1.bf16.msra.mxu0 %v3836
    %5543 = vmatprep.subr.bf16.mxu0 %v3850
    %5544 = vmatpush1.bf16.msra.mxu0 %v3849
    %5545 = vmatprep.subr.bf16.mxu0 %v3863
    %5546 = vmatpush1.bf16.msra.mxu0 %v3862
    %5547 = vmatprep.subr.bf16.mxu0 %v3876
    %5548 = vmatpush1.bf16.msra.mxu0 %v3875
    %5549 = vmatprep.subr.bf16.mxu0 %v3889
    %5550 = vmatpush1.bf16.msra.mxu0 %v3888
    %5551 = vmatprep.mubr.bf16.mxu0 %v159
    %5552 = vmatmul.mubr.bf16.gmra.mrb[0].mxu0 %v158
    %v5553 = vpop.f32.mrb[0].mxu0
    %v5554 = vadd.f32 %v1077, %v5553
    %v5555 = vpop.f32.mrb[0].mxu0
    %v5556 = vadd.f32 %v1081, %v5555
    %v5557 = vpop.f32.mrb[0].mxu0
    %v5558 = vpop.f32.mrb[0].mxu0
    %5559 = vdwg.mxu0
    %5560 = vmatprep.subr.bf16.mxu0 %v3902
    %5561 = vmatpush1.bf16.msra.mxu0 %v3901
    %5562 = vmatprep.subr.bf16.mxu0 %v3915
    %5563 = vmatpush1.bf16.msra.mxu0 %v3914
    %5564 = vmatprep.subr.bf16.mxu0 %v3928
    %5565 = vmatpush1.bf16.msra.mxu0 %v3927
    %5566 = vmatprep.subr.bf16.mxu0 %v3941
    %5567 = vmatpush1.bf16.msra.mxu0 %v3940
    %5568 = vmatprep.subr.bf16.mxu0 %v3954
    %5569 = vmatpush1.bf16.msra.mxu0 %v3953
    %5570 = vmatprep.subr.bf16.mxu0 %v3967
    %5571 = vmatpush1.bf16.msra.mxu0 %v3966
    %5572 = vmatprep.subr.bf16.mxu0 %v3980
    %5573 = vmatpush1.bf16.msra.mxu0 %v3979
    %5574 = vmatprep.subr.bf16.mxu0 %v3993
    %5575 = vmatpush1.bf16.msra.mxu0 %v3992
    %5576 = vmatprep.subr.bf16.mxu0 %v4006
    %5577 = vmatpush1.bf16.msra.mxu0 %v4005
    %5578 = vmatprep.subr.bf16.mxu0 %v4019
    %5579 = vmatpush1.bf16.msra.mxu0 %v4018
    %5580 = vmatprep.subr.bf16.mxu0 %v4032
    %5581 = vmatpush1.bf16.msra.mxu0 %v4031
    %5582 = vmatprep.subr.bf16.mxu0 %v4045
    %5583 = vmatpush1.bf16.msra.mxu0 %v4044
    %5584 = vmatprep.subr.bf16.mxu0 %v4058
    %5585 = vmatpush1.bf16.msra.mxu0 %v4057
    %5586 = vmatprep.subr.bf16.mxu0 %v4071
    %5587 = vmatpush1.bf16.msra.mxu0 %v4070
    %5588 = vmatprep.subr.bf16.mxu0 %v4084
    %5589 = vmatpush1.bf16.msra.mxu0 %v4083
    %5590 = vmatprep.subr.bf16.mxu0 %v4097
    %5591 = vmatpush1.bf16.msra.mxu0 %v4096
    %5592 = vmatprep.mubr.bf16.mxu0 %v161
    %5593 = vmatmul.mubr.bf16.gmra.mrb[0].mxu0 %v160
    %v5594 = vpop.f32.mrb[0].mxu0
    %v5595 = vadd.f32 %v5554, %v5594
    %v5596 = vpop.f32.mrb[0].mxu0
    %v5597 = vadd.f32 %v5556, %v5596
    %v5598 = vpop.f32.mrb[0].mxu0
    %v5599 = vpop.f32.mrb[0].mxu0
    %5600 = vdwg.mxu0
    %5601 = vmatprep.subr.bf16.mxu0 %v4110
    %5602 = vmatpush1.bf16.msra.mxu0 %v4109
    %5603 = vmatprep.subr.bf16.mxu0 %v4123
    %5604 = vmatpush1.bf16.msra.mxu0 %v4122
    %5605 = vmatprep.subr.bf16.mxu0 %v4136
    %5606 = vmatpush1.bf16.msra.mxu0 %v4135
    %5607 = vmatprep.subr.bf16.mxu0 %v4149
    %5608 = vmatpush1.bf16.msra.mxu0 %v4148
    %5609 = vmatprep.subr.bf16.mxu0 %v4162
    %5610 = vmatpush1.bf16.msra.mxu0 %v4161
    %5611 = vmatprep.subr.bf16.mxu0 %v4175
    %5612 = vmatpush1.bf16.msra.mxu0 %v4174
    %5613 = vmatprep.subr.bf16.mxu0 %v4188
    %5614 = vmatpush1.bf16.msra.mxu0 %v4187
    %5615 = vmatprep.subr.bf16.mxu0 %v4201
    %5616 = vmatpush1.bf16.msra.mxu0 %v4200
    %5617 = vmatprep.subr.bf16.mxu0 %v4214
    %5618 = vmatpush1.bf16.msra.mxu0 %v4213
    %5619 = vmatprep.subr.bf16.mxu0 %v4227
    %5620 = vmatpush1.bf16.msra.mxu0 %v4226
    %5621 = vmatprep.subr.bf16.mxu0 %v4240
    %5622 = vmatpush1.bf16.msra.mxu0 %v4239
    %5623 = vmatprep.subr.bf16.mxu0 %v4253
    %5624 = vmatpush1.bf16.msra.mxu0 %v4252
    %5625 = vmatprep.subr.bf16.mxu0 %v4266
    %5626 = vmatpush1.bf16.msra.mxu0 %v4265
    %5627 = vmatprep.subr.bf16.mxu0 %v4279
    %5628 = vmatpush1.bf16.msra.mxu0 %v4278
    %5629 = vmatprep.subr.bf16.mxu0 %v4292
    %5630 = vmatpush1.bf16.msra.mxu0 %v4291
    %5631 = vmatprep.subr.bf16.mxu0 %v4305
    %5632 = vmatpush1.bf16.msra.mxu0 %v4304
    %5633 = vmatprep.mubr.bf16.mxu0 %v163
    %5634 = vmatmul.mubr.bf16.gmra.mrb[0].mxu0 %v162
    %v5635 = vpop.f32.mrb[0].mxu0
    %v5636 = vadd.f32 %v5595, %v5635
    %v5637 = vpop.f32.mrb[0].mxu0
    %v5638 = vadd.f32 %v5597, %v5637
    %v5639 = vpop.f32.mrb[0].mxu0
    %v5640 = vpop.f32.mrb[0].mxu0
    %5641 = vdwg.mxu0
    %5642 = vmatprep.subr.bf16.mxu0 %v4318
    %5643 = vmatpush1.bf16.msra.mxu0 %v4317
    %5644 = vmatprep.subr.bf16.mxu0 %v4331
    %5645 = vmatpush1.bf16.msra.mxu0 %v4330
    %5646 = vmatprep.subr.bf16.mxu0 %v4344
    %5647 = vmatpush1.bf16.msra.mxu0 %v4343
    %5648 = vmatprep.subr.bf16.mxu0 %v4357
    %5649 = vmatpush1.bf16.msra.mxu0 %v4356
    %5650 = vmatprep.subr.bf16.mxu0 %v4370
    %5651 = vmatpush1.bf16.msra.mxu0 %v4369
    %5652 = vmatprep.subr.bf16.mxu0 %v4383
    %5653 = vmatpush1.bf16.msra.mxu0 %v4382
    %5654 = vmatprep.subr.bf16.mxu0 %v4396
    %5655 = vmatpush1.bf16.msra.mxu0 %v4395
    %5656 = vmatprep.subr.bf16.mxu0 %v4409
    %5657 = vmatpush1.bf16.msra.mxu0 %v4408
    %5658 = vmatprep.subr.bf16.mxu0 %v4422
    %5659 = vmatpush1.bf16.msra.mxu0 %v4421
    %5660 = vmatprep.subr.bf16.mxu0 %v4435
    %5661 = vmatpush1.bf16.msra.mxu0 %v4434
    %5662 = vmatprep.subr.bf16.mxu0 %v4448
    %5663 = vmatpush1.bf16.msra.mxu0 %v4447
    %5664 = vmatprep.subr.bf16.mxu0 %v4461
    %5665 = vmatpush1.bf16.msra.mxu0 %v4460
    %5666 = vmatprep.subr.bf16.mxu0 %v4474
    %5667 = vmatpush1.bf16.msra.mxu0 %v4473
    %5668 = vmatprep.subr.bf16.mxu0 %v4487
    %5669 = vmatpush1.bf16.msra.mxu0 %v4486
    %5670 = vmatprep.subr.bf16.mxu0 %v4500
    %5671 = vmatpush1.bf16.msra.mxu0 %v4499
    %5672 = vmatprep.subr.bf16.mxu0 %v4513
    %5673 = vmatpush1.bf16.msra.mxu0 %v4512
    %5674 = vmatprep.mubr.bf16.mxu0 %v165
    %5675 = vmatmul.mubr.bf16.gmra.mrb[0].mxu0 %v164
    %v5676 = vpop.f32.mrb[0].mxu0
    %v5677 = vadd.f32 %v5636, %v5676
    %v5678 = vpop.f32.mrb[0].mxu0
    %v5679 = vadd.f32 %v5638, %v5678
    %v5680 = vpop.f32.mrb[0].mxu0
    %v5681 = vpop.f32.mrb[0].mxu0
    %5682 = vdwg.mxu0
    %5683 = vmatprep.subr.bf16.mxu0 %v3696
    %5684 = vmatpush1.bf16.msra.mxu0 %v3695
    %5685 = vmatprep.subr.bf16.mxu0 %v3709
    %5686 = vmatpush1.bf16.msra.mxu0 %v3708
    %5687 = vmatprep.subr.bf16.mxu0 %v3722
    %5688 = vmatpush1.bf16.msra.mxu0 %v3721
    %5689 = vmatprep.subr.bf16.mxu0 %v3735
    %5690 = vmatpush1.bf16.msra.mxu0 %v3734
    %5691 = vmatprep.subr.bf16.mxu0 %v3748
    %5692 = vmatpush1.bf16.msra.mxu0 %v3747
    %5693 = vmatprep.subr.bf16.mxu0 %v3761
    %5694 = vmatpush1.bf16.msra.mxu0 %v3760
    %5695 = vmatprep.subr.bf16.mxu0 %v3774
    %5696 = vmatpush1.bf16.msra.mxu0 %v3773
    %5697 = vmatprep.subr.bf16.mxu0 %v3787
    %5698 = vmatpush1.bf16.msra.mxu0 %v3786
    %5699 = vmatprep.subr.bf16.mxu0 %v3800
    %5700 = vmatpush1.bf16.msra.mxu0 %v3799
    %5701 = vmatprep.subr.bf16.mxu0 %v3813
    %5702 = vmatpush1.bf16.msra.mxu0 %v3812
    %5703 = vmatprep.subr.bf16.mxu0 %v3826
    %5704 = vmatpush1.bf16.msra.mxu0 %v3825
    %5705 = vmatprep.subr.bf16.mxu0 %v3839
    %5706 = vmatpush1.bf16.msra.mxu0 %v3838
    %5707 = vmatprep.subr.bf16.mxu0 %v3852
    %5708 = vmatpush1.bf16.msra.mxu0 %v3851
    %5709 = vmatprep.subr.bf16.mxu0 %v3865
    %5710 = vmatpush1.bf16.msra.mxu0 %v3864
    %5711 = vmatprep.subr.bf16.mxu0 %v3878
    %5712 = vmatpush1.bf16.msra.mxu0 %v3877
    %5713 = vmatprep.subr.bf16.mxu0 %v3891
    %5714 = vmatpush1.bf16.msra.mxu0 %v3890
    %5715 = vmatprep.mubr.bf16.mxu0 %v159
    %5716 = vmatmul.mubr.bf16.gmra.mrb[0].mxu0 %v158
    %v5717 = vpop.f32.mrb[0].mxu0
    %v5718 = vadd.f32 %v1085, %v5717
    %v5719 = vpop.f32.mrb[0].mxu0
    %v5720 = vadd.f32 %v1089, %v5719
    %v5721 = vpop.f32.mrb[0].mxu0
    %v5722 = vpop.f32.mrb[0].mxu0
    %5723 = vdwg.mxu0
    %5724 = vmatprep.subr.bf16.mxu0 %v3904
    %5725 = vmatpush1.bf16.msra.mxu0 %v3903
    %5726 = vmatprep.subr.bf16.mxu0 %v3917
    %5727 = vmatpush1.bf16.msra.mxu0 %v3916
    %5728 = vmatprep.subr.bf16.mxu0 %v3930
    %5729 = vmatpush1.bf16.msra.mxu0 %v3929
    %5730 = vmatprep.subr.bf16.mxu0 %v3943
    %5731 = vmatpush1.bf16.msra.mxu0 %v3942
    %5732 = vmatprep.subr.bf16.mxu0 %v3956
    %5733 = vmatpush1.bf16.msra.mxu0 %v3955
    %5734 = vmatprep.subr.bf16.mxu0 %v3969
    %5735 = vmatpush1.bf16.msra.mxu0 %v3968
    %5736 = vmatprep.subr.bf16.mxu0 %v3982
    %5737 = vmatpush1.bf16.msra.mxu0 %v3981
    %5738 = vmatprep.subr.bf16.mxu0 %v3995
    %5739 = vmatpush1.bf16.msra.mxu0 %v3994
    %5740 = vmatprep.subr.bf16.mxu0 %v4008
    %5741 = vmatpush1.bf16.msra.mxu0 %v4007
    %5742 = vmatprep.subr.bf16.mxu0 %v4021
    %5743 = vmatpush1.bf16.msra.mxu0 %v4020
    %5744 = vmatprep.subr.bf16.mxu0 %v4034
    %5745 = vmatpush1.bf16.msra.mxu0 %v4033
    %5746 = vmatprep.subr.bf16.mxu0 %v4047
    %5747 = vmatpush1.bf16.msra.mxu0 %v4046
    %5748 = vmatprep.subr.bf16.mxu0 %v4060
    %5749 = vmatpush1.bf16.msra.mxu0 %v4059
    %5750 = vmatprep.subr.bf16.mxu0 %v4073
    %5751 = vmatpush1.bf16.msra.mxu0 %v4072
    %5752 = vmatprep.subr.bf16.mxu0 %v4086
    %5753 = vmatpush1.bf16.msra.mxu0 %v4085
    %5754 = vmatprep.subr.bf16.mxu0 %v4099
    %5755 = vmatpush1.bf16.msra.mxu0 %v4098
    %5756 = vmatprep.mubr.bf16.mxu0 %v161
    %5757 = vmatmul.mubr.bf16.gmra.mrb[0].mxu0 %v160
    %v5758 = vpop.f32.mrb[0].mxu0
    %v5759 = vadd.f32 %v5718, %v5758
    %v5760 = vpop.f32.mrb[0].mxu0
    %v5761 = vadd.f32 %v5720, %v5760
    %v5762 = vpop.f32.mrb[0].mxu0
    %v5763 = vpop.f32.mrb[0].mxu0
    %5764 = vdwg.mxu0
    %5765 = vmatprep.subr.bf16.mxu0 %v4112
    %5766 = vmatpush1.bf16.msra.mxu0 %v4111
    %5767 = vmatprep.subr.bf16.mxu0 %v4125
    %5768 = vmatpush1.bf16.msra.mxu0 %v4124
    %5769 = vmatprep.subr.bf16.mxu0 %v4138
    %5770 = vmatpush1.bf16.msra.mxu0 %v4137
    %5771 = vmatprep.subr.bf16.mxu0 %v4151
    %5772 = vmatpush1.bf16.msra.mxu0 %v4150
    %5773 = vmatprep.subr.bf16.mxu0 %v4164
    %5774 = vmatpush1.bf16.msra.mxu0 %v4163
    %5775 = vmatprep.subr.bf16.mxu0 %v4177
    %5776 = vmatpush1.bf16.msra.mxu0 %v4176
    %5777 = vmatprep.subr.bf16.mxu0 %v4190
    %5778 = vmatpush1.bf16.msra.mxu0 %v4189
    %5779 = vmatprep.subr.bf16.mxu0 %v4203
    %5780 = vmatpush1.bf16.msra.mxu0 %v4202
    %5781 = vmatprep.subr.bf16.mxu0 %v4216
    %5782 = vmatpush1.bf16.msra.mxu0 %v4215
    %5783 = vmatprep.subr.bf16.mxu0 %v4229
    %5784 = vmatpush1.bf16.msra.mxu0 %v4228
    %5785 = vmatprep.subr.bf16.mxu0 %v4242
    %5786 = vmatpush1.bf16.msra.mxu0 %v4241
    %5787 = vmatprep.subr.bf16.mxu0 %v4255
    %5788 = vmatpush1.bf16.msra.mxu0 %v4254
    %5789 = vmatprep.subr.bf16.mxu0 %v4268
    %5790 = vmatpush1.bf16.msra.mxu0 %v4267
    %5791 = vmatprep.subr.bf16.mxu0 %v4281
    %5792 = vmatpush1.bf16.msra.mxu0 %v4280
    %5793 = vmatprep.subr.bf16.mxu0 %v4294
    %5794 = vmatpush1.bf16.msra.mxu0 %v4293
    %5795 = vmatprep.subr.bf16.mxu0 %v4307
    %5796 = vmatpush1.bf16.msra.mxu0 %v4306
    %5797 = vmatprep.mubr.bf16.mxu0 %v163
    %5798 = vmatmul.mubr.bf16.gmra.mrb[0].mxu0 %v162
    %v5799 = vpop.f32.mrb[0].mxu0
    %v5800 = vadd.f32 %v5759, %v5799
    %v5801 = vpop.f32.mrb[0].mxu0
    %v5802 = vadd.f32 %v5761, %v5801
    %v5803 = vpop.f32.mrb[0].mxu0
    %v5804 = vpop.f32.mrb[0].mxu0
    %5805 = vdwg.mxu0
    %5806 = vmatprep.subr.bf16.mxu0 %v4320
    %5807 = vmatpush1.bf16.msra.mxu0 %v4319
    %5808 = vmatprep.subr.bf16.mxu0 %v4333
    %5809 = vmatpush1.bf16.msra.mxu0 %v4332
    %5810 = vmatprep.subr.bf16.mxu0 %v4346
    %5811 = vmatpush1.bf16.msra.mxu0 %v4345
    %5812 = vmatprep.subr.bf16.mxu0 %v4359
    %5813 = vmatpush1.bf16.msra.mxu0 %v4358
    %5814 = vmatprep.subr.bf16.mxu0 %v4372
    %5815 = vmatpush1.bf16.msra.mxu0 %v4371
    %5816 = vmatprep.subr.bf16.mxu0 %v4385
    %5817 = vmatpush1.bf16.msra.mxu0 %v4384
    %5818 = vmatprep.subr.bf16.mxu0 %v4398
    %5819 = vmatpush1.bf16.msra.mxu0 %v4397
    %5820 = vmatprep.subr.bf16.mxu0 %v4411
    %5821 = vmatpush1.bf16.msra.mxu0 %v4410
    %5822 = vmatprep.subr.bf16.mxu0 %v4424
    %5823 = vmatpush1.bf16.msra.mxu0 %v4423
    %5824 = vmatprep.subr.bf16.mxu0 %v4437
    %5825 = vmatpush1.bf16.msra.mxu0 %v4436
    %5826 = vmatprep.subr.bf16.mxu0 %v4450
    %5827 = vmatpush1.bf16.msra.mxu0 %v4449
    %5828 = vmatprep.subr.bf16.mxu0 %v4463
    %5829 = vmatpush1.bf16.msra.mxu0 %v4462
    %5830 = vmatprep.subr.bf16.mxu0 %v4476
    %5831 = vmatpush1.bf16.msra.mxu0 %v4475
    %5832 = vmatprep.subr.bf16.mxu0 %v4489
    %5833 = vmatpush1.bf16.msra.mxu0 %v4488
    %5834 = vmatprep.subr.bf16.mxu0 %v4502
    %5835 = vmatpush1.bf16.msra.mxu0 %v4501
    %5836 = vmatprep.subr.bf16.mxu0 %v4515
    %5837 = vmatpush1.bf16.msra.mxu0 %v4514
    %5838 = vmatprep.mubr.bf16.mxu0 %v165
    %5839 = vmatmul.mubr.bf16.gmra.mrb[0].mxu0 %v164
    %v5840 = vpop.f32.mrb[0].mxu0
    %v5841 = vadd.f32 %v5800, %v5840
    %v5842 = vpop.f32.mrb[0].mxu0
    %v5843 = vadd.f32 %v5802, %v5842
    %v5844 = vpop.f32.mrb[0].mxu0
    %v5845 = vpop.f32.mrb[0].mxu0
    %5846 = vdwg.mxu0
    %5847 = vmatprep.subr.bf16.mxu0 %v3698
    %5848 = vmatpush1.bf16.msra.mxu0 %v3697
    %5849 = vmatprep.subr.bf16.mxu0 %v3711
    %5850 = vmatpush1.bf16.msra.mxu0 %v3710
    %5851 = vmatprep.subr.bf16.mxu0 %v3724
    %5852 = vmatpush1.bf16.msra.mxu0 %v3723
    %5853 = vmatprep.subr.bf16.mxu0 %v3737
    %5854 = vmatpush1.bf16.msra.mxu0 %v3736
    %5855 = vmatprep.subr.bf16.mxu0 %v3750
    %5856 = vmatpush1.bf16.msra.mxu0 %v3749
    %5857 = vmatprep.subr.bf16.mxu0 %v3763
    %5858 = vmatpush1.bf16.msra.mxu0 %v3762
    %5859 = vmatprep.subr.bf16.mxu0 %v3776
    %5860 = vmatpush1.bf16.msra.mxu0 %v3775
    %5861 = vmatprep.subr.bf16.mxu0 %v3789
    %5862 = vmatpush1.bf16.msra.mxu0 %v3788
    %5863 = vmatprep.subr.bf16.mxu0 %v3802
    %5864 = vmatpush1.bf16.msra.mxu0 %v3801
    %5865 = vmatprep.subr.bf16.mxu0 %v3815
    %5866 = vmatpush1.bf16.msra.mxu0 %v3814
    %5867 = vmatprep.subr.bf16.mxu0 %v3828
    %5868 = vmatpush1.bf16.msra.mxu0 %v3827
    %5869 = vmatprep.subr.bf16.mxu0 %v3841
    %5870 = vmatpush1.bf16.msra.mxu0 %v3840
    %5871 = vmatprep.subr.bf16.mxu0 %v3854
    %5872 = vmatpush1.bf16.msra.mxu0 %v3853
    %5873 = vmatprep.subr.bf16.mxu0 %v3867
    %5874 = vmatpush1.bf16.msra.mxu0 %v3866
    %5875 = vmatprep.subr.bf16.mxu0 %v3880
    %5876 = vmatpush1.bf16.msra.mxu0 %v3879
    %5877 = vmatprep.subr.bf16.mxu0 %v3893
    %5878 = vmatpush1.bf16.msra.mxu0 %v3892
    %5879 = vmatprep.mubr.bf16.mxu0 %v159
    %5880 = vmatmul.mubr.bf16.gmra.mrb[0].mxu0 %v158
    %v5881 = vpop.f32.mrb[0].mxu0
    %v5882 = vadd.f32 %v1093, %v5881
    %v5883 = vpop.f32.mrb[0].mxu0
    %v5884 = vadd.f32 %v1097, %v5883
    %v5885 = vpop.f32.mrb[0].mxu0
    %v5886 = vpop.f32.mrb[0].mxu0
    %5887 = vdwg.mxu0
    %5888 = vmatprep.subr.bf16.mxu0 %v3906
    %5889 = vmatpush1.bf16.msra.mxu0 %v3905
    %5890 = vmatprep.subr.bf16.mxu0 %v3919
    %5891 = vmatpush1.bf16.msra.mxu0 %v3918
    %5892 = vmatprep.subr.bf16.mxu0 %v3932
    %5893 = vmatpush1.bf16.msra.mxu0 %v3931
    %5894 = vmatprep.subr.bf16.mxu0 %v3945
    %5895 = vmatpush1.bf16.msra.mxu0 %v3944
    %5896 = vmatprep.subr.bf16.mxu0 %v3958
    %5897 = vmatpush1.bf16.msra.mxu0 %v3957
    %5898 = vmatprep.subr.bf16.mxu0 %v3971
    %5899 = vmatpush1.bf16.msra.mxu0 %v3970
    %5900 = vmatprep.subr.bf16.mxu0 %v3984
    %5901 = vmatpush1.bf16.msra.mxu0 %v3983
    %5902 = vmatprep.subr.bf16.mxu0 %v3997
    %5903 = vmatpush1.bf16.msra.mxu0 %v3996
    %5904 = vmatprep.subr.bf16.mxu0 %v4010
    %5905 = vmatpush1.bf16.msra.mxu0 %v4009
    %5906 = vmatprep.subr.bf16.mxu0 %v4023
    %5907 = vmatpush1.bf16.msra.mxu0 %v4022
    %5908 = vmatprep.subr.bf16.mxu0 %v4036
    %5909 = vmatpush1.bf16.msra.mxu0 %v4035
    %5910 = vmatprep.subr.bf16.mxu0 %v4049
    %5911 = vmatpush1.bf16.msra.mxu0 %v4048
    %5912 = vmatprep.subr.bf16.mxu0 %v4062
    %5913 = vmatpush1.bf16.msra.mxu0 %v4061
    %5914 = vmatprep.subr.bf16.mxu0 %v4075
    %5915 = vmatpush1.bf16.msra.mxu0 %v4074
    %5916 = vmatprep.subr.bf16.mxu0 %v4088
    %5917 = vmatpush1.bf16.msra.mxu0 %v4087
    %5918 = vmatprep.subr.bf16.mxu0 %v4101
    %5919 = vmatpush1.bf16.msra.mxu0 %v4100
    %5920 = vmatprep.mubr.bf16.mxu0 %v161
    %5921 = vmatmul.mubr.bf16.gmra.mrb[0].mxu0 %v160
    %v5922 = vpop.f32.mrb[0].mxu0
    %v5923 = vadd.f32 %v5882, %v5922
    %v5924 = vpop.f32.mrb[0].mxu0
    %v5925 = vadd.f32 %v5884, %v5924
    %v5926 = vpop.f32.mrb[0].mxu0
    %v5927 = vpop.f32.mrb[0].mxu0
    %5928 = vdwg.mxu0
    %5929 = vmatprep.subr.bf16.mxu0 %v4114
    %5930 = vmatpush1.bf16.msra.mxu0 %v4113
    %5931 = vmatprep.subr.bf16.mxu0 %v4127
    %5932 = vmatpush1.bf16.msra.mxu0 %v4126
    %5933 = vmatprep.subr.bf16.mxu0 %v4140
    %5934 = vmatpush1.bf16.msra.mxu0 %v4139
    %5935 = vmatprep.subr.bf16.mxu0 %v4153
    %5936 = vmatpush1.bf16.msra.mxu0 %v4152
    %5937 = vmatprep.subr.bf16.mxu0 %v4166
    %5938 = vmatpush1.bf16.msra.mxu0 %v4165
    %5939 = vmatprep.subr.bf16.mxu0 %v4179
    %5940 = vmatpush1.bf16.msra.mxu0 %v4178
    %5941 = vmatprep.subr.bf16.mxu0 %v4192
    %5942 = vmatpush1.bf16.msra.mxu0 %v4191
    %5943 = vmatprep.subr.bf16.mxu0 %v4205
    %5944 = vmatpush1.bf16.msra.mxu0 %v4204
    %5945 = vmatprep.subr.bf16.mxu0 %v4218
    %5946 = vmatpush1.bf16.msra.mxu0 %v4217
    %5947 = vmatprep.subr.bf16.mxu0 %v4231
    %5948 = vmatpush1.bf16.msra.mxu0 %v4230
    %5949 = vmatprep.subr.bf16.mxu0 %v4244
    %5950 = vmatpush1.bf16.msra.mxu0 %v4243
    %5951 = vmatprep.subr.bf16.mxu0 %v4257
    %5952 = vmatpush1.bf16.msra.mxu0 %v4256
    %5953 = vmatprep.subr.bf16.mxu0 %v4270
    %5954 = vmatpush1.bf16.msra.mxu0 %v4269
    %5955 = vmatprep.subr.bf16.mxu0 %v4283
    %5956 = vmatpush1.bf16.msra.mxu0 %v4282
    %5957 = vmatprep.subr.bf16.mxu0 %v4296
    %5958 = vmatpush1.bf16.msra.mxu0 %v4295
    %5959 = vmatprep.subr.bf16.mxu0 %v4309
    %5960 = vmatpush1.bf16.msra.mxu0 %v4308
    %5961 = vmatprep.mubr.bf16.mxu0 %v163
    %5962 = vmatmul.mubr.bf16.gmra.mrb[0].mxu0 %v162
    %v5963 = vpop.f32.mrb[0].mxu0
    %v5964 = vadd.f32 %v5923, %v5963
    %v5965 = vpop.f32.mrb[0].mxu0
    %v5966 = vadd.f32 %v5925, %v5965
    %v5967 = vpop.f32.mrb[0].mxu0
    %v5968 = vpop.f32.mrb[0].mxu0
    %5969 = vdwg.mxu0
    %5970 = vmatprep.subr.bf16.mxu0 %v4322
    %5971 = vmatpush1.bf16.msra.mxu0 %v4321
    %5972 = vmatprep.subr.bf16.mxu0 %v4335
    %5973 = vmatpush1.bf16.msra.mxu0 %v4334
    %5974 = vmatprep.subr.bf16.mxu0 %v4348
    %5975 = vmatpush1.bf16.msra.mxu0 %v4347
    %5976 = vmatprep.subr.bf16.mxu0 %v4361
    %5977 = vmatpush1.bf16.msra.mxu0 %v4360
    %5978 = vmatprep.subr.bf16.mxu0 %v4374
    %5979 = vmatpush1.bf16.msra.mxu0 %v4373
    %5980 = vmatprep.subr.bf16.mxu0 %v4387
    %5981 = vmatpush1.bf16.msra.mxu0 %v4386
    %5982 = vmatprep.subr.bf16.mxu0 %v4400
    %5983 = vmatpush1.bf16.msra.mxu0 %v4399
    %5984 = vmatprep.subr.bf16.mxu0 %v4413
    %5985 = vmatpush1.bf16.msra.mxu0 %v4412
    %5986 = vmatprep.subr.bf16.mxu0 %v4426
    %5987 = vmatpush1.bf16.msra.mxu0 %v4425
    %5988 = vmatprep.subr.bf16.mxu0 %v4439
    %5989 = vmatpush1.bf16.msra.mxu0 %v4438
    %5990 = vmatprep.subr.bf16.mxu0 %v4452
    %5991 = vmatpush1.bf16.msra.mxu0 %v4451
    %5992 = vmatprep.subr.bf16.mxu0 %v4465
    %5993 = vmatpush1.bf16.msra.mxu0 %v4464
    %5994 = vmatprep.subr.bf16.mxu0 %v4478
    %5995 = vmatpush1.bf16.msra.mxu0 %v4477
    %5996 = vmatprep.subr.bf16.mxu0 %v4491
    %5997 = vmatpush1.bf16.msra.mxu0 %v4490
    %5998 = vmatprep.subr.bf16.mxu0 %v4504
    %5999 = vmatpush1.bf16.msra.mxu0 %v4503
    %6000 = vmatprep.subr.bf16.mxu0 %v4517
    %6001 = vmatpush1.bf16.msra.mxu0 %v4516
    %6002 = vmatprep.mubr.bf16.mxu0 %v165
    %6003 = vmatmul.mubr.bf16.gmra.mrb[0].mxu0 %v164
    %v6004 = vpop.f32.mrb[0].mxu0
    %v6005 = vadd.f32 %v5964, %v6004
    %v6006 = vpop.f32.mrb[0].mxu0
    %v6007 = vadd.f32 %v5966, %v6006
    %v6008 = vpop.f32.mrb[0].mxu0
    %v6009 = vpop.f32.mrb[0].mxu0
    %6010 = vdwg.mxu0
    %6011 = vmatprep.subr.bf16.mxu0 %v3700
    %6012 = vmatpush1.bf16.msra.mxu0 %v3699
    %6013 = vmatprep.subr.bf16.mxu0 %v3713
    %6014 = vmatpush1.bf16.msra.mxu0 %v3712
    %6015 = vmatprep.subr.bf16.mxu0 %v3726
    %6016 = vmatpush1.bf16.msra.mxu0 %v3725
    %6017 = vmatprep.subr.bf16.mxu0 %v3739
    %6018 = vmatpush1.bf16.msra.mxu0 %v3738
    %6019 = vmatprep.subr.bf16.mxu0 %v3752
    %6020 = vmatpush1.bf16.msra.mxu0 %v3751
    %6021 = vmatprep.subr.bf16.mxu0 %v3765
    %6022 = vmatpush1.bf16.msra.mxu0 %v3764
    %6023 = vmatprep.subr.bf16.mxu0 %v3778
    %6024 = vmatpush1.bf16.msra.mxu0 %v3777
    %6025 = vmatprep.subr.bf16.mxu0 %v3791
    %6026 = vmatpush1.bf16.msra.mxu0 %v3790
    %6027 = vmatprep.subr.bf16.mxu0 %v3804
    %6028 = vmatpush1.bf16.msra.mxu0 %v3803
    %6029 = vmatprep.subr.bf16.mxu0 %v3817
    %6030 = vmatpush1.bf16.msra.mxu0 %v3816
    %6031 = vmatprep.subr.bf16.mxu0 %v3830
    %6032 = vmatpush1.bf16.msra.mxu0 %v3829
    %6033 = vmatprep.subr.bf16.mxu0 %v3843
    %6034 = vmatpush1.bf16.msra.mxu0 %v3842
    %6035 = vmatprep.subr.bf16.mxu0 %v3856
    %6036 = vmatpush1.bf16.msra.mxu0 %v3855
    %6037 = vmatprep.subr.bf16.mxu0 %v3869
    %6038 = vmatpush1.bf16.msra.mxu0 %v3868
    %6039 = vmatprep.subr.bf16.mxu0 %v3882
    %6040 = vmatpush1.bf16.msra.mxu0 %v3881
    %6041 = vmatprep.subr.bf16.mxu0 %v3895
    %6042 = vmatpush1.bf16.msra.mxu0 %v3894
    %6043 = vmatprep.mubr.bf16.mxu0 %v159
    %6044 = vmatmul.mubr.bf16.gmra.mrb[0].mxu0 %v158
    %v6045 = vpop.f32.mrb[0].mxu0
    %v6046 = vadd.f32 %v1101, %v6045
    %v6047 = vpop.f32.mrb[0].mxu0
    %v6048 = vadd.f32 %v1105, %v6047
    %v6049 = vpop.f32.mrb[0].mxu0
    %v6050 = vpop.f32.mrb[0].mxu0
    %6051 = vdwg.mxu0
    %6052 = vmatprep.subr.bf16.mxu0 %v3908
    %6053 = vmatpush1.bf16.msra.mxu0 %v3907
    %6054 = vmatprep.subr.bf16.mxu0 %v3921
    %6055 = vmatpush1.bf16.msra.mxu0 %v3920
    %6056 = vmatprep.subr.bf16.mxu0 %v3934
    %6057 = vmatpush1.bf16.msra.mxu0 %v3933
    %6058 = vmatprep.subr.bf16.mxu0 %v3947
    %6059 = vmatpush1.bf16.msra.mxu0 %v3946
    %6060 = vmatprep.subr.bf16.mxu0 %v3960
    %6061 = vmatpush1.bf16.msra.mxu0 %v3959
    %6062 = vmatprep.subr.bf16.mxu0 %v3973
    %6063 = vmatpush1.bf16.msra.mxu0 %v3972
    %6064 = vmatprep.subr.bf16.mxu0 %v3986
    %6065 = vmatpush1.bf16.msra.mxu0 %v3985
    %6066 = vmatprep.subr.bf16.mxu0 %v3999
    %6067 = vmatpush1.bf16.msra.mxu0 %v3998
    %6068 = vmatprep.subr.bf16.mxu0 %v4012
    %6069 = vmatpush1.bf16.msra.mxu0 %v4011
    %6070 = vmatprep.subr.bf16.mxu0 %v4025
    %6071 = vmatpush1.bf16.msra.mxu0 %v4024
    %6072 = vmatprep.subr.bf16.mxu0 %v4038
    %6073 = vmatpush1.bf16.msra.mxu0 %v4037
    %6074 = vmatprep.subr.bf16.mxu0 %v4051
    %6075 = vmatpush1.bf16.msra.mxu0 %v4050
    %6076 = vmatprep.subr.bf16.mxu0 %v4064
    %6077 = vmatpush1.bf16.msra.mxu0 %v4063
    %6078 = vmatprep.subr.bf16.mxu0 %v4077
    %6079 = vmatpush1.bf16.msra.mxu0 %v4076
    %6080 = vmatprep.subr.bf16.mxu0 %v4090
    %6081 = vmatpush1.bf16.msra.mxu0 %v4089
    %6082 = vmatprep.subr.bf16.mxu0 %v4103
    %6083 = vmatpush1.bf16.msra.mxu0 %v4102
    %6084 = vmatprep.mubr.bf16.mxu0 %v161
    %6085 = vmatmul.mubr.bf16.gmra.mrb[0].mxu0 %v160
    %v6086 = vpop.f32.mrb[0].mxu0
    %v6087 = vadd.f32 %v6046, %v6086
    %v6088 = vpop.f32.mrb[0].mxu0
    %v6089 = vadd.f32 %v6048, %v6088
    %v6090 = vpop.f32.mrb[0].mxu0
    %v6091 = vpop.f32.mrb[0].mxu0
    %6092 = vdwg.mxu0
    %6093 = vmatprep.subr.bf16.mxu0 %v4116
    %6094 = vmatpush1.bf16.msra.mxu0 %v4115
    %6095 = vmatprep.subr.bf16.mxu0 %v4129
    %6096 = vmatpush1.bf16.msra.mxu0 %v4128
    %6097 = vmatprep.subr.bf16.mxu0 %v4142
    %6098 = vmatpush1.bf16.msra.mxu0 %v4141
    %6099 = vmatprep.subr.bf16.mxu0 %v4155
    %6100 = vmatpush1.bf16.msra.mxu0 %v4154
    %6101 = vmatprep.subr.bf16.mxu0 %v4168
    %6102 = vmatpush1.bf16.msra.mxu0 %v4167
    %6103 = vmatprep.subr.bf16.mxu0 %v4181
    %6104 = vmatpush1.bf16.msra.mxu0 %v4180
    %6105 = vmatprep.subr.bf16.mxu0 %v4194
    %6106 = vmatpush1.bf16.msra.mxu0 %v4193
    %6107 = vmatprep.subr.bf16.mxu0 %v4207
    %6108 = vmatpush1.bf16.msra.mxu0 %v4206
    %6109 = vmatprep.subr.bf16.mxu0 %v4220
    %6110 = vmatpush1.bf16.msra.mxu0 %v4219
    %6111 = vmatprep.subr.bf16.mxu0 %v4233
    %6112 = vmatpush1.bf16.msra.mxu0 %v4232
    %6113 = vmatprep.subr.bf16.mxu0 %v4246
    %6114 = vmatpush1.bf16.msra.mxu0 %v4245
    %6115 = vmatprep.subr.bf16.mxu0 %v4259
    %6116 = vmatpush1.bf16.msra.mxu0 %v4258
    %6117 = vmatprep.subr.bf16.mxu0 %v4272
    %6118 = vmatpush1.bf16.msra.mxu0 %v4271
    %6119 = vmatprep.subr.bf16.mxu0 %v4285
    %6120 = vmatpush1.bf16.msra.mxu0 %v4284
    %6121 = vmatprep.subr.bf16.mxu0 %v4298
    %6122 = vmatpush1.bf16.msra.mxu0 %v4297
    %6123 = vmatprep.subr.bf16.mxu0 %v4311
    %6124 = vmatpush1.bf16.msra.mxu0 %v4310
    %6125 = vmatprep.mubr.bf16.mxu0 %v163
    %6126 = vmatmul.mubr.bf16.gmra.mrb[0].mxu0 %v162
    %v6127 = vpop.f32.mrb[0].mxu0
    %v6128 = vadd.f32 %v6087, %v6127
    %v6129 = vpop.f32.mrb[0].mxu0
    %v6130 = vadd.f32 %v6089, %v6129
    %v6131 = vpop.f32.mrb[0].mxu0
    %v6132 = vpop.f32.mrb[0].mxu0
    %6133 = vdwg.mxu0
    %6134 = vmatprep.subr.bf16.mxu0 %v4324
    %6135 = vmatpush1.bf16.msra.mxu0 %v4323
    %6136 = vmatprep.subr.bf16.mxu0 %v4337
    %6137 = vmatpush1.bf16.msra.mxu0 %v4336
    %6138 = vmatprep.subr.bf16.mxu0 %v4350
    %6139 = vmatpush1.bf16.msra.mxu0 %v4349
    %6140 = vmatprep.subr.bf16.mxu0 %v4363
    %6141 = vmatpush1.bf16.msra.mxu0 %v4362
    %6142 = vmatprep.subr.bf16.mxu0 %v4376
    %6143 = vmatpush1.bf16.msra.mxu0 %v4375
    %6144 = vmatprep.subr.bf16.mxu0 %v4389
    %6145 = vmatpush1.bf16.msra.mxu0 %v4388
    %6146 = vmatprep.subr.bf16.mxu0 %v4402
    %6147 = vmatpush1.bf16.msra.mxu0 %v4401
    %6148 = vmatprep.subr.bf16.mxu0 %v4415
    %6149 = vmatpush1.bf16.msra.mxu0 %v4414
    %6150 = vmatprep.subr.bf16.mxu0 %v4428
    %6151 = vmatpush1.bf16.msra.mxu0 %v4427
    %6152 = vmatprep.subr.bf16.mxu0 %v4441
    %6153 = vmatpush1.bf16.msra.mxu0 %v4440
    %6154 = vmatprep.subr.bf16.mxu0 %v4454
    %6155 = vmatpush1.bf16.msra.mxu0 %v4453
    %6156 = vmatprep.subr.bf16.mxu0 %v4467
    %6157 = vmatpush1.bf16.msra.mxu0 %v4466
    %6158 = vmatprep.subr.bf16.mxu0 %v4480
    %6159 = vmatpush1.bf16.msra.mxu0 %v4479
    %6160 = vmatprep.subr.bf16.mxu0 %v4493
    %6161 = vmatpush1.bf16.msra.mxu0 %v4492
    %6162 = vmatprep.subr.bf16.mxu0 %v4506
    %6163 = vmatpush1.bf16.msra.mxu0 %v4505
    %6164 = vmatprep.subr.bf16.mxu0 %v4519
    %6165 = vmatpush1.bf16.msra.mxu0 %v4518
    %6166 = vmatprep.mubr.bf16.mxu0 %v165
    %6167 = vmatmul.mubr.bf16.gmra.mrb[0].mxu0 %v164
    %v6168 = vpop.f32.mrb[0].mxu0
    %v6169 = vadd.f32 %v6128, %v6168
    %v6170 = vpop.f32.mrb[0].mxu0
    %v6171 = vadd.f32 %v6130, %v6170
    %v6172 = vpop.f32.mrb[0].mxu0
    %v6173 = vpop.f32.mrb[0].mxu0
    %6174 = vdwg.mxu0
    %6175 = vmatprep.subr.bf16.mxu0 %v3702
    %6176 = vmatpush1.bf16.msra.mxu0 %v3701
    %6177 = vmatprep.subr.bf16.mxu0 %v3715
    %6178 = vmatpush1.bf16.msra.mxu0 %v3714
    %6179 = vmatprep.subr.bf16.mxu0 %v3728
    %6180 = vmatpush1.bf16.msra.mxu0 %v3727
    %6181 = vmatprep.subr.bf16.mxu0 %v3741
    %6182 = vmatpush1.bf16.msra.mxu0 %v3740
    %6183 = vmatprep.subr.bf16.mxu0 %v3754
    %6184 = vmatpush1.bf16.msra.mxu0 %v3753
    %6185 = vmatprep.subr.bf16.mxu0 %v3767
    %6186 = vmatpush1.bf16.msra.mxu0 %v3766
    %6187 = vmatprep.subr.bf16.mxu0 %v3780
    %6188 = vmatpush1.bf16.msra.mxu0 %v3779
    %6189 = vmatprep.subr.bf16.mxu0 %v3793
    %6190 = vmatpush1.bf16.msra.mxu0 %v3792
    %6191 = vmatprep.subr.bf16.mxu0 %v3806
    %6192 = vmatpush1.bf16.msra.mxu0 %v3805
    %6193 = vmatprep.subr.bf16.mxu0 %v3819
    %6194 = vmatpush1.bf16.msra.mxu0 %v3818
    %6195 = vmatprep.subr.bf16.mxu0 %v3832
    %6196 = vmatpush1.bf16.msra.mxu0 %v3831
    %6197 = vmatprep.subr.bf16.mxu0 %v3845
    %6198 = vmatpush1.bf16.msra.mxu0 %v3844
    %6199 = vmatprep.subr.bf16.mxu0 %v3858
    %6200 = vmatpush1.bf16.msra.mxu0 %v3857
    %6201 = vmatprep.subr.bf16.mxu0 %v3871
    %6202 = vmatpush1.bf16.msra.mxu0 %v3870
    %6203 = vmatprep.subr.bf16.mxu0 %v3884
    %6204 = vmatpush1.bf16.msra.mxu0 %v3883
    %6205 = vmatprep.subr.bf16.mxu0 %v3897
    %6206 = vmatpush1.bf16.msra.mxu0 %v3896
    %6207 = vmatprep.mubr.bf16.mxu0 %v159
    %6208 = vmatmul.mubr.bf16.gmra.mrb[0].mxu0 %v158
    %v6209 = vpop.f32.mrb[0].mxu0
    %v6210 = vadd.f32 %v1109, %v6209
    %v6211 = vpop.f32.mrb[0].mxu0
    %v6212 = vadd.f32 %v1113, %v6211
    %v6213 = vpop.f32.mrb[0].mxu0
    %v6214 = vpop.f32.mrb[0].mxu0
    %6215 = vdwg.mxu0
    %6216 = vmatprep.subr.bf16.mxu0 %v3910
    %6217 = vmatpush1.bf16.msra.mxu0 %v3909
    %6218 = vmatprep.subr.bf16.mxu0 %v3923
    %6219 = vmatpush1.bf16.msra.mxu0 %v3922
    %6220 = vmatprep.subr.bf16.mxu0 %v3936
    %6221 = vmatpush1.bf16.msra.mxu0 %v3935
    %6222 = vmatprep.subr.bf16.mxu0 %v3949
    %6223 = vmatpush1.bf16.msra.mxu0 %v3948
    %6224 = vmatprep.subr.bf16.mxu0 %v3962
    %6225 = vmatpush1.bf16.msra.mxu0 %v3961
    %6226 = vmatprep.subr.bf16.mxu0 %v3975
    %6227 = vmatpush1.bf16.msra.mxu0 %v3974
    %6228 = vmatprep.subr.bf16.mxu0 %v3988
    %6229 = vmatpush1.bf16.msra.mxu0 %v3987
    %6230 = vmatprep.subr.bf16.mxu0 %v4001
    %6231 = vmatpush1.bf16.msra.mxu0 %v4000
    %6232 = vmatprep.subr.bf16.mxu0 %v4014
    %6233 = vmatpush1.bf16.msra.mxu0 %v4013
    %6234 = vmatprep.subr.bf16.mxu0 %v4027
    %6235 = vmatpush1.bf16.msra.mxu0 %v4026
    %6236 = vmatprep.subr.bf16.mxu0 %v4040
    %6237 = vmatpush1.bf16.msra.mxu0 %v4039
    %6238 = vmatprep.subr.bf16.mxu0 %v4053
    %6239 = vmatpush1.bf16.msra.mxu0 %v4052
    %6240 = vmatprep.subr.bf16.mxu0 %v4066
    %6241 = vmatpush1.bf16.msra.mxu0 %v4065
    %6242 = vmatprep.subr.bf16.mxu0 %v4079
    %6243 = vmatpush1.bf16.msra.mxu0 %v4078
    %6244 = vmatprep.subr.bf16.mxu0 %v4092
    %6245 = vmatpush1.bf16.msra.mxu0 %v4091
    %6246 = vmatprep.subr.bf16.mxu0 %v4105
    %6247 = vmatpush1.bf16.msra.mxu0 %v4104
    %6248 = vmatprep.mubr.bf16.mxu0 %v161
    %6249 = vmatmul.mubr.bf16.gmra.mrb[0].mxu0 %v160
    %v6250 = vpop.f32.mrb[0].mxu0
    %v6251 = vadd.f32 %v6210, %v6250
    %v6252 = vpop.f32.mrb[0].mxu0
    %v6253 = vadd.f32 %v6212, %v6252
    %v6254 = vpop.f32.mrb[0].mxu0
    %v6255 = vpop.f32.mrb[0].mxu0
    %6256 = vdwg.mxu0
    %6257 = vmatprep.subr.bf16.mxu0 %v4118
    %6258 = vmatpush1.bf16.msra.mxu0 %v4117
    %6259 = vmatprep.subr.bf16.mxu0 %v4131
    %6260 = vmatpush1.bf16.msra.mxu0 %v4130
    %6261 = vmatprep.subr.bf16.mxu0 %v4144
    %6262 = vmatpush1.bf16.msra.mxu0 %v4143
    %6263 = vmatprep.subr.bf16.mxu0 %v4157
    %6264 = vmatpush1.bf16.msra.mxu0 %v4156
    %6265 = vmatprep.subr.bf16.mxu0 %v4170
    %6266 = vmatpush1.bf16.msra.mxu0 %v4169
    %6267 = vmatprep.subr.bf16.mxu0 %v4183
    %6268 = vmatpush1.bf16.msra.mxu0 %v4182
    %6269 = vmatprep.subr.bf16.mxu0 %v4196
    %6270 = vmatpush1.bf16.msra.mxu0 %v4195
    %6271 = vmatprep.subr.bf16.mxu0 %v4209
    %6272 = vmatpush1.bf16.msra.mxu0 %v4208
    %6273 = vmatprep.subr.bf16.mxu0 %v4222
    %6274 = vmatpush1.bf16.msra.mxu0 %v4221
    %6275 = vmatprep.subr.bf16.mxu0 %v4235
    %6276 = vmatpush1.bf16.msra.mxu0 %v4234
    %6277 = vmatprep.subr.bf16.mxu0 %v4248
    %6278 = vmatpush1.bf16.msra.mxu0 %v4247
    %6279 = vmatprep.subr.bf16.mxu0 %v4261
    %6280 = vmatpush1.bf16.msra.mxu0 %v4260
    %6281 = vmatprep.subr.bf16.mxu0 %v4274
    %6282 = vmatpush1.bf16.msra.mxu0 %v4273
    %6283 = vmatprep.subr.bf16.mxu0 %v4287
    %6284 = vmatpush1.bf16.msra.mxu0 %v4286
    %6285 = vmatprep.subr.bf16.mxu0 %v4300
    %6286 = vmatpush1.bf16.msra.mxu0 %v4299
    %6287 = vmatprep.subr.bf16.mxu0 %v4313
    %6288 = vmatpush1.bf16.msra.mxu0 %v4312
    %6289 = vmatprep.mubr.bf16.mxu0 %v163
    %6290 = vmatmul.mubr.bf16.gmra.mrb[0].mxu0 %v162
    %v6291 = vpop.f32.mrb[0].mxu0
    %v6292 = vadd.f32 %v6251, %v6291
    %v6293 = vpop.f32.mrb[0].mxu0
    %v6294 = vadd.f32 %v6253, %v6293
    %v6295 = vpop.f32.mrb[0].mxu0
    %v6296 = vpop.f32.mrb[0].mxu0
    %6297 = vdwg.mxu0
    %6298 = vmatprep.subr.bf16.mxu0 %v4326
    %6299 = vmatpush1.bf16.msra.mxu0 %v4325
    %6300 = vmatprep.subr.bf16.mxu0 %v4339
    %6301 = vmatpush1.bf16.msra.mxu0 %v4338
    %6302 = vmatprep.subr.bf16.mxu0 %v4352
    %6303 = vmatpush1.bf16.msra.mxu0 %v4351
    %6304 = vmatprep.subr.bf16.mxu0 %v4365
    %6305 = vmatpush1.bf16.msra.mxu0 %v4364
    %6306 = vmatprep.subr.bf16.mxu0 %v4378
    %6307 = vmatpush1.bf16.msra.mxu0 %v4377
    %6308 = vmatprep.subr.bf16.mxu0 %v4391
    %6309 = vmatpush1.bf16.msra.mxu0 %v4390
    %6310 = vmatprep.subr.bf16.mxu0 %v4404
    %6311 = vmatpush1.bf16.msra.mxu0 %v4403
    %6312 = vmatprep.subr.bf16.mxu0 %v4417
    %6313 = vmatpush1.bf16.msra.mxu0 %v4416
    %6314 = vmatprep.subr.bf16.mxu0 %v4430
    %6315 = vmatpush1.bf16.msra.mxu0 %v4429
    %6316 = vmatprep.subr.bf16.mxu0 %v4443
    %6317 = vmatpush1.bf16.msra.mxu0 %v4442
    %6318 = vmatprep.subr.bf16.mxu0 %v4456
    %6319 = vmatpush1.bf16.msra.mxu0 %v4455
    %6320 = vmatprep.subr.bf16.mxu0 %v4469
    %6321 = vmatpush1.bf16.msra.mxu0 %v4468
    %6322 = vmatprep.subr.bf16.mxu0 %v4482
    %6323 = vmatpush1.bf16.msra.mxu0 %v4481
    %6324 = vmatprep.subr.bf16.mxu0 %v4495
    %6325 = vmatpush1.bf16.msra.mxu0 %v4494
    %6326 = vmatprep.subr.bf16.mxu0 %v4508
    %6327 = vmatpush1.bf16.msra.mxu0 %v4507
    %6328 = vmatprep.subr.bf16.mxu0 %v4521
    %6329 = vmatpush1.bf16.msra.mxu0 %v4520
    %6330 = vmatprep.mubr.bf16.mxu0 %v165
    %6331 = vmatmul.mubr.bf16.gmra.mrb[0].mxu0 %v164
    %v6332 = vpop.f32.mrb[0].mxu0
    %v6333 = vadd.f32 %v6292, %v6332
    %v6334 = vpop.f32.mrb[0].mxu0
    %v6335 = vadd.f32 %v6294, %v6334
    %v6336 = vpop.f32.mrb[0].mxu0
    %v6337 = vpop.f32.mrb[0].mxu0
    %6338 = vdwg.mxu0
    %6339 = vmatprep.subr.bf16.mxu0 0
    %6340 = vmatpush1.bf16.msra.mxu0 %v3703
    %6341 = vmatprep.subr.bf16.mxu0 0
    %6342 = vmatpush1.bf16.msra.mxu0 %v3716
    %6343 = vmatprep.subr.bf16.mxu0 0
    %6344 = vmatpush1.bf16.msra.mxu0 %v3729
    %6345 = vmatprep.subr.bf16.mxu0 0
    %6346 = vmatpush1.bf16.msra.mxu0 %v3742
    %6347 = vmatprep.subr.bf16.mxu0 0
    %6348 = vmatpush1.bf16.msra.mxu0 %v3755
    %6349 = vmatprep.subr.bf16.mxu0 0
    %6350 = vmatpush1.bf16.msra.mxu0 %v3768
    %6351 = vmatprep.subr.bf16.mxu0 0
    %6352 = vmatpush1.bf16.msra.mxu0 %v3781
    %6353 = vmatprep.subr.bf16.mxu0 0
    %6354 = vmatpush1.bf16.msra.mxu0 %v3794
    %6355 = vmatprep.subr.bf16.mxu0 0
    %6356 = vmatpush1.bf16.msra.mxu0 %v3807
    %6357 = vmatprep.subr.bf16.mxu0 0
    %6358 = vmatpush1.bf16.msra.mxu0 %v3820
    %6359 = vmatprep.subr.bf16.mxu0 0
    %6360 = vmatpush1.bf16.msra.mxu0 %v3833
    %6361 = vmatprep.subr.bf16.mxu0 0
    %6362 = vmatpush1.bf16.msra.mxu0 %v3846
    %6363 = vmatprep.subr.bf16.mxu0 0
    %6364 = vmatpush1.bf16.msra.mxu0 %v3859
    %6365 = vmatprep.subr.bf16.mxu0 0
    %6366 = vmatpush1.bf16.msra.mxu0 %v3872
    %6367 = vmatprep.subr.bf16.mxu0 0
    %6368 = vmatpush1.bf16.msra.mxu0 %v3885
    %6369 = vmatprep.subr.bf16.mxu0 0
    %6370 = vmatpush1.bf16.msra.mxu0 %v3898
    %6371 = vmatprep.mubr.bf16.mxu0 %v159
    %6372 = vmatmul.mubr.bf16.gmra.mrb[0].mxu0 %v158
    %v6373 = vpop.f32.mrb[0].mxu0
    %v6374 = vadd.f32 %v1117, %v6373
    %v6375 = vpop.f32.mrb[0].mxu0
    %v6376 = vpop.f32.mrb[0].mxu0
    %v6377 = vpop.f32.mrb[0].mxu0
    %6378 = vdwg.mxu0
    %6379 = vmatprep.subr.bf16.mxu0 0
    %6380 = vmatpush1.bf16.msra.mxu0 %v3911
    %6381 = vmatprep.subr.bf16.mxu0 0
    %6382 = vmatpush1.bf16.msra.mxu0 %v3924
    %6383 = vmatprep.subr.bf16.mxu0 0
    %6384 = vmatpush1.bf16.msra.mxu0 %v3937
    %6385 = vmatprep.subr.bf16.mxu0 0
    %6386 = vmatpush1.bf16.msra.mxu0 %v3950
    %6387 = vmatprep.subr.bf16.mxu0 0
    %6388 = vmatpush1.bf16.msra.mxu0 %v3963
    %6389 = vmatprep.subr.bf16.mxu0 0
    %6390 = vmatpush1.bf16.msra.mxu0 %v3976
    %6391 = vmatprep.subr.bf16.mxu0 0
    %6392 = vmatpush1.bf16.msra.mxu0 %v3989
    %6393 = vmatprep.subr.bf16.mxu0 0
    %6394 = vmatpush1.bf16.msra.mxu0 %v4002
    %6395 = vmatprep.subr.bf16.mxu0 0
    %6396 = vmatpush1.bf16.msra.mxu0 %v4015
    %6397 = vmatprep.subr.bf16.mxu0 0
    %6398 = vmatpush1.bf16.msra.mxu0 %v4028
    %6399 = vmatprep.subr.bf16.mxu0 0
    %6400 = vmatpush1.bf16.msra.mxu0 %v4041
    %6401 = vmatprep.subr.bf16.mxu0 0
    %6402 = vmatpush1.bf16.msra.mxu0 %v4054
    %6403 = vmatprep.subr.bf16.mxu0 0
    %6404 = vmatpush1.bf16.msra.mxu0 %v4067
    %6405 = vmatprep.subr.bf16.mxu0 0
    %6406 = vmatpush1.bf16.msra.mxu0 %v4080
    %6407 = vmatprep.subr.bf16.mxu0 0
    %6408 = vmatpush1.bf16.msra.mxu0 %v4093
    %6409 = vmatprep.subr.bf16.mxu0 0
    %6410 = vmatpush1.bf16.msra.mxu0 %v4106
    %6411 = vmatprep.mubr.bf16.mxu0 %v161
    %6412 = vmatmul.mubr.bf16.gmra.mrb[0].mxu0 %v160
    %v6413 = vpop.f32.mrb[0].mxu0
    %v6414 = vadd.f32 %v6374, %v6413
    %v6415 = vpop.f32.mrb[0].mxu0
    %v6416 = vpop.f32.mrb[0].mxu0
    %v6417 = vpop.f32.mrb[0].mxu0
    %6418 = vdwg.mxu0
    %6419 = vmatprep.subr.bf16.mxu0 0
    %6420 = vmatpush1.bf16.msra.mxu0 %v4119
    %6421 = vmatprep.subr.bf16.mxu0 0
    %6422 = vmatpush1.bf16.msra.mxu0 %v4132
    %6423 = vmatprep.subr.bf16.mxu0 0
    %6424 = vmatpush1.bf16.msra.mxu0 %v4145
    %6425 = vmatprep.subr.bf16.mxu0 0
    %6426 = vmatpush1.bf16.msra.mxu0 %v4158
    %6427 = vmatprep.subr.bf16.mxu0 0
    %6428 = vmatpush1.bf16.msra.mxu0 %v4171
    %6429 = vmatprep.subr.bf16.mxu0 0
    %6430 = vmatpush1.bf16.msra.mxu0 %v4184
    %6431 = vmatprep.subr.bf16.mxu0 0
    %6432 = vmatpush1.bf16.msra.mxu0 %v4197
    %6433 = vmatprep.subr.bf16.mxu0 0
    %6434 = vmatpush1.bf16.msra.mxu0 %v4210
    %6435 = vmatprep.subr.bf16.mxu0 0
    %6436 = vmatpush1.bf16.msra.mxu0 %v4223
    %6437 = vmatprep.subr.bf16.mxu0 0
    %6438 = vmatpush1.bf16.msra.mxu0 %v4236
    %6439 = vmatprep.subr.bf16.mxu0 0
    %6440 = vmatpush1.bf16.msra.mxu0 %v4249
    %6441 = vmatprep.subr.bf16.mxu0 0
    %6442 = vmatpush1.bf16.msra.mxu0 %v4262
    %6443 = vmatprep.subr.bf16.mxu0 0
    %6444 = vmatpush1.bf16.msra.mxu0 %v4275
    %6445 = vmatprep.subr.bf16.mxu0 0
    %6446 = vmatpush1.bf16.msra.mxu0 %v4288
    %6447 = vmatprep.subr.bf16.mxu0 0
    %6448 = vmatpush1.bf16.msra.mxu0 %v4301
    %6449 = vmatprep.subr.bf16.mxu0 0
    %6450 = vmatpush1.bf16.msra.mxu0 %v4314
    %6451 = vmatprep.mubr.bf16.mxu0 %v163
    %6452 = vmatmul.mubr.bf16.gmra.mrb[0].mxu0 %v162
    %v6453 = vpop.f32.mrb[0].mxu0
    %v6454 = vadd.f32 %v6414, %v6453
    %v6455 = vpop.f32.mrb[0].mxu0
    %v6456 = vpop.f32.mrb[0].mxu0
    %v6457 = vpop.f32.mrb[0].mxu0
    %6458 = vdwg.mxu0
    %6459 = vmatprep.subr.bf16.mxu0 0
    %6460 = vmatpush1.bf16.msra.mxu0 %v4327
    %6461 = vmatprep.subr.bf16.mxu0 0
    %6462 = vmatpush1.bf16.msra.mxu0 %v4340
    %6463 = vmatprep.subr.bf16.mxu0 0
    %6464 = vmatpush1.bf16.msra.mxu0 %v4353
    %6465 = vmatprep.subr.bf16.mxu0 0
    %6466 = vmatpush1.bf16.msra.mxu0 %v4366
    %6467 = vmatprep.subr.bf16.mxu0 0
    %6468 = vmatpush1.bf16.msra.mxu0 %v4379
    %6469 = vmatprep.subr.bf16.mxu0 0
    %6470 = vmatpush1.bf16.msra.mxu0 %v4392
    %6471 = vmatprep.subr.bf16.mxu0 0
    %6472 = vmatpush1.bf16.msra.mxu0 %v4405
    %6473 = vmatprep.subr.bf16.mxu0 0
    %6474 = vmatpush1.bf16.msra.mxu0 %v4418
    %6475 = vmatprep.subr.bf16.mxu0 0
    %6476 = vmatpush1.bf16.msra.mxu0 %v4431
    %6477 = vmatprep.subr.bf16.mxu0 0
    %6478 = vmatpush1.bf16.msra.mxu0 %v4444
    %6479 = vmatprep.subr.bf16.mxu0 0
    %6480 = vmatpush1.bf16.msra.mxu0 %v4457
    %6481 = vmatprep.subr.bf16.mxu0 0
    %6482 = vmatpush1.bf16.msra.mxu0 %v4470
    %6483 = vmatprep.subr.bf16.mxu0 0
    %6484 = vmatpush1.bf16.msra.mxu0 %v4483
    %6485 = vmatprep.subr.bf16.mxu0 0
    %6486 = vmatpush1.bf16.msra.mxu0 %v4496
    %6487 = vmatprep.subr.bf16.mxu0 0
    %6488 = vmatpush1.bf16.msra.mxu0 %v4509
    %6489 = vmatprep.subr.bf16.mxu0 0
    %6490 = vmatpush1.bf16.msra.mxu0 %v4522
    %6491 = vmatprep.mubr.bf16.mxu0 %v165
    %6492 = vmatmul.mubr.bf16.gmra.mrb[0].mxu0 %v164
    %v6493 = vpop.f32.mrb[0].mxu0
    %v6494 = vadd.f32 %v6454, %v6493
    %v6495 = vpop.f32.mrb[0].mxu0
    %v6496 = vpop.f32.mrb[0].mxu0
    %v6497 = vpop.f32.mrb[0].mxu0
    %6498 = vdwg.mxu0
    %vm6499 = vcmp.ge.f32.partialorder %v5513, 0.0
    %vm6500 = vcmp.ge.f32.partialorder %v5515, 0.0
    %vm6501 = vcmp.ge.f32.partialorder %v5677, 0.0
    %vm6502 = vcmp.ge.f32.partialorder %v5679, 0.0
    %vm6503 = vcmp.ge.f32.partialorder %v5841, 0.0
    %vm6504 = vcmp.ge.f32.partialorder %v5843, 0.0
    %vm6505 = vcmp.ge.f32.partialorder %v6005, 0.0
    %vm6506 = vcmp.ge.f32.partialorder %v6007, 0.0
    %vm6507 = vcmp.ge.f32.partialorder %v6169, 0.0
    %vm6508 = vcmp.ge.f32.partialorder %v6171, 0.0
    %vm6509 = vcmp.ge.f32.partialorder %v6333, 0.0
    %vm6510 = vcmp.ge.f32.partialorder %v6335, 0.0
    %vm6511 = vcmp.ge.f32.partialorder %v6494, 0.0
    %v6512 = vmul.f32 %v5513, 0.01
    %v6513 = vmul.f32 %v5515, 0.01
    %v6514 = vmul.f32 %v5677, 0.01
    %v6515 = vmul.f32 %v5679, 0.01
    %v6516 = vmul.f32 %v5841, 0.01
    %v6517 = vmul.f32 %v5843, 0.01
    %v6518 = vmul.f32 %v6005, 0.01
    %v6519 = vmul.f32 %v6007, 0.01
    %v6520 = vmul.f32 %v6169, 0.01
    %v6521 = vmul.f32 %v6171, 0.01
    %v6522 = vmul.f32 %v6333, 0.01
    %v6523 = vmul.f32 %v6335, 0.01
    %v6524 = vmul.f32 %v6494, 0.01
    %v6525 = vsel %vm6499, %v5513, %v6512
    %v6526 = vsel %vm6500, %v5515, %v6513
    %v6527 = vsel %vm6501, %v5677, %v6514
    %v6528 = vsel %vm6502, %v5679, %v6515
    %v6529 = vsel %vm6503, %v5841, %v6516
    %v6530 = vsel %vm6504, %v5843, %v6517
    %v6531 = vsel %vm6505, %v6005, %v6518
    %v6532 = vsel %vm6506, %v6007, %v6519
    %v6533 = vsel %vm6507, %v6169, %v6520
    %v6534 = vsel %vm6508, %v6171, %v6521
    %v6535 = vsel %vm6509, %v6333, %v6522
    %v6536 = vsel %vm6510, %v6335, %v6523
    %v6537 = vsel %vm6511, %v6494, %v6524
    %v6538 = vpack.c.bf16 %v6525, %v6525
    %v6539 = vpack.c.bf16 %v6526, %v6526
    %v6540 = vpack.c.bf16 %v6527, %v6527
    %v6541 = vpack.c.bf16 %v6528, %v6528
    %v6542 = vpack.c.bf16 %v6529, %v6529
    %v6543 = vpack.c.bf16 %v6530, %v6530
    %v6544 = vpack.c.bf16 %v6531, %v6531
    %v6545 = vpack.c.bf16 %v6532, %v6532
    %v6546 = vpack.c.bf16 %v6533, %v6533
    %v6547 = vpack.c.bf16 %v6534, %v6534
    %v6548 = vpack.c.bf16 %v6535, %v6535
    %v6549 = vpack.c.bf16 %v6536, %v6536
    %v6550 = vpack.c.bf16 %v6537, %v6537
    %v6551 = vld [vmem:[%s5] sm:$0xf]
    %v6552 = vld [vmem:[%s5 + $0x4] sm:$0xf]
    %v6553 = vld [vmem:[%s5 + $0x8] sm:$0xf]
    %v6554 = vld [vmem:[%s5 + $0xc] sm:$0xf]
    %v6555 = vld [vmem:[%s5 + $0x10] sm:$0xf]
    %v6556 = vld [vmem:[%s5 + $0x14] sm:$0xf]
    %v6557 = vld [vmem:[%s5 + $0x18] sm:$0xf]
    %v6558 = vld [vmem:[%s5 + $0x1c] sm:$0xf]
    %v6559 = vld [vmem:[%s5 + $0x20] sm:$0xf]
    %v6560 = vld [vmem:[%s5 + $0x24] sm:$0xf]
    %v6561 = vld [vmem:[%s5 + $0x28] sm:$0xf]
    %v6562 = vld [vmem:[%s5 + $0x2c] sm:$0xf]
    %v6563 = vld [vmem:[%s5 + $0x30] sm:$0xf]
    %v6564 = vld [vmem:[%s5 + $0x34] sm:$0xf]
    %v6565 = vld [vmem:[%s5 + $0x38] sm:$0xf]
    %v6566 = vld [vmem:[%s5 + $0x3c] sm:$0xf]
    %v6567 = vld [vmem:[%s5 + $0x40] sm:$0xf]
    %v6568 = vld [vmem:[%s5 + $0x44] sm:$0xf]
    %v6569 = vld [vmem:[%s5 + $0x48] sm:$0xf]
    %v6570 = vld [vmem:[%s5 + $0x4c] sm:$0xf]
    %v6571 = vld [vmem:[%s5 + $0x50] sm:$0xf]
    %v6572 = vld [vmem:[%s5 + $0x54] sm:$0xf]
    %v6573 = vld [vmem:[%s5 + $0x58] sm:$0xf]
    %v6574 = vld [vmem:[%s5 + $0x5c] sm:$0xf]
    %v6575 = vld [vmem:[%s5 + $0x60] sm:$0xf]
    %v6576 = vld [vmem:[%s5 + $0x64] sm:$0xf]
    %v6577 = vld [vmem:[%s5 + $0x68] sm:$0xf]
    %v6578 = vld [vmem:[%s5 + $0x6c] sm:$0xf]
    %v6579 = vld [vmem:[%s5 + $0x70] sm:$0xf]
    %v6580 = vld [vmem:[%s5 + $0x74] sm:$0xf]
    %v6581 = vld [vmem:[%s5 + $0x78] sm:$0xf]
    %v6582 = vld [vmem:[%s5 + $0x7c] sm:$0xf]
    %v6583 = vld [vmem:[%s5 + $0x80] sm:$0xf]
    %v6584 = vld [vmem:[%s5 + $0x84] sm:$0xf]
    %v6585 = vld [vmem:[%s5 + $0x88] sm:$0xf]
    %v6586 = vld [vmem:[%s5 + $0x8c] sm:$0xf]
    %v6587 = vld [vmem:[%s5 + $0x90] sm:$0xf]
    %v6588 = vld [vmem:[%s5 + $0x94] sm:$0xf]
    %v6589 = vld [vmem:[%s5 + $0x98] sm:$0xf]
    %v6590 = vld [vmem:[%s5 + $0x9c] sm:$0xf]
    %v6591 = vld [vmem:[%s5 + $0xa0] sm:$0xf]
    %v6592 = vld [vmem:[%s5 + $0xa4] sm:$0xf]
    %v6593 = vld [vmem:[%s5 + $0xa8] sm:$0xf]
    %v6594 = vld [vmem:[%s5 + $0xac] sm:$0xf]
    %v6595 = vld [vmem:[%s5 + $0xb0] sm:$0xf]
    %v6596 = vld [vmem:[%s5 + $0xb4] sm:$0xf]
    %v6597 = vld [vmem:[%s5 + $0xb8] sm:$0xf]
    %v6598 = vld [vmem:[%s5 + $0xbc] sm:$0xf]
    %v6599 = vld [vmem:[%s5 + $0xc0] sm:$0xf]
    %v6600 = vld [vmem:[%s5 + $0xc4] sm:$0xf]
    %v6601 = vld [vmem:[%s5 + $0xc8] sm:$0xf]
    %v6602 = vld [vmem:[%s5 + $0xcc] sm:$0xf]
    %v6603 = vld [vmem:[%s5 + $0xd0] sm:$0xf]
    %v6604 = vld [vmem:[%s5 + $0xd4] sm:$0xf]
    %v6605 = vld [vmem:[%s5 + $0xd8] sm:$0xf]
    %v6606 = vld [vmem:[%s5 + $0xdc] sm:$0xf]
    %v6607 = vld [vmem:[%s5 + $0xe0] sm:$0xf]
    %v6608 = vld [vmem:[%s5 + $0xe4] sm:$0xf]
    %v6609 = vld [vmem:[%s5 + $0xe8] sm:$0xf]
    %v6610 = vld [vmem:[%s5 + $0xec] sm:$0xf]
    %v6611 = vld [vmem:[%s5 + $0xf0] sm:$0xf]
    %v6612 = vld [vmem:[%s5 + $0xf4] sm:$0xf]
    %v6613 = vld [vmem:[%s5 + $0xf8] sm:$0xf]
    %v6614 = vld [vmem:[%s5 + $0xfc] sm:$0xf]
    %v6615 = vld [vmem:[%s5 + $0x100] sm:$0xf]
    %v6616 = vld [vmem:[%s5 + $0x104] sm:$0xf]
    %v6617 = vld [vmem:[%s5 + $0x108] sm:$0xf]
    %v6618 = vld [vmem:[%s5 + $0x10c] sm:$0xf]
    %v6619 = vld [vmem:[%s5 + $0x110] sm:$0xf]
    %v6620 = vld [vmem:[%s5 + $0x114] sm:$0xf]
    %v6621 = vld [vmem:[%s5 + $0x118] sm:$0xf]
    %v6622 = vld [vmem:[%s5 + $0x11c] sm:$0xf]
    %v6623 = vld [vmem:[%s5 + $0x120] sm:$0xf]
    %v6624 = vld [vmem:[%s5 + $0x124] sm:$0xf]
    %v6625 = vld [vmem:[%s5 + $0x128] sm:$0xf]
    %v6626 = vld [vmem:[%s5 + $0x12c] sm:$0xf]
    %v6627 = vld [vmem:[%s5 + $0x130] sm:$0xf]
    %v6628 = vld [vmem:[%s5 + $0x134] sm:$0xf]
    %v6629 = vld [vmem:[%s5 + $0x138] sm:$0xf]
    %v6630 = vld [vmem:[%s5 + $0x13c] sm:$0xf]
    %v6631 = vld [vmem:[%s5 + $0x140] sm:$0xf]
    %v6632 = vld [vmem:[%s5 + $0x144] sm:$0xf]
    %v6633 = vld [vmem:[%s5 + $0x148] sm:$0xf]
    %v6634 = vld [vmem:[%s5 + $0x14c] sm:$0xf]
    %v6635 = vld [vmem:[%s5 + $0x150] sm:$0xf]
    %v6636 = vld [vmem:[%s5 + $0x154] sm:$0xf]
    %v6637 = vld [vmem:[%s5 + $0x158] sm:$0xf]
    %v6638 = vld [vmem:[%s5 + $0x15c] sm:$0xf]
    %v6639 = vld [vmem:[%s5 + $0x160] sm:$0xf]
    %v6640 = vld [vmem:[%s5 + $0x164] sm:$0xf]
    %v6641 = vld [vmem:[%s5 + $0x168] sm:$0xf]
    %v6642 = vld [vmem:[%s5 + $0x16c] sm:$0xf]
    %v6643 = vld [vmem:[%s5 + $0x170] sm:$0xf]
    %v6644 = vld [vmem:[%s5 + $0x174] sm:$0xf]
    %v6645 = vld [vmem:[%s5 + $0x178] sm:$0xf]
    %v6646 = vld [vmem:[%s5 + $0x17c] sm:$0xf]
    %v6647 = vld [vmem:[%s5 + $0x180] sm:$0xf]
    %v6648 = vld [vmem:[%s5 + $0x184] sm:$0xf]
    %v6649 = vld [vmem:[%s5 + $0x188] sm:$0xf]
    %v6650 = vld [vmem:[%s5 + $0x18c] sm:$0xf]
    %v6651 = vld [vmem:[%s5 + $0x190] sm:$0xf]
    %v6652 = vld [vmem:[%s5 + $0x194] sm:$0xf]
    %v6653 = vld [vmem:[%s5 + $0x198] sm:$0xf]
    %v6654 = vld [vmem:[%s5 + $0x19c] sm:$0xf]
    %v6655 = vld [vmem:[%s5 + $0x1a0] sm:$0xf]
    %v6656 = vld [vmem:[%s5 + $0x1a4] sm:$0xf]
    %v6657 = vld [vmem:[%s5 + $0x1a8] sm:$0xf]
    %v6658 = vld [vmem:[%s5 + $0x1ac] sm:$0xf]
    %v6659 = vld [vmem:[%s5 + $0x1b0] sm:$0xf]
    %v6660 = vld [vmem:[%s5 + $0x1b4] sm:$0xf]
    %v6661 = vld [vmem:[%s5 + $0x1b8] sm:$0xf]
    %v6662 = vld [vmem:[%s5 + $0x1bc] sm:$0xf]
    %v6663 = vld [vmem:[%s5 + $0x1c0] sm:$0xf]
    %v6664 = vld [vmem:[%s5 + $0x1c4] sm:$0xf]
    %v6665 = vld [vmem:[%s5 + $0x1c8] sm:$0xf]
    %v6666 = vld [vmem:[%s5 + $0x1cc] sm:$0xf]
    %v6667 = vld [vmem:[%s5 + $0x1d0] sm:$0xf]
    %v6668 = vld [vmem:[%s5 + $0x1d4] sm:$0xf]
    %v6669 = vld [vmem:[%s5 + $0x1d8] sm:$0xf]
    %v6670 = vld [vmem:[%s5 + $0x1dc] sm:$0xf]
    %v6671 = vld [vmem:[%s5 + $0x1e0] sm:$0xf]
    %v6672 = vld [vmem:[%s5 + $0x1e4] sm:$0xf]
    %v6673 = vld [vmem:[%s5 + $0x1e8] sm:$0xf]
    %v6674 = vld [vmem:[%s5 + $0x1ec] sm:$0xf]
    %v6675 = vld [vmem:[%s5 + $0x1f0] sm:$0xf]
    %v6676 = vld [vmem:[%s5 + $0x1f4] sm:$0xf]
    %v6677 = vld [vmem:[%s5 + $0x1f8] sm:$0xf]
    %v6678 = vld [vmem:[%s5 + $0x1fc] sm:$0xf]
    %v6679 = vld [vmem:[%s5 + $0x200] sm:$0xf]
    %v6680 = vld [vmem:[%s5 + $0x204] sm:$0xf]
    %v6681 = vld [vmem:[%s5 + $0x208] sm:$0xf]
    %v6682 = vld [vmem:[%s5 + $0x20c] sm:$0xf]
    %v6683 = vld [vmem:[%s5 + $0x210] sm:$0xf]
    %v6684 = vld [vmem:[%s5 + $0x214] sm:$0xf]
    %v6685 = vld [vmem:[%s5 + $0x218] sm:$0xf]
    %v6686 = vld [vmem:[%s5 + $0x21c] sm:$0xf]
    %v6687 = vld [vmem:[%s5 + $0x220] sm:$0xf]
    %v6688 = vld [vmem:[%s5 + $0x224] sm:$0xf]
    %v6689 = vld [vmem:[%s5 + $0x228] sm:$0xf]
    %v6690 = vld [vmem:[%s5 + $0x22c] sm:$0xf]
    %v6691 = vld [vmem:[%s5 + $0x230] sm:$0xf]
    %v6692 = vld [vmem:[%s5 + $0x234] sm:$0xf]
    %v6693 = vld [vmem:[%s5 + $0x238] sm:$0xf]
    %v6694 = vld [vmem:[%s5 + $0x23c] sm:$0xf]
    %v6695 = vld [vmem:[%s5 + $0x240] sm:$0xf]
    %v6696 = vld [vmem:[%s5 + $0x244] sm:$0xf]
    %v6697 = vld [vmem:[%s5 + $0x248] sm:$0xf]
    %v6698 = vld [vmem:[%s5 + $0x24c] sm:$0xf]
    %v6699 = vld [vmem:[%s5 + $0x250] sm:$0xf]
    %v6700 = vld [vmem:[%s5 + $0x254] sm:$0xf]
    %v6701 = vld [vmem:[%s5 + $0x258] sm:$0xf]
    %v6702 = vld [vmem:[%s5 + $0x25c] sm:$0xf]
    %v6703 = vld [vmem:[%s5 + $0x260] sm:$0xf]
    %v6704 = vld [vmem:[%s5 + $0x264] sm:$0xf]
    %v6705 = vld [vmem:[%s5 + $0x268] sm:$0xf]
    %v6706 = vld [vmem:[%s5 + $0x26c] sm:$0xf]
    %v6707 = vld [vmem:[%s5 + $0x270] sm:$0xf]
    %v6708 = vld [vmem:[%s5 + $0x274] sm:$0xf]
    %v6709 = vld [vmem:[%s5 + $0x278] sm:$0xf]
    %v6710 = vld [vmem:[%s5 + $0x27c] sm:$0xf]
    %v6711 = vld [vmem:[%s5 + $0x280] sm:$0xf]
    %v6712 = vld [vmem:[%s5 + $0x284] sm:$0xf]
    %v6713 = vld [vmem:[%s5 + $0x288] sm:$0xf]
    %v6714 = vld [vmem:[%s5 + $0x28c] sm:$0xf]
    %v6715 = vld [vmem:[%s5 + $0x290] sm:$0xf]
    %v6716 = vld [vmem:[%s5 + $0x294] sm:$0xf]
    %v6717 = vld [vmem:[%s5 + $0x298] sm:$0xf]
    %v6718 = vld [vmem:[%s5 + $0x29c] sm:$0xf]
    %v6719 = vld [vmem:[%s5 + $0x2a0] sm:$0xf]
    %v6720 = vld [vmem:[%s5 + $0x2a4] sm:$0xf]
    %v6721 = vld [vmem:[%s5 + $0x2a8] sm:$0xf]
    %v6722 = vld [vmem:[%s5 + $0x2ac] sm:$0xf]
    %v6723 = vld [vmem:[%s5 + $0x2b0] sm:$0xf]
    %v6724 = vld [vmem:[%s5 + $0x2b4] sm:$0xf]
    %v6725 = vld [vmem:[%s5 + $0x2b8] sm:$0xf]
    %v6726 = vld [vmem:[%s5 + $0x2bc] sm:$0xf]
    %v6727 = vld [vmem:[%s5 + $0x2c0] sm:$0xf]
    %v6728 = vld [vmem:[%s5 + $0x2c4] sm:$0xf]
    %v6729 = vld [vmem:[%s5 + $0x2c8] sm:$0xf]
    %v6730 = vld [vmem:[%s5 + $0x2cc] sm:$0xf]
    %v6731 = vld [vmem:[%s5 + $0x2d0] sm:$0xf]
    %v6732 = vld [vmem:[%s5 + $0x2d4] sm:$0xf]
    %v6733 = vld [vmem:[%s5 + $0x2d8] sm:$0xf]
    %v6734 = vld [vmem:[%s5 + $0x2dc] sm:$0xf]
    %v6735 = vld [vmem:[%s5 + $0x2e0] sm:$0xf]
    %v6736 = vld [vmem:[%s5 + $0x2e4] sm:$0xf]
    %v6737 = vld [vmem:[%s5 + $0x2e8] sm:$0xf]
    %v6738 = vld [vmem:[%s5 + $0x2ec] sm:$0xf]
    %v6739 = vld [vmem:[%s5 + $0x2f0] sm:$0xf]
    %v6740 = vld [vmem:[%s5 + $0x2f4] sm:$0xf]
    %v6741 = vld [vmem:[%s5 + $0x2f8] sm:$0xf]
    %v6742 = vld [vmem:[%s5 + $0x2fc] sm:$0xf]
    %v6743 = vld [vmem:[%s5 + $0x300] sm:$0xf]
    %v6744 = vld [vmem:[%s5 + $0x304] sm:$0xf]
    %v6745 = vld [vmem:[%s5 + $0x308] sm:$0xf]
    %v6746 = vld [vmem:[%s5 + $0x30c] sm:$0xf]
    %v6747 = vld [vmem:[%s6] sm:$0x1]
    %v6749 = vlaneseq
    %v6750 = vshrl.u32 %v6749, 7
    %v6751 = vsub.s32 0, %v6750
    %v6752 = vrot.slane %v6747, %v6751
    %v6950 = vunpack.c.l.b16 %v6551
    %v6951 = vunpack.c.l.b16 %v6552
    %v6952 = vunpack.c.l.b16 %v6553
    %v6953 = vunpack.c.l.b16 %v6554
    %v6954 = vunpack.c.l.b16 %v6555
    %v6955 = vunpack.c.l.b16 %v6556
    %v6956 = vunpack.c.l.b16 %v6557
    %v6957 = vunpack.c.l.b16 %v6558
    %v6958 = vunpack.c.l.b16 %v6559
    %v6959 = vunpack.c.l.b16 %v6560
    %v6960 = vunpack.c.l.b16 %v6561
    %v6961 = vunpack.c.l.b16 %v6562
    %v6962 = vunpack.c.l.b16 %v6563
    %v6963 = vunpack.c.l.b16 %v6564
    %v6964 = vunpack.c.l.b16 %v6565
    %v6965 = vunpack.c.l.b16 %v6566
    %v6966 = vunpack.c.l.b16 %v6567
    %v6967 = vunpack.c.l.b16 %v6568
    %v6968 = vunpack.c.l.b16 %v6569
    %v6969 = vunpack.c.l.b16 %v6570
    %v6970 = vunpack.c.l.b16 %v6571
    %v6971 = vunpack.c.l.b16 %v6572
    %v6972 = vunpack.c.l.b16 %v6573
    %v6973 = vunpack.c.l.b16 %v6574
    %v6974 = vunpack.c.l.b16 %v6575
    %v6975 = vunpack.c.l.b16 %v6576
    %v6976 = vunpack.c.l.b16 %v6577
    %v6977 = vunpack.c.l.b16 %v6578
    %v6978 = vunpack.c.l.b16 %v6579
    %v6979 = vunpack.c.l.b16 %v6580
    %v6980 = vunpack.c.l.b16 %v6581
    %v6981 = vunpack.c.l.b16 %v6582
    %v6982 = vunpack.c.l.b16 %v6583
    %v6983 = vunpack.c.l.b16 %v6584
    %v6984 = vunpack.c.l.b16 %v6585
    %v6985 = vunpack.c.l.b16 %v6586
    %v6986 = vunpack.c.l.b16 %v6587
    %v6987 = vunpack.c.l.b16 %v6588
    %v6988 = vunpack.c.l.b16 %v6589
    %v6989 = vunpack.c.l.b16 %v6590
    %v6990 = vunpack.c.l.b16 %v6591
    %v6991 = vunpack.c.l.b16 %v6592
    %v6992 = vunpack.c.l.b16 %v6593
    %v6993 = vunpack.c.l.b16 %v6594
    %v6994 = vunpack.c.l.b16 %v6595
    %v6995 = vunpack.c.l.b16 %v6596
    %v6996 = vunpack.c.l.b16 %v6597
    %v6997 = vunpack.c.l.b16 %v6598
    %v6998 = vunpack.c.l.b16 %v6599
    %v6999 = vunpack.c.l.b16 %v6600
    %v7000 = vunpack.c.l.b16 %v6601
    %v7001 = vunpack.c.l.b16 %v6602
    %v7002 = vunpack.c.l.b16 %v6603
    %v7003 = vunpack.c.l.b16 %v6604
    %v7004 = vunpack.c.l.b16 %v6605
    %v7005 = vunpack.c.l.b16 %v6606
    %v7006 = vunpack.c.l.b16 %v6607
    %v7007 = vunpack.c.l.b16 %v6608
    %v7008 = vunpack.c.l.b16 %v6609
    %v7009 = vunpack.c.l.b16 %v6610
    %v7010 = vunpack.c.l.b16 %v6611
    %v7011 = vunpack.c.l.b16 %v6612
    %v7012 = vunpack.c.l.b16 %v6613
    %v7013 = vunpack.c.l.b16 %v6614
    %v7014 = vunpack.c.l.b16 %v6615
    %v7015 = vunpack.c.l.b16 %v6616
    %v7016 = vunpack.c.l.b16 %v6617
    %v7017 = vunpack.c.l.b16 %v6618
    %v7018 = vunpack.c.l.b16 %v6619
    %v7019 = vunpack.c.l.b16 %v6620
    %v7020 = vunpack.c.l.b16 %v6621
    %v7021 = vunpack.c.l.b16 %v6622
    %v7022 = vunpack.c.l.b16 %v6623
    %v7023 = vunpack.c.l.b16 %v6624
    %v7024 = vunpack.c.l.b16 %v6625
    %v7025 = vunpack.c.l.b16 %v6626
    %v7026 = vunpack.c.l.b16 %v6627
    %v7027 = vunpack.c.l.b16 %v6628
    %v7028 = vunpack.c.l.b16 %v6629
    %v7029 = vunpack.c.l.b16 %v6630
    %v7030 = vunpack.c.l.b16 %v6631
    %v7031 = vunpack.c.l.b16 %v6632
    %v7032 = vunpack.c.l.b16 %v6633
    %v7033 = vunpack.c.l.b16 %v6634
    %v7034 = vunpack.c.l.b16 %v6635
    %v7035 = vunpack.c.l.b16 %v6636
    %v7036 = vunpack.c.l.b16 %v6637
    %v7037 = vunpack.c.l.b16 %v6638
    %v7038 = vunpack.c.l.b16 %v6639
    %v7039 = vunpack.c.l.b16 %v6640
    %v7040 = vunpack.c.l.b16 %v6641
    %v7041 = vunpack.c.l.b16 %v6642
    %v7042 = vunpack.c.l.b16 %v6643
    %v7043 = vunpack.c.l.b16 %v6644
    %v7044 = vunpack.c.l.b16 %v6645
    %v7045 = vunpack.c.l.b16 %v6646
    %v7046 = vunpack.c.l.b16 %v6647
    %v7047 = vunpack.c.l.b16 %v6648
    %v7048 = vunpack.c.l.b16 %v6649
    %v7049 = vunpack.c.l.b16 %v6650
    %v7050 = vunpack.c.l.b16 %v6651
    %v7051 = vunpack.c.l.b16 %v6652
    %v7052 = vunpack.c.l.b16 %v6653
    %v7053 = vunpack.c.l.b16 %v6654
    %v7054 = vunpack.c.l.b16 %v6655
    %v7055 = vunpack.c.l.b16 %v6656
    %v7056 = vunpack.c.l.b16 %v6657
    %v7057 = vunpack.c.l.b16 %v6658
    %v7058 = vunpack.c.l.b16 %v6659
    %v7059 = vunpack.c.l.b16 %v6660
    %v7060 = vunpack.c.l.b16 %v6661
    %v7061 = vunpack.c.l.b16 %v6662
    %v7062 = vunpack.c.l.b16 %v6663
    %v7063 = vunpack.c.l.b16 %v6664
    %v7064 = vunpack.c.l.b16 %v6665
    %v7065 = vunpack.c.l.b16 %v6666
    %v7066 = vunpack.c.l.b16 %v6667
    %v7067 = vunpack.c.l.b16 %v6668
    %v7068 = vunpack.c.l.b16 %v6669
    %v7069 = vunpack.c.l.b16 %v6670
    %v7070 = vunpack.c.l.b16 %v6671
    %v7071 = vunpack.c.l.b16 %v6672
    %v7072 = vunpack.c.l.b16 %v6673
    %v7073 = vunpack.c.l.b16 %v6674
    %v7074 = vunpack.c.l.b16 %v6675
    %v7075 = vunpack.c.l.b16 %v6676
    %v7076 = vunpack.c.l.b16 %v6677
    %v7077 = vunpack.c.l.b16 %v6678
    %v7078 = vunpack.c.l.b16 %v6679
    %v7079 = vunpack.c.l.b16 %v6680
    %v7080 = vunpack.c.l.b16 %v6681
    %v7081 = vunpack.c.l.b16 %v6682
    %v7082 = vunpack.c.l.b16 %v6683
    %v7083 = vunpack.c.l.b16 %v6684
    %v7084 = vunpack.c.l.b16 %v6685
    %v7085 = vunpack.c.l.b16 %v6686
    %v7086 = vunpack.c.l.b16 %v6687
    %v7087 = vunpack.c.l.b16 %v6688
    %v7088 = vunpack.c.l.b16 %v6689
    %v7089 = vunpack.c.l.b16 %v6690
    %v7090 = vunpack.c.l.b16 %v6691
    %v7091 = vunpack.c.l.b16 %v6692
    %v7092 = vunpack.c.l.b16 %v6693
    %v7093 = vunpack.c.l.b16 %v6694
    %v7094 = vunpack.c.l.b16 %v6695
    %v7095 = vunpack.c.l.b16 %v6696
    %v7096 = vunpack.c.l.b16 %v6697
    %v7097 = vunpack.c.l.b16 %v6698
    %v7098 = vunpack.c.l.b16 %v6699
    %v7099 = vunpack.c.l.b16 %v6700
    %v7100 = vunpack.c.l.b16 %v6701
    %v7101 = vunpack.c.l.b16 %v6702
    %v7102 = vunpack.c.l.b16 %v6703
    %v7103 = vunpack.c.l.b16 %v6704
    %v7104 = vunpack.c.l.b16 %v6705
    %v7105 = vunpack.c.l.b16 %v6706
    %v7106 = vunpack.c.l.b16 %v6707
    %v7107 = vunpack.c.l.b16 %v6708
    %v7108 = vunpack.c.l.b16 %v6709
    %v7109 = vunpack.c.l.b16 %v6710
    %v7110 = vunpack.c.l.b16 %v6711
    %v7111 = vunpack.c.l.b16 %v6712
    %v7112 = vunpack.c.l.b16 %v6713
    %v7113 = vunpack.c.l.b16 %v6714
    %v7114 = vunpack.c.l.b16 %v6715
    %v7115 = vunpack.c.l.b16 %v6716
    %v7116 = vunpack.c.l.b16 %v6717
    %v7117 = vunpack.c.l.b16 %v6718
    %v7118 = vunpack.c.l.b16 %v6719
    %v7119 = vunpack.c.l.b16 %v6720
    %v7120 = vunpack.c.l.b16 %v6721
    %v7121 = vunpack.c.l.b16 %v6722
    %v7122 = vunpack.c.l.b16 %v6723
    %v7123 = vunpack.c.l.b16 %v6724
    %v7124 = vunpack.c.l.b16 %v6725
    %v7125 = vunpack.c.l.b16 %v6726
    %v7126 = vunpack.c.l.b16 %v6727
    %v7127 = vunpack.c.l.b16 %v6728
    %v7128 = vunpack.c.l.b16 %v6729
    %v7129 = vunpack.c.l.b16 %v6730
    %v7130 = vunpack.c.l.b16 %v6731
    %v7131 = vunpack.c.l.b16 %v6732
    %v7132 = vunpack.c.l.b16 %v6733
    %v7133 = vunpack.c.l.b16 %v6734
    %v7134 = vunpack.c.l.b16 %v6735
    %v7135 = vunpack.c.l.b16 %v6736
    %v7136 = vunpack.c.l.b16 %v6737
    %v7137 = vunpack.c.l.b16 %v6738
    %v7138 = vunpack.c.l.b16 %v6739
    %v7139 = vunpack.c.l.b16 %v6740
    %v7140 = vunpack.c.l.b16 %v6741
    %v7141 = vunpack.c.l.b16 %v6742
    %v7142 = vunpack.c.l.b16 %v6743
    %v7143 = vunpack.c.l.b16 %v6744
    %v7144 = vunpack.c.l.b16 %v6745
    %v7145 = vunpack.c.l.b16 %v6746
    %v7146 = vpack.c.b16 %v6951, %v6950
    %v7147 = vpack.c.b16 %v6953, %v6952
    %v7148 = vpack.c.b16 %v6955, %v6954
    %v7149 = vpack.c.b16 %v6957, %v6956
    %v7150 = vpack.c.b16 %v6959, %v6958
    %v7151 = vpack.c.b16 %v6961, %v6960
    %v7152 = vpack.c.b16 %v6963, %v6962
    %v7153 = vpack.c.b16 %v6965, %v6964
    %v7154 = vpack.c.b16 %v6967, %v6966
    %v7155 = vpack.c.b16 %v6969, %v6968
    %v7156 = vpack.c.b16 %v6971, %v6970
    %v7157 = vpack.c.b16 %v6973, %v6972
    %v7158 = vpack.c.b16 %v6975, %v6974
    %v7159 = vpack.c.b16 %v6977, %v6976
    %v7160 = vpack.c.b16 %v6979, %v6978
    %v7161 = vpack.c.b16 %v6981, %v6980
    %v7162 = vpack.c.b16 %v6983, %v6982
    %v7163 = vpack.c.b16 %v6985, %v6984
    %v7164 = vpack.c.b16 %v6987, %v6986
    %v7165 = vpack.c.b16 %v6989, %v6988
    %v7166 = vpack.c.b16 %v6991, %v6990
    %v7167 = vpack.c.b16 %v6993, %v6992
    %v7168 = vpack.c.b16 %v6995, %v6994
    %v7169 = vpack.c.b16 %v6997, %v6996
    %v7170 = vpack.c.b16 %v6999, %v6998
    %v7171 = vpack.c.b16 %v7001, %v7000
    %v7172 = vpack.c.b16 %v7003, %v7002
    %v7173 = vpack.c.b16 %v7005, %v7004
    %v7174 = vpack.c.b16 %v7007, %v7006
    %v7175 = vpack.c.b16 %v7009, %v7008
    %v7176 = vpack.c.b16 %v7011, %v7010
    %v7177 = vpack.c.b16 %v7013, %v7012
    %v7178 = vpack.c.b16 %v7015, %v7014
    %v7179 = vpack.c.b16 %v7017, %v7016
    %v7180 = vpack.c.b16 %v7019, %v7018
    %v7181 = vpack.c.b16 %v7021, %v7020
    %v7182 = vpack.c.b16 %v7023, %v7022
    %v7183 = vpack.c.b16 %v7025, %v7024
    %v7184 = vpack.c.b16 %v7027, %v7026
    %v7185 = vpack.c.b16 %v7029, %v7028
    %v7186 = vpack.c.b16 %v7031, %v7030
    %v7187 = vpack.c.b16 %v7033, %v7032
    %v7188 = vpack.c.b16 %v7035, %v7034
    %v7189 = vpack.c.b16 %v7037, %v7036
    %v7190 = vpack.c.b16 %v7039, %v7038
    %v7191 = vpack.c.b16 %v7041, %v7040
    %v7192 = vpack.c.b16 %v7043, %v7042
    %v7193 = vpack.c.b16 %v7045, %v7044
    %v7194 = vpack.c.b16 %v7047, %v7046
    %v7195 = vpack.c.b16 %v7049, %v7048
    %v7196 = vpack.c.b16 %v7051, %v7050
    %v7197 = vpack.c.b16 %v7053, %v7052
    %v7198 = vpack.c.b16 %v7055, %v7054
    %v7199 = vpack.c.b16 %v7057, %v7056
    %v7200 = vpack.c.b16 %v7059, %v7058
    %v7201 = vpack.c.b16 %v7061, %v7060
    %v7202 = vpack.c.b16 %v7063, %v7062
    %v7203 = vpack.c.b16 %v7065, %v7064
    %v7204 = vpack.c.b16 %v7067, %v7066
    %v7205 = vpack.c.b16 %v7069, %v7068
    %v7206 = vpack.c.b16 %v7071, %v7070
    %v7207 = vpack.c.b16 %v7073, %v7072
    %v7208 = vpack.c.b16 %v7075, %v7074
    %v7209 = vpack.c.b16 %v7077, %v7076
    %v7210 = vpack.c.b16 %v7079, %v7078
    %v7211 = vpack.c.b16 %v7081, %v7080
    %v7212 = vpack.c.b16 %v7083, %v7082
    %v7213 = vpack.c.b16 %v7085, %v7084
    %v7214 = vpack.c.b16 %v7087, %v7086
    %v7215 = vpack.c.b16 %v7089, %v7088
    %v7216 = vpack.c.b16 %v7091, %v7090
    %v7217 = vpack.c.b16 %v7093, %v7092
    %v7218 = vpack.c.b16 %v7095, %v7094
    %v7219 = vpack.c.b16 %v7097, %v7096
    %v7220 = vpack.c.b16 %v7099, %v7098
    %v7221 = vpack.c.b16 %v7101, %v7100
    %v7222 = vpack.c.b16 %v7103, %v7102
    %v7223 = vpack.c.b16 %v7105, %v7104
    %v7224 = vpack.c.b16 %v7107, %v7106
    %v7225 = vpack.c.b16 %v7109, %v7108
    %v7226 = vpack.c.b16 %v7111, %v7110
    %v7227 = vpack.c.b16 %v7113, %v7112
    %v7228 = vpack.c.b16 %v7115, %v7114
    %v7229 = vpack.c.b16 %v7117, %v7116
    %v7230 = vpack.c.b16 %v7119, %v7118
    %v7231 = vpack.c.b16 %v7121, %v7120
    %v7232 = vpack.c.b16 %v7123, %v7122
    %v7233 = vpack.c.b16 %v7125, %v7124
    %v7234 = vpack.c.b16 %v7127, %v7126
    %v7235 = vpack.c.b16 %v7129, %v7128
    %v7236 = vpack.c.b16 %v7131, %v7130
    %v7237 = vpack.c.b16 %v7133, %v7132
    %v7238 = vpack.c.b16 %v7135, %v7134
    %v7239 = vpack.c.b16 %v7137, %v7136
    %v7240 = vpack.c.b16 %v7139, %v7138
    %v7241 = vpack.c.b16 %v7141, %v7140
    %v7242 = vpack.c.b16 %v7143, %v7142
    %v7243 = vpack.c.b16 %v7145, %v7144
    %vm7342 = vcmask 261120
    %v7344 = vsel %vm7342, %v6550, 0
    %7346 = vmatprep.subr.bf16.mxu0 0
    %7347 = vmatpush1.bf16.msra.mxu0 %v7146
    %7348 = vmatprep.subr.bf16.mxu0 0
    %7349 = vmatpush1.bf16.msra.mxu0 %v7147
    %7350 = vmatprep.subr.bf16.mxu0 0
    %7351 = vmatpush1.bf16.msra.mxu0 %v7148
    %7352 = vmatprep.subr.bf16.mxu0 0
    %7353 = vmatpush1.bf16.msra.mxu0 %v7149
    %7354 = vmatprep.subr.bf16.mxu0 0
    %7355 = vmatpush1.bf16.msra.mxu0 %v7150
    %7356 = vmatprep.subr.bf16.mxu0 0
    %7357 = vmatpush1.bf16.msra.mxu0 %v7151
    %7358 = vmatprep.subr.bf16.mxu0 0
    %7359 = vmatpush1.bf16.msra.mxu0 %v7152
    %7360 = vmatprep.subr.bf16.mxu0 0
    %7361 = vmatpush1.bf16.msra.mxu0 %v7153
    %7362 = vmatprep.subr.bf16.mxu0 0
    %7363 = vmatpush1.bf16.msra.mxu0 %v7154
    %7364 = vmatprep.subr.bf16.mxu0 0
    %7365 = vmatpush1.bf16.msra.mxu0 %v7155
    %7366 = vmatprep.subr.bf16.mxu0 0
    %7367 = vmatpush1.bf16.msra.mxu0 %v7156
    %7368 = vmatprep.subr.bf16.mxu0 0
    %7369 = vmatpush1.bf16.msra.mxu0 %v7157
    %7370 = vmatprep.subr.bf16.mxu0 0
    %7371 = vmatpush1.bf16.msra.mxu0 %v7158
    %7372 = vmatprep.subr.bf16.mxu0 0
    %7373 = vmatpush1.bf16.msra.mxu0 %v7159
    %7374 = vmatprep.subr.bf16.mxu0 0
    %7375 = vmatpush1.bf16.msra.mxu0 %v7160
    %7376 = vmatprep.subr.bf16.mxu0 0
    %7377 = vmatpush1.bf16.msra.mxu0 %v7161
    %7378 = vmatprep.mubr.bf16.mxu0 %v6539
    %7379 = vmatmul.mubr.bf16.gmra.mrb[0].mxu0 %v6538
    %v7380 = vpop.f32.mrb[0].mxu0
    %v7381 = vadd.f32 %v6752, %v7380
    %v7382 = vpop.f32.mrb[0].mxu0
    %v7383 = vpop.f32.mrb[0].mxu0
    %v7384 = vpop.f32.mrb[0].mxu0
    %7385 = vdwg.mxu0
    %7386 = vmatprep.subr.bf16.mxu0 0
    %7387 = vmatpush1.bf16.msra.mxu0 %v7162
    %7388 = vmatprep.subr.bf16.mxu0 0
    %7389 = vmatpush1.bf16.msra.mxu0 %v7163
    %7390 = vmatprep.subr.bf16.mxu0 0
    %7391 = vmatpush1.bf16.msra.mxu0 %v7164
    %7392 = vmatprep.subr.bf16.mxu0 0
    %7393 = vmatpush1.bf16.msra.mxu0 %v7165
    %7394 = vmatprep.subr.bf16.mxu0 0
    %7395 = vmatpush1.bf16.msra.mxu0 %v7166
    %7396 = vmatprep.subr.bf16.mxu0 0
    %7397 = vmatpush1.bf16.msra.mxu0 %v7167
    %7398 = vmatprep.subr.bf16.mxu0 0
    %7399 = vmatpush1.bf16.msra.mxu0 %v7168
    %7400 = vmatprep.subr.bf16.mxu0 0
    %7401 = vmatpush1.bf16.msra.mxu0 %v7169
    %7402 = vmatprep.subr.bf16.mxu0 0
    %7403 = vmatpush1.bf16.msra.mxu0 %v7170
    %7404 = vmatprep.subr.bf16.mxu0 0
    %7405 = vmatpush1.bf16.msra.mxu0 %v7171
    %7406 = vmatprep.subr.bf16.mxu0 0
    %7407 = vmatpush1.bf16.msra.mxu0 %v7172
    %7408 = vmatprep.subr.bf16.mxu0 0
    %7409 = vmatpush1.bf16.msra.mxu0 %v7173
    %7410 = vmatprep.subr.bf16.mxu0 0
    %7411 = vmatpush1.bf16.msra.mxu0 %v7174
    %7412 = vmatprep.subr.bf16.mxu0 0
    %7413 = vmatpush1.bf16.msra.mxu0 %v7175
    %7414 = vmatprep.subr.bf16.mxu0 0
    %7415 = vmatpush1.bf16.msra.mxu0 %v7176
    %7416 = vmatprep.subr.bf16.mxu0 0
    %7417 = vmatpush1.bf16.msra.mxu0 %v7177
    %7418 = vmatprep.mubr.bf16.mxu0 %v6541
    %7419 = vmatmul.mubr.bf16.gmra.mrb[0].mxu0 %v6540
    %v7420 = vpop.f32.mrb[0].mxu0
    %v7421 = vadd.f32 %v7381, %v7420
    %v7422 = vpop.f32.mrb[0].mxu0
    %v7423 = vpop.f32.mrb[0].mxu0
    %v7424 = vpop.f32.mrb[0].mxu0
    %7425 = vdwg.mxu0
    %7426 = vmatprep.subr.bf16.mxu0 0
    %7427 = vmatpush1.bf16.msra.mxu0 %v7178
    %7428 = vmatprep.subr.bf16.mxu0 0
    %7429 = vmatpush1.bf16.msra.mxu0 %v7179
    %7430 = vmatprep.subr.bf16.mxu0 0
    %7431 = vmatpush1.bf16.msra.mxu0 %v7180
    %7432 = vmatprep.subr.bf16.mxu0 0
    %7433 = vmatpush1.bf16.msra.mxu0 %v7181
    %7434 = vmatprep.subr.bf16.mxu0 0
    %7435 = vmatpush1.bf16.msra.mxu0 %v7182
    %7436 = vmatprep.subr.bf16.mxu0 0
    %7437 = vmatpush1.bf16.msra.mxu0 %v7183
    %7438 = vmatprep.subr.bf16.mxu0 0
    %7439 = vmatpush1.bf16.msra.mxu0 %v7184
    %7440 = vmatprep.subr.bf16.mxu0 0
    %7441 = vmatpush1.bf16.msra.mxu0 %v7185
    %7442 = vmatprep.subr.bf16.mxu0 0
    %7443 = vmatpush1.bf16.msra.mxu0 %v7186
    %7444 = vmatprep.subr.bf16.mxu0 0
    %7445 = vmatpush1.bf16.msra.mxu0 %v7187
    %7446 = vmatprep.subr.bf16.mxu0 0
    %7447 = vmatpush1.bf16.msra.mxu0 %v7188
    %7448 = vmatprep.subr.bf16.mxu0 0
    %7449 = vmatpush1.bf16.msra.mxu0 %v7189
    %7450 = vmatprep.subr.bf16.mxu0 0
    %7451 = vmatpush1.bf16.msra.mxu0 %v7190
    %7452 = vmatprep.subr.bf16.mxu0 0
    %7453 = vmatpush1.bf16.msra.mxu0 %v7191
    %7454 = vmatprep.subr.bf16.mxu0 0
    %7455 = vmatpush1.bf16.msra.mxu0 %v7192
    %7456 = vmatprep.subr.bf16.mxu0 0
    %7457 = vmatpush1.bf16.msra.mxu0 %v7193
    %7458 = vmatprep.mubr.bf16.mxu0 %v6543
    %7459 = vmatmul.mubr.bf16.gmra.mrb[0].mxu0 %v6542
    %v7460 = vpop.f32.mrb[0].mxu0
    %v7461 = vadd.f32 %v7421, %v7460
    %v7462 = vpop.f32.mrb[0].mxu0
    %v7463 = vpop.f32.mrb[0].mxu0
    %v7464 = vpop.f32.mrb[0].mxu0
    %7465 = vdwg.mxu0
    %7466 = vmatprep.subr.bf16.mxu0 0
    %7467 = vmatpush1.bf16.msra.mxu0 %v7194
    %7468 = vmatprep.subr.bf16.mxu0 0
    %7469 = vmatpush1.bf16.msra.mxu0 %v7195
    %7470 = vmatprep.subr.bf16.mxu0 0
    %7471 = vmatpush1.bf16.msra.mxu0 %v7196
    %7472 = vmatprep.subr.bf16.mxu0 0
    %7473 = vmatpush1.bf16.msra.mxu0 %v7197
    %7474 = vmatprep.subr.bf16.mxu0 0
    %7475 = vmatpush1.bf16.msra.mxu0 %v7198
    %7476 = vmatprep.subr.bf16.mxu0 0
    %7477 = vmatpush1.bf16.msra.mxu0 %v7199
    %7478 = vmatprep.subr.bf16.mxu0 0
    %7479 = vmatpush1.bf16.msra.mxu0 %v7200
    %7480 = vmatprep.subr.bf16.mxu0 0
    %7481 = vmatpush1.bf16.msra.mxu0 %v7201
    %7482 = vmatprep.subr.bf16.mxu0 0
    %7483 = vmatpush1.bf16.msra.mxu0 %v7202
    %7484 = vmatprep.subr.bf16.mxu0 0
    %7485 = vmatpush1.bf16.msra.mxu0 %v7203
    %7486 = vmatprep.subr.bf16.mxu0 0
    %7487 = vmatpush1.bf16.msra.mxu0 %v7204
    %7488 = vmatprep.subr.bf16.mxu0 0
    %7489 = vmatpush1.bf16.msra.mxu0 %v7205
    %7490 = vmatprep.subr.bf16.mxu0 0
    %7491 = vmatpush1.bf16.msra.mxu0 %v7206
    %7492 = vmatprep.subr.bf16.mxu0 0
    %7493 = vmatpush1.bf16.msra.mxu0 %v7207
    %7494 = vmatprep.subr.bf16.mxu0 0
    %7495 = vmatpush1.bf16.msra.mxu0 %v7208
    %7496 = vmatprep.subr.bf16.mxu0 0
    %7497 = vmatpush1.bf16.msra.mxu0 %v7209
    %7498 = vmatprep.mubr.bf16.mxu0 %v6545
    %7499 = vmatmul.mubr.bf16.gmra.mrb[0].mxu0 %v6544
    %v7500 = vpop.f32.mrb[0].mxu0
    %v7501 = vadd.f32 %v7461, %v7500
    %v7502 = vpop.f32.mrb[0].mxu0
    %v7503 = vpop.f32.mrb[0].mxu0
    %v7504 = vpop.f32.mrb[0].mxu0
    %7505 = vdwg.mxu0
    %7506 = vmatprep.subr.bf16.mxu0 0
    %7507 = vmatpush1.bf16.msra.mxu0 %v7210
    %7508 = vmatprep.subr.bf16.mxu0 0
    %7509 = vmatpush1.bf16.msra.mxu0 %v7211
    %7510 = vmatprep.subr.bf16.mxu0 0
    %7511 = vmatpush1.bf16.msra.mxu0 %v7212
    %7512 = vmatprep.subr.bf16.mxu0 0
    %7513 = vmatpush1.bf16.msra.mxu0 %v7213
    %7514 = vmatprep.subr.bf16.mxu0 0
    %7515 = vmatpush1.bf16.msra.mxu0 %v7214
    %7516 = vmatprep.subr.bf16.mxu0 0
    %7517 = vmatpush1.bf16.msra.mxu0 %v7215
    %7518 = vmatprep.subr.bf16.mxu0 0
    %7519 = vmatpush1.bf16.msra.mxu0 %v7216
    %7520 = vmatprep.subr.bf16.mxu0 0
    %7521 = vmatpush1.bf16.msra.mxu0 %v7217
    %7522 = vmatprep.subr.bf16.mxu0 0
    %7523 = vmatpush1.bf16.msra.mxu0 %v7218
    %7524 = vmatprep.subr.bf16.mxu0 0
    %7525 = vmatpush1.bf16.msra.mxu0 %v7219
    %7526 = vmatprep.subr.bf16.mxu0 0
    %7527 = vmatpush1.bf16.msra.mxu0 %v7220
    %7528 = vmatprep.subr.bf16.mxu0 0
    %7529 = vmatpush1.bf16.msra.mxu0 %v7221
    %7530 = vmatprep.subr.bf16.mxu0 0
    %7531 = vmatpush1.bf16.msra.mxu0 %v7222
    %7532 = vmatprep.subr.bf16.mxu0 0
    %7533 = vmatpush1.bf16.msra.mxu0 %v7223
    %7534 = vmatprep.subr.bf16.mxu0 0
    %7535 = vmatpush1.bf16.msra.mxu0 %v7224
    %7536 = vmatprep.subr.bf16.mxu0 0
    %7537 = vmatpush1.bf16.msra.mxu0 %v7225
    %7538 = vmatprep.mubr.bf16.mxu0 %v6547
    %7539 = vmatmul.mubr.bf16.gmra.mrb[0].mxu0 %v6546
    %v7540 = vpop.f32.mrb[0].mxu0
    %v7541 = vadd.f32 %v7501, %v7540
    %v7542 = vpop.f32.mrb[0].mxu0
    %v7543 = vpop.f32.mrb[0].mxu0
    %v7544 = vpop.f32.mrb[0].mxu0
    %7545 = vdwg.mxu0
    %7546 = vmatprep.subr.bf16.mxu0 0
    %7547 = vmatpush1.bf16.msra.mxu0 %v7226
    %7548 = vmatprep.subr.bf16.mxu0 0
    %7549 = vmatpush1.bf16.msra.mxu0 %v7227
    %7550 = vmatprep.subr.bf16.mxu0 0
    %7551 = vmatpush1.bf16.msra.mxu0 %v7228
    %7552 = vmatprep.subr.bf16.mxu0 0
    %7553 = vmatpush1.bf16.msra.mxu0 %v7229
    %7554 = vmatprep.subr.bf16.mxu0 0
    %7555 = vmatpush1.bf16.msra.mxu0 %v7230
    %7556 = vmatprep.subr.bf16.mxu0 0
    %7557 = vmatpush1.bf16.msra.mxu0 %v7231
    %7558 = vmatprep.subr.bf16.mxu0 0
    %7559 = vmatpush1.bf16.msra.mxu0 %v7232
    %7560 = vmatprep.subr.bf16.mxu0 0
    %7561 = vmatpush1.bf16.msra.mxu0 %v7233
    %7562 = vmatprep.subr.bf16.mxu0 0
    %7563 = vmatpush1.bf16.msra.mxu0 %v7234
    %7564 = vmatprep.subr.bf16.mxu0 0
    %7565 = vmatpush1.bf16.msra.mxu0 %v7235
    %7566 = vmatprep.subr.bf16.mxu0 0
    %7567 = vmatpush1.bf16.msra.mxu0 %v7236
    %7568 = vmatprep.subr.bf16.mxu0 0
    %7569 = vmatpush1.bf16.msra.mxu0 %v7237
    %7570 = vmatprep.subr.bf16.mxu0 0
    %7571 = vmatpush1.bf16.msra.mxu0 %v7238
    %7572 = vmatprep.subr.bf16.mxu0 0
    %7573 = vmatpush1.bf16.msra.mxu0 %v7239
    %7574 = vmatprep.subr.bf16.mxu0 0
    %7575 = vmatpush1.bf16.msra.mxu0 %v7240
    %7576 = vmatprep.subr.bf16.mxu0 0
    %7577 = vmatpush1.bf16.msra.mxu0 %v7241
    %7578 = vmatprep.mubr.bf16.mxu0 %v6549
    %7579 = vmatmul.mubr.bf16.gmra.mrb[0].mxu0 %v6548
    %v7580 = vpop.f32.mrb[0].mxu0
    %v7581 = vadd.f32 %v7541, %v7580
    %v7582 = vpop.f32.mrb[0].mxu0
    %v7583 = vpop.f32.mrb[0].mxu0
    %v7584 = vpop.f32.mrb[0].mxu0
    %7585 = vdwg.mxu0
    %7586 = vmatprep.subr.bf16.mxu0 0
    %7587 = vmatpush1.bf16.msra.mxu0 %v7242
    %7588 = vmatprep.subr.bf16.mxu0 0
    %7589 = vmatpush1.bf16.msra.mxu0 %v7243
    %7590 = vmatprep.subr.bf16.mxu0 0
    %7591 = vmatpush1.bf16.msra.mxu0 0
    %7592 = vmatprep.subr.bf16.mxu0 0
    %7593 = vmatpush1.bf16.msra.mxu0 0
    %7594 = vmatprep.subr.bf16.mxu0 0
    %7595 = vmatpush1.bf16.msra.mxu0 0
    %7596 = vmatprep.subr.bf16.mxu0 0
    %7597 = vmatpush1.bf16.msra.mxu0 0
    %7598 = vmatprep.subr.bf16.mxu0 0
    %7599 = vmatpush1.bf16.msra.mxu0 0
    %7600 = vmatprep.subr.bf16.mxu0 0
    %7601 = vmatpush1.bf16.msra.mxu0 0
    %7602 = vmatprep.subr.bf16.mxu0 0
    %7603 = vmatpush1.bf16.msra.mxu0 0
    %7604 = vmatprep.subr.bf16.mxu0 0
    %7605 = vmatpush1.bf16.msra.mxu0 0
    %7606 = vmatprep.subr.bf16.mxu0 0
    %7607 = vmatpush1.bf16.msra.mxu0 0
    %7608 = vmatprep.subr.bf16.mxu0 0
    %7609 = vmatpush1.bf16.msra.mxu0 0
    %7610 = vmatprep.subr.bf16.mxu0 0
    %7611 = vmatpush1.bf16.msra.mxu0 0
    %7612 = vmatprep.subr.bf16.mxu0 0
    %7613 = vmatpush1.bf16.msra.mxu0 0
    %7614 = vmatprep.subr.bf16.mxu0 0
    %7615 = vmatpush1.bf16.msra.mxu0 0
    %7616 = vmatprep.subr.bf16.mxu0 0
    %7617 = vmatpush1.bf16.msra.mxu0 0
    %7618 = vmatprep.mubr.bf16.mxu0 0
    %7619 = vmatmul.mubr.bf16.gmra.mrb[0].mxu0 %v7344
    %v7620 = vpop.f32.mrb[0].mxu0
    %v7621 = vadd.f32 %v7581, %v7620
    %v7622 = vpop.f32.mrb[0].mxu0
    %v7623 = vpop.f32.mrb[0].mxu0
    %v7624 = vpop.f32.mrb[0].mxu0
    %7625 = vdwg.mxu0
    %v7626 = vlaneseq
    %v7627 = vand.u32 %v7626, 127
    %vm7628 = vcmp.lt.s32.totalorder %v7627, 32
    %v7629 = vmax.f32 %v7621, 0.0
    %v7630 = vsel %vm7628, %v7621, %v7629
    %v7631 = vpack.c.bf16 %v7630, %v7630
    %v7632 = vld [vmem:[%s7] sm:$0xf]
    %v7633 = vld [vmem:[%s7 + $0x4] sm:$0xf]
    %v7634 = vld [vmem:[%s7 + $0x8] sm:$0xf]
    %v7635 = vld [vmem:[%s7 + $0xc] sm:$0xf]
    %v7636 = vld [vmem:[%s7 + $0x10] sm:$0xf]
    %v7637 = vld [vmem:[%s7 + $0x14] sm:$0xf]
    %v7638 = vld [vmem:[%s7 + $0x18] sm:$0xf]
    %v7639 = vld [vmem:[%s7 + $0x1c] sm:$0xf]
    %v7640 = vld [vmem:[%s7 + $0x20] sm:$0xf]
    %v7641 = vld [vmem:[%s7 + $0x24] sm:$0xf]
    %v7642 = vld [vmem:[%s7 + $0x28] sm:$0xf]
    %v7643 = vld [vmem:[%s7 + $0x2c] sm:$0xf]
    %v7644 = vld [vmem:[%s8] sm:$0x1]
    %v7646 = vlaneseq
    %v7647 = vshrl.u32 %v7646, 7
    %v7648 = vsub.s32 0, %v7647
    %v7649 = vrot.slane %v7644, %v7648
    %v7663 = vunpack.c.l.b16 %v7632
    %v7664 = vunpack.c.l.b16 %v7633
    %v7665 = vunpack.c.l.b16 %v7634
    %v7666 = vunpack.c.l.b16 %v7635
    %v7667 = vunpack.c.l.b16 %v7636
    %v7668 = vunpack.c.l.b16 %v7637
    %v7669 = vunpack.c.l.b16 %v7638
    %v7670 = vunpack.c.l.b16 %v7639
    %v7671 = vunpack.c.l.b16 %v7640
    %v7672 = vunpack.c.l.b16 %v7641
    %v7673 = vunpack.c.l.b16 %v7642
    %v7674 = vunpack.c.l.b16 %v7643
    %v7675 = vpack.c.b16 %v7664, %v7663
    %v7676 = vpack.c.b16 %v7666, %v7665
    %v7677 = vpack.c.b16 %v7668, %v7667
    %v7678 = vpack.c.b16 %v7670, %v7669
    %v7679 = vpack.c.b16 %v7672, %v7671
    %v7680 = vpack.c.b16 %v7674, %v7673
    %vm7687 = vcmask 785408
    %v7689 = vsel %vm7687, %v7631, 0
    %7691 = vmatprep.subr.bf16.mxu0 0
    %7692 = vmatpush1.bf16.msra.mxu0 %v7675
    %7693 = vmatprep.subr.bf16.mxu0 0
    %7694 = vmatpush1.bf16.msra.mxu0 %v7676
    %7695 = vmatprep.subr.bf16.mxu0 0
    %7696 = vmatpush1.bf16.msra.mxu0 %v7677
    %7697 = vmatprep.subr.bf16.mxu0 0
    %7698 = vmatpush1.bf16.msra.mxu0 %v7678
    %7699 = vmatprep.subr.bf16.mxu0 0
    %7700 = vmatpush1.bf16.msra.mxu0 %v7679
    %7701 = vmatprep.subr.bf16.mxu0 0
    %7702 = vmatpush1.bf16.msra.mxu0 %v7680
    %7703 = vmatprep.subr.bf16.mxu0 0
    %7704 = vmatpush1.bf16.msra.mxu0 0
    %7705 = vmatprep.subr.bf16.mxu0 0
    %7706 = vmatpush1.bf16.msra.mxu0 0
    %7707 = vmatprep.subr.bf16.mxu0 0
    %7708 = vmatpush1.bf16.msra.mxu0 0
    %7709 = vmatprep.subr.bf16.mxu0 0
    %7710 = vmatpush1.bf16.msra.mxu0 0
    %7711 = vmatprep.subr.bf16.mxu0 0
    %7712 = vmatpush1.bf16.msra.mxu0 0
    %7713 = vmatprep.subr.bf16.mxu0 0
    %7714 = vmatpush1.bf16.msra.mxu0 0
    %7715 = vmatprep.subr.bf16.mxu0 0
    %7716 = vmatpush1.bf16.msra.mxu0 0
    %7717 = vmatprep.subr.bf16.mxu0 0
    %7718 = vmatpush1.bf16.msra.mxu0 0
    %7719 = vmatprep.subr.bf16.mxu0 0
    %7720 = vmatpush1.bf16.msra.mxu0 0
    %7721 = vmatprep.subr.bf16.mxu0 0
    %7722 = vmatpush1.bf16.msra.mxu0 0
    %7723 = vmatprep.mubr.bf16.mxu0 0
    %7724 = vmatmul.mubr.bf16.gmra.mrb[0].mxu0 %v7689
    %v7725 = vpop.f32.mrb[0].mxu0
    %v7726 = vadd.f32 %v7649, %v7725
    %v7727 = vpop.f32.mrb[0].mxu0
    %v7728 = vpop.f32.mrb[0].mxu0
    %v7729 = vpop.f32.mrb[0].mxu0
    %7730 = vdwg.mxu0
    %v7731 = vmul.f32 %v7726, %v7726
    %v7733 = vsel %vm7342, 0.03125, 0
    %v7736 = vsel %vm7342, %v7731, 0
    %7738 = vmatprep.subr.mxu0 0.0
    %7739 = vmatpush1.xpose.msra.mxu0 %v7736
    %7740 = vmatprep.subr.mxu0 0.0
    %7741 = vmatpush1.xpose.msra.mxu0 0.0
    %7742 = vmatprep.subr.mxu0 0.0
    %7743 = vmatpush1.xpose.msra.mxu0 0.0
    %7744 = vmatprep.subr.mxu0 0.0
    %7745 = vmatpush1.xpose.msra.mxu0 0.0
    %7746 = vmatprep.subr.mxu0 0.0
    %7747 = vmatpush1.xpose.msra.mxu0 0.0
    %7748 = vmatprep.subr.mxu0 0.0
    %7749 = vmatpush1.xpose.msra.mxu0 0.0
    %7750 = vmatprep.subr.mxu0 0.0
    %7751 = vmatpush1.xpose.msra.mxu0 0.0
    %7752 = vmatprep.subr.mxu0 0.0
    %7753 = vmatpush1.xpose.msra.mxu0 0.0
    %7754 = vmatprep.subr.mxu0 0.0
    %7755 = vmatpush1.xpose.msra.mxu0 0.0
    %7756 = vmatprep.subr.mxu0 0.0
    %7757 = vmatpush1.xpose.msra.mxu0 0.0
    %7758 = vmatprep.subr.mxu0 0.0
    %7759 = vmatpush1.xpose.msra.mxu0 0.0
    %7760 = vmatprep.subr.mxu0 0.0
    %7761 = vmatpush1.xpose.msra.mxu0 0.0
    %7762 = vmatprep.subr.mxu0 0.0
    %7763 = vmatpush1.xpose.msra.mxu0 0.0
    %7764 = vmatprep.subr.mxu0 0.0
    %7765 = vmatpush1.xpose.msra.mxu0 0.0
    %7766 = vmatprep.subr.mxu0 0.0
    %7767 = vmatpush1.xpose.msra.mxu0 0.0
    %7768 = vmatprep.subr.mxu0 0.0
    %7769 = vmatpush1.xpose.msra.mxu0 0.0
    %7770 = vmatprep.subr.mxu0 0.0
    %7771 = vmatpush1.xpose.msra.mxu0 0.0
    %7772 = vmatprep.subr.mxu0 0.0
    %7773 = vmatpush1.xpose.msra.mxu0 0.0
    %7774 = vmatprep.subr.mxu0 0.0
    %7775 = vmatpush1.xpose.msra.mxu0 0.0
    %7776 = vmatprep.subr.mxu0 0.0
    %7777 = vmatpush1.xpose.msra.mxu0 0.0
    %7778 = vmatprep.subr.mxu0 0.0
    %7779 = vmatpush1.xpose.msra.mxu0 0.0
    %7780 = vmatprep.subr.mxu0 0.0
    %7781 = vmatpush1.xpose.msra.mxu0 0.0
    %7782 = vmatprep.subr.mxu0 0.0
    %7783 = vmatpush1.xpose.msra.mxu0 0.0
    %7784 = vmatprep.subr.mxu0 0.0
    %7785 = vmatpush1.xpose.msra.mxu0 0.0
    %7786 = vmatprep.subr.mxu0 0.0
    %7787 = vmatpush1.xpose.msra.mxu0 0.0
    %7788 = vmatprep.subr.mxu0 0.0
    %7789 = vmatpush1.xpose.msra.mxu0 0.0
    %7790 = vmatprep.subr.mxu0 0.0
    %7791 = vmatpush1.xpose.msra.mxu0 0.0
    %7792 = vmatprep.subr.mxu0 0.0
    %7793 = vmatpush1.xpose.msra.mxu0 0.0
    %7794 = vmatprep.subr.mxu0 0.0
    %7795 = vmatpush1.xpose.msra.mxu0 0.0
    %7796 = vmatprep.subr.mxu0 0.0
    %7797 = vmatpush1.xpose.msra.mxu0 0.0
    %7798 = vmatprep.subr.mxu0 0.0
    %7799 = vmatpush1.xpose.msra.mxu0 0.0
    %7800 = vmatprep.subr.mxu0 0.0
    %7801 = vmatpush1.xpose.msra.mxu0 0.0
    %7802 = vmatprep.mubr.f32.mxu0 0.0
    %7803 = vmatmul.mubr.f32.gmra.mrb[0].mxu0 %v7733
    %v7804 = vpop.f32.mrb[0].mxu0
    %v7805 = vadd.f32 0.0, %v7804
    %v7806 = vpop.f32.mrb[0].mxu0
    %7807 = vdwg.mxu0
    %v7808 = vlaneseq
    %v7809 = vshrl.u32 %v7808, 7
    %v7810 = vsub.s32 0, %v7809
    %v7811 = vrot.slane %v7805, %v7810
    %vm7812 = vcmask 64512
    %7813 = vst.msk [vmem:[#allocation2] sm:$0xff] %vm7812, %v7811
    // Predicated region
    $region38: #{tpu_custom_call.1} parent=1 // pred_check
      _
    $region39: #{tpu_custom_call.1} parent=1 // pred_check_branch
      %7815 = sbr.rel (0) target = $region41
    $region40: #{tpu_custom_call.1} parent=1 // pred_region
      %s7817 = ssub.s32 128, 128
      %7818 = vsyncadd [#allocation3], %s7817
      %s7820 = sshll.u32 [#allocation2], 4
      %s7821 = int_to_ptr.vmem [resolvable:$true] %s7820
      %7823 = dma.vmem_to_hbm [thread:$0]  %s7821, 128, %s9, [#allocation3]
    $region41: #{tpu_custom_call.1} parent=1 // pred_fallthru
      _
    // Predicated region
    $region42: #{tpu_custom_call.1} parent=1 // pred_check
      _
    $region43: #{tpu_custom_call.1} parent=1 // pred_check_branch
      %7825 = sbr.rel (0) target = $region45
    $region44: #{tpu_custom_call.1} parent=1 // pred_region
      %7826 = dma.done [#allocation3], 128
    $region45: #{tpu_custom_call.1} parent=1 // pred_fallthru
      _
    %7827 = vsyncpa [#allocation3], 1

</llo_original>
